<compile_context>
chip_gen: v5e
topology: v5e:2x2
jax: 0.10.0
libtpu: 0.0.40
codegen_flags: <defaults>
</compile_context>

<pallas_src>
import functools

import jax
import jax.numpy as jnp
from jax.experimental import pallas as pl
from jax.experimental.pallas import tpu as pltpu


def _round_up(x, m):
    return (x + m - 1) // m * m


def _conv_tile(x_ref, w_ref, r, *, K, Wp, TH, lw):
    """Per-tap accumulated conv for row-tile `r`.

    x_ref : (1, L_PAD, Cin) bf16  -- whole zero-padded, row-flattened image (VMEM resident)
    w_ref : (K*K, Cin, C_PAD) bf16
    Returns (TH*Wp, C_PAD) f32, flat index j = h_local*Wp + w.
    """
    TW = TH * Wp
    base = pl.multiple_of(r * TW, 8)              # TW is a multiple of 8 whenever R > 1
    window = x_ref[0, pl.ds(base, lw), :]         # one aligned dynamic load: tile + halo
    acc = None
    for ky in range(K):
        for kx in range(K):
            off = ky * Wp + kx
            slab = window[off:off + TW, :]        # static shifted view of the window
            part = jnp.dot(slab, w_ref[ky * K + kx],
                           preferred_element_type=jnp.float32)   # MXU, f32 accumulate
            acc = part if acc is None else acc + part
    return acc


def _stats_kernel(x_ref, w_ref, sum_ref, sq_ref, *, K, Wp, W, TH, lw):
    """Pass 1: conv tile + per-channel sum / sum-of-squares accumulation."""
    n = pl.program_id(0)
    r = pl.program_id(1)

    @pl.when((n == 0) & (r == 0))
    def _init():
        sum_ref[...] = jnp.zeros_like(sum_ref)
        sq_ref[...] = jnp.zeros_like(sq_ref)

    acc = _conv_tile(x_ref, w_ref, r, K=K, Wp=Wp, TH=TH, lw=lw)

    TW = TH * Wp
    col = jax.lax.broadcasted_iota(jnp.int32, (TW, 1), 0) % Wp
    valid = col < W                               # mask out width-halo junk columns
    sum_ref[...] += jnp.sum(jnp.where(valid, acc, 0.0), axis=0, keepdims=True)
    sq_ref[...] += jnp.sum(jnp.where(valid, acc * acc, 0.0), axis=0, keepdims=True)


def _norm_relu_kernel(x_ref, w_ref, scale_ref, shift_ref, o_ref,
                      *, K, Wp, TH, lw, cout):
    """Pass 2: recompute conv tile, apply folded BN affine + ReLU, store Cout channels."""
    r = pl.program_id(1)
    acc = _conv_tile(x_ref, w_ref, r, K=K, Wp=Wp, TH=TH, lw=lw)
    y = acc * scale_ref[...] + shift_ref[...]     # single fused multiply-add per element
    o_ref[0] = jnp.maximum(y[:, :cout], 0.0)      # unpadded-channel store (contiguous DMA)


@functools.partial(jax.jit, static_argnames=("stride", "eps"))
def conv_bn_relu(x_nchw, weight_oihw, gamma, beta, *, stride=1, eps=1e-5):
    """Forward of Conv_BN_ReLU (PyTorch NCHW conventions, 'same' padding, stride 1)."""
    assert stride == 1, "reference module uses stride=1 / 'same' padding"
    N, Cin, H, W = x_nchw.shape
    Cout, Cin_w, K, K2 = weight_oihw.shape
    assert Cin == Cin_w and K == K2 and K % 2 == 1
    pad = (K - 1) // 2
    Hp, Wp = H + 2 * pad, W + 2 * pad

    # ---- tiling ------------------------------------------------------------
    TH = 8 if H % 8 == 0 else H                    # output rows per grid step
    R = H // TH
    assert R * TH == H
    TW = TH * Wp                                   # matmul M per grid step
    assert (TW % 8 == 0) or R == 1
    C_PAD = _round_up(Cout, 128)                   # MXU N dim / weight lane padding
    LW = _round_up(TW + 2 * pad * Wp + (K - 1), 8)               # tile + halo window
    L_PAD = _round_up(max(Hp * Wp, (R - 1) * TW + LW), 8)

    # ---- layout glue (activations stay at 1x in HBM -- no im2col) -----------
    x = jnp.transpose(x_nchw, (0, 2, 3, 1))                       # NHWC
    x = jnp.pad(x, ((0, 0), (pad, pad), (pad, pad), (0, 0)))
    x = x.reshape(N, Hp * Wp, Cin)
    x = jnp.pad(x, ((0, 0), (0, L_PAD - Hp * Wp), (0, 0))).astype(jnp.bfloat16)

    # (Cout,Cin,K,K) -> (K*K, Cin, C_PAD): tap-major, zero-padded output channels.
    w = jnp.transpose(weight_oihw, (2, 3, 1, 0)).reshape(K * K, Cin, Cout)
    w = jnp.pad(w, ((0, 0), (0, 0), (0, C_PAD - Cout))).astype(jnp.bfloat16)

    grid = (N, R)
    x_spec = pl.BlockSpec((1, L_PAD, Cin), lambda n, r: (n, 0, 0))     # resident per image
    w_spec = pl.BlockSpec((K * K, Cin, C_PAD), lambda n, r: (0, 0, 0))  # loaded once
    vec_spec = pl.BlockSpec((1, C_PAD), lambda n, r: (0, 0))

    kargs = dict(K=K, Wp=Wp, TH=TH, lw=LW)
    flops = 2 * N * H * W * K * K * Cin * C_PAD
    x_bytes = N * L_PAD * Cin * 2
    w_bytes = K * K * Cin * C_PAD * 2

    # ---- pass 1: batch statistics of the conv output ------------------------
    sums, sqs = pl.pallas_call(
        functools.partial(_stats_kernel, W=W, **kargs),
        out_shape=(jax.ShapeDtypeStruct((1, C_PAD), jnp.float32),
                   jax.ShapeDtypeStruct((1, C_PAD), jnp.float32)),
        grid=grid,
        in_specs=[x_spec, w_spec],
        out_specs=(vec_spec, vec_spec),
        compiler_params=pltpu.CompilerParams(
            dimension_semantics=("arbitrary", "arbitrary")),
        cost_estimate=pl.CostEstimate(flops=flops, transcendentals=0,
                                      bytes_accessed=x_bytes + w_bytes + 8 * C_PAD),
    )(x, w)

    # ---- fold BN (training-mode batch stats, TRUE divisor N*H*W) ------------
    count = float(N * H * W)
    mean = sums[0] / count
    var = jnp.maximum(sqs[0] / count - mean * mean, 0.0)     # biased variance
    inv_std = jax.lax.rsqrt(var + eps)
    gamma_p = jnp.pad(gamma.astype(jnp.float32), (0, C_PAD - Cout))
    beta_p = jnp.pad(beta.astype(jnp.float32), (0, C_PAD - Cout))
    scale = (gamma_p * inv_std).reshape(1, C_PAD)
    shift = (beta_p - mean * gamma_p * inv_std).reshape(1, C_PAD)
    # TODO(synk): BatchNorm running_mean / running_var buffer updates (training-time
    # side effect) are not produced; they do not affect the forward output.

    # ---- pass 2: normalize + ReLU (parallel grid, unpadded-channel stores) ---
    out = pl.pallas_call(
        functools.partial(_norm_relu_kernel, cout=Cout, **kargs),
        out_shape=jax.ShapeDtypeStruct((N, R * TW, Cout), jnp.float32),
        grid=grid,
        in_specs=[x_spec, w_spec, vec_spec, vec_spec],
        out_specs=pl.BlockSpec((1, TW, Cout), lambda n, r: (n, r, 0)),
        compiler_params=pltpu.CompilerParams(
            dimension_semantics=("parallel", "parallel")),
        cost_estimate=pl.CostEstimate(
            flops=flops, transcendentals=0,
            bytes_accessed=x_bytes + w_bytes + N * R * TW * Cout * 4),
    )(x, w, scale, shift)

    out = out.reshape(N, H, Wp, Cout)[:, :, :W, :]            # drop width-halo columns
    return jnp.transpose(out, (0, 3, 1, 2))                   # NHWC -> NCHW


def _reference(x_nchw, weight_oihw, gamma, beta, eps=1e-5):
    """Pure-JAX reference: Conv2d(bias=False) -> BatchNorm2d(training) -> ReLU."""
    conv = jax.lax.conv_general_dilated(
        x_nchw, weight_oihw, window_strides=(1, 1), padding="SAME",
        dimension_numbers=("NCHW", "OIHW", "NCHW"))
    mean = jnp.mean(conv, axis=(0, 2, 3), keepdims=True)
    var = jnp.mean(jnp.square(conv - mean), axis=(0, 2, 3), keepdims=True)
    y = (conv - mean) * jax.lax.rsqrt(var + eps)
    y = y * gamma.reshape(1, -1, 1, 1) + beta.reshape(1, -1, 1, 1)
    return jnp.maximum(y, 0.0)


if __name__ == "__main__":
    key = jax.random.PRNGKey(0)
    k_x, k_w = jax.random.split(key)

    # Small shapes consistent with the module: NCHW input, 3x3 conv, same padding.
    N, Cin, H, W = 2, 4, 16, 16
    Cout, K = 8, 3

    x = jax.random.normal(k_x, (N, Cin, H, W), dtype=jnp.float32)
    fan_in = Cin * K * K
    bound = 1.0 / (fan_in ** 0.5)
    weight = jax.random.uniform(k_w, (Cout, Cin, K, K), jnp.float32, -bound, bound)
    gamma = jnp.ones((Cout,), jnp.float32)     # nn.BatchNorm2d default affine init
    beta = jnp.zeros((Cout,), jnp.float32)

    out = conv_bn_relu(x, weight, gamma, beta)
    out = jax.block_until_ready(out)

    assert out.shape == (N, Cout, H, W), out.shape
    assert bool(jnp.all(out >= 0.0))                       # ReLU post-condition
    ref = _reference(x, weight, gamma, beta)
    max_err = float(jnp.max(jnp.abs(out - ref)))
    assert bool(jnp.allclose(out, ref, atol=1e-1)), max_err  # bf16 MXU tolerance
    print("KERNEL_OK")
</pallas_src>

<mosaic_0001>
module attributes {stable_mosaic.version = 11 : i64} {
  func.func @_norm_relu_kernel(%arg0: i32, %arg1: i32, %arg2: memref<1x328x4xbf16, #tpu.memory_space<vmem>>, %arg3: memref<9x4x128xbf16, #tpu.memory_space<vmem>>, %arg4: memref<1x128xf32, #tpu.memory_space<vmem>>, %arg5: memref<1x128xf32, #tpu.memory_space<vmem>>, %arg6: memref<1x144x8xf32, #tpu.memory_space<vmem>>) attributes {dimension_semantics = [#tpu.dimension_semantics<parallel>, #tpu.dimension_semantics<parallel>], iteration_bounds = array<i64: 2, 2>, scalar_prefetch = 0 : i64, scratch_operands = 0 : i64, tpu.core_type = #tpu.core_type<tc>, window_params = [{transform_indices = @transform_0, window_bounds = array<i64: 1, 328, 4>}, {pipeline_mode = #tpu.pipeline_mode<synchronous>, transform_indices = @transform_1, window_bounds = array<i64: 9, 4, 128>}, {pipeline_mode = #tpu.pipeline_mode<synchronous>, transform_indices = @transform_2, window_bounds = array<i64: 1, 128>}, {pipeline_mode = #tpu.pipeline_mode<synchronous>, transform_indices = @transform_3, window_bounds = array<i64: 1, 128>}, {transform_indices = @transform_4, window_bounds = array<i64: 1, 144, 8>}]} {
    %c144_i32 = arith.constant 144 : i32
    %0 = arith.muli %arg1, %c144_i32 : i32
    %1 = tpu.assume_multiple %0, 8 : i32
    %c0 = arith.constant 0 : index
    %2 = arith.index_cast %1 : i32 to index
    %c0_0 = arith.constant 0 : index
    %3 = vector.load %arg2[%c0, %2, %c0_0] : memref<1x328x4xbf16, #tpu.memory_space<vmem>>, vector<1x184x4xbf16>
    %4 = vector.shape_cast %3 : vector<1x184x4xbf16> to vector<184x4xbf16>
    %5 = vector.extract_strided_slice %4 {offsets = [0, 0], sizes = [144, 4], strides = [1, 1]} : vector<184x4xbf16> to vector<144x4xbf16>
    %c0_1 = arith.constant 0 : index
    %c0_2 = arith.constant 0 : index
    %c0_3 = arith.constant 0 : index
    %6 = vector.load %arg3[%c0_1, %c0_2, %c0_3] : memref<9x4x128xbf16, #tpu.memory_space<vmem>>, vector<1x4x128xbf16>
    %7 = vector.shape_cast %6 : vector<1x4x128xbf16> to vector<4x128xbf16>
    %cst = arith.constant dense<0.000000e+00> : vector<144x128xf32>
    %8 = tpu.matmul %5, %7, %cst {dimension_numbers = #tpu.dot_dimension_numbers<[1], [0], [0], [1], [0, 0, 1, 1], [], []>} : vector<144x4xbf16>, vector<4x128xbf16>, vector<144x128xf32> -> vector<144x128xf32>
    %9 = vector.extract_strided_slice %4 {offsets = [1, 0], sizes = [144, 4], strides = [1, 1]} : vector<184x4xbf16> to vector<144x4xbf16>
    %c1 = arith.constant 1 : index
    %c0_4 = arith.constant 0 : index
    %c0_5 = arith.constant 0 : index
    %10 = vector.load %arg3[%c1, %c0_4, %c0_5] : memref<9x4x128xbf16, #tpu.memory_space<vmem>>, vector<1x4x128xbf16>
    %11 = vector.shape_cast %10 : vector<1x4x128xbf16> to vector<4x128xbf16>
    %cst_6 = arith.constant dense<0.000000e+00> : vector<144x128xf32>
    %12 = tpu.matmul %9, %11, %cst_6 {dimension_numbers = #tpu.dot_dimension_numbers<[1], [0], [0], [1], [0, 0, 1, 1], [], []>} : vector<144x4xbf16>, vector<4x128xbf16>, vector<144x128xf32> -> vector<144x128xf32>
    %13 = arith.addf %8, %12 : vector<144x128xf32>
    %14 = vector.extract_strided_slice %4 {offsets = [2, 0], sizes = [144, 4], strides = [1, 1]} : vector<184x4xbf16> to vector<144x4xbf16>
    %c2 = arith.constant 2 : index
    %c0_7 = arith.constant 0 : index
    %c0_8 = arith.constant 0 : index
    %15 = vector.load %arg3[%c2, %c0_7, %c0_8] : memref<9x4x128xbf16, #tpu.memory_space<vmem>>, vector<1x4x128xbf16>
    %16 = vector.shape_cast %15 : vector<1x4x128xbf16> to vector<4x128xbf16>
    %cst_9 = arith.constant dense<0.000000e+00> : vector<144x128xf32>
    %17 = tpu.matmul %14, %16, %cst_9 {dimension_numbers = #tpu.dot_dimension_numbers<[1], [0], [0], [1], [0, 0, 1, 1], [], []>} : vector<144x4xbf16>, vector<4x128xbf16>, vector<144x128xf32> -> vector<144x128xf32>
    %18 = arith.addf %13, %17 : vector<144x128xf32>
    %19 = vector.extract_strided_slice %4 {offsets = [18, 0], sizes = [144, 4], strides = [1, 1]} : vector<184x4xbf16> to vector<144x4xbf16>
    %c3 = arith.constant 3 : index
    %c0_10 = arith.constant 0 : index
    %c0_11 = arith.constant 0 : index
    %20 = vector.load %arg3[%c3, %c0_10, %c0_11] : memref<9x4x128xbf16, #tpu.memory_space<vmem>>, vector<1x4x128xbf16>
    %21 = vector.shape_cast %20 : vector<1x4x128xbf16> to vector<4x128xbf16>
    %cst_12 = arith.constant dense<0.000000e+00> : vector<144x128xf32>
    %22 = tpu.matmul %19, %21, %cst_12 {dimension_numbers = #tpu.dot_dimension_numbers<[1], [0], [0], [1], [0, 0, 1, 1], [], []>} : vector<144x4xbf16>, vector<4x128xbf16>, vector<144x128xf32> -> vector<144x128xf32>
    %23 = arith.addf %18, %22 : vector<144x128xf32>
    %24 = vector.extract_strided_slice %4 {offsets = [19, 0], sizes = [144, 4], strides = [1, 1]} : vector<184x4xbf16> to vector<144x4xbf16>
    %c4 = arith.constant 4 : index
    %c0_13 = arith.constant 0 : index
    %c0_14 = arith.constant 0 : index
    %25 = vector.load %arg3[%c4, %c0_13, %c0_14] : memref<9x4x128xbf16, #tpu.memory_space<vmem>>, vector<1x4x128xbf16>
    %26 = vector.shape_cast %25 : vector<1x4x128xbf16> to vector<4x128xbf16>
    %cst_15 = arith.constant dense<0.000000e+00> : vector<144x128xf32>
    %27 = tpu.matmul %24, %26, %cst_15 {dimension_numbers = #tpu.dot_dimension_numbers<[1], [0], [0], [1], [0, 0, 1, 1], [], []>} : vector<144x4xbf16>, vector<4x128xbf16>, vector<144x128xf32> -> vector<144x128xf32>
    %28 = arith.addf %23, %27 : vector<144x128xf32>
    %29 = vector.extract_strided_slice %4 {offsets = [20, 0], sizes = [144, 4], strides = [1, 1]} : vector<184x4xbf16> to vector<144x4xbf16>
    %c5 = arith.constant 5 : index
    %c0_16 = arith.constant 0 : index
    %c0_17 = arith.constant 0 : index
    %30 = vector.load %arg3[%c5, %c0_16, %c0_17] : memref<9x4x128xbf16, #tpu.memory_space<vmem>>, vector<1x4x128xbf16>
    %31 = vector.shape_cast %30 : vector<1x4x128xbf16> to vector<4x128xbf16>
    %cst_18 = arith.constant dense<0.000000e+00> : vector<144x128xf32>
    %32 = tpu.matmul %29, %31, %cst_18 {dimension_numbers = #tpu.dot_dimension_numbers<[1], [0], [0], [1], [0, 0, 1, 1], [], []>} : vector<144x4xbf16>, vector<4x128xbf16>, vector<144x128xf32> -> vector<144x128xf32>
    %33 = arith.addf %28, %32 : vector<144x128xf32>
    %34 = vector.extract_strided_slice %4 {offsets = [36, 0], sizes = [144, 4], strides = [1, 1]} : vector<184x4xbf16> to vector<144x4xbf16>
    %c6 = arith.constant 6 : index
    %c0_19 = arith.constant 0 : index
    %c0_20 = arith.constant 0 : index
    %35 = vector.load %arg3[%c6, %c0_19, %c0_20] : memref<9x4x128xbf16, #tpu.memory_space<vmem>>, vector<1x4x128xbf16>
    %36 = vector.shape_cast %35 : vector<1x4x128xbf16> to vector<4x128xbf16>
    %cst_21 = arith.constant dense<0.000000e+00> : vector<144x128xf32>
    %37 = tpu.matmul %34, %36, %cst_21 {dimension_numbers = #tpu.dot_dimension_numbers<[1], [0], [0], [1], [0, 0, 1, 1], [], []>} : vector<144x4xbf16>, vector<4x128xbf16>, vector<144x128xf32> -> vector<144x128xf32>
    %38 = arith.addf %33, %37 : vector<144x128xf32>
    %39 = vector.extract_strided_slice %4 {offsets = [37, 0], sizes = [144, 4], strides = [1, 1]} : vector<184x4xbf16> to vector<144x4xbf16>
    %c7 = arith.constant 7 : index
    %c0_22 = arith.constant 0 : index
    %c0_23 = arith.constant 0 : index
    %40 = vector.load %arg3[%c7, %c0_22, %c0_23] : memref<9x4x128xbf16, #tpu.memory_space<vmem>>, vector<1x4x128xbf16>
    %41 = vector.shape_cast %40 : vector<1x4x128xbf16> to vector<4x128xbf16>
    %cst_24 = arith.constant dense<0.000000e+00> : vector<144x128xf32>
    %42 = tpu.matmul %39, %41, %cst_24 {dimension_numbers = #tpu.dot_dimension_numbers<[1], [0], [0], [1], [0, 0, 1, 1], [], []>} : vector<144x4xbf16>, vector<4x128xbf16>, vector<144x128xf32> -> vector<144x128xf32>
    %43 = arith.addf %38, %42 : vector<144x128xf32>
    %44 = vector.extract_strided_slice %4 {offsets = [38, 0], sizes = [144, 4], strides = [1, 1]} : vector<184x4xbf16> to vector<144x4xbf16>
    %c8 = arith.constant 8 : index
    %c0_25 = arith.constant 0 : index
    %c0_26 = arith.constant 0 : index
    %45 = vector.load %arg3[%c8, %c0_25, %c0_26] : memref<9x4x128xbf16, #tpu.memory_space<vmem>>, vector<1x4x128xbf16>
    %46 = vector.shape_cast %45 : vector<1x4x128xbf16> to vector<4x128xbf16>
    %cst_27 = arith.constant dense<0.000000e+00> : vector<144x128xf32>
    %47 = tpu.matmul %44, %46, %cst_27 {dimension_numbers = #tpu.dot_dimension_numbers<[1], [0], [0], [1], [0, 0, 1, 1], [], []>} : vector<144x4xbf16>, vector<4x128xbf16>, vector<144x128xf32> -> vector<144x128xf32>
    %48 = arith.addf %43, %47 : vector<144x128xf32>
    %c0_28 = arith.constant 0 : index
    %c0_29 = arith.constant 0 : index
    %49 = vector.load %arg4[%c0_28, %c0_29] : memref<1x128xf32, #tpu.memory_space<vmem>>, vector<1x128xf32>
    %50 = vector.broadcast %49 : vector<1x128xf32> to vector<144x128xf32>
    %51 = arith.mulf %48, %50 : vector<144x128xf32>
    %c0_30 = arith.constant 0 : index
    %c0_31 = arith.constant 0 : index
    %52 = vector.load %arg5[%c0_30, %c0_31] : memref<1x128xf32, #tpu.memory_space<vmem>>, vector<1x128xf32>
    %53 = vector.broadcast %52 : vector<1x128xf32> to vector<144x128xf32>
    %54 = arith.addf %51, %53 : vector<144x128xf32>
    %55 = vector.extract_strided_slice %54 {offsets = [0, 0], sizes = [144, 8], strides = [1, 1]} : vector<144x128xf32> to vector<144x8xf32>
    %cst_32 = arith.constant 0.000000e+00 : f32
    %56 = vector.broadcast %cst_32 : f32 to vector<144x8xf32>
    %57 = arith.maximumf %55, %56 : vector<144x8xf32>
    %c0_33 = arith.constant 0 : index
    %c0_34 = arith.constant 0 : index
    %c0_35 = arith.constant 0 : index
    %58 = vector.load %arg6[%c0_33, %c0_34, %c0_35] : memref<1x144x8xf32, #tpu.memory_space<vmem>>, vector<1x144x8xf32>
    %59 = vector.shape_cast %58 : vector<1x144x8xf32> to vector<144x8xf32>
    %60 = vector.shape_cast %57 : vector<144x8xf32> to vector<1x144x8xf32>
    tpu.vector_store %arg6[%c0_33, %c0_34, %c0_35], %60 {strides = array<i32>} : memref<1x144x8xf32, #tpu.memory_space<vmem>>, vector<1x144x8xf32>,
    return
  }
  func.func @transform_0(%arg0: i32, %arg1: i32) -> (i32, i32, i32) {
    %c0_i32 = arith.constant 0 : i32
    %c0_i32_0 = arith.constant 0 : i32
    %c0_i32_1 = arith.constant 0 : i32
    return %arg0, %c0_i32, %c0_i32_0 : i32, i32, i32
  }
  func.func @transform_1(%arg0: i32, %arg1: i32) -> (i32, i32, i32) {
    %c0_i32 = arith.constant 0 : i32
    %c0_i32_0 = arith.constant 0 : i32
    %c0_i32_1 = arith.constant 0 : i32
    %c0_i32_2 = arith.constant 0 : i32
    return %c0_i32, %c0_i32_0, %c0_i32_1 : i32, i32, i32
  }
  func.func @transform_2(%arg0: i32, %arg1: i32) -> (i32, i32) {
    %c0_i32 = arith.constant 0 : i32
    %c0_i32_0 = arith.constant 0 : i32
    %c0_i32_1 = arith.constant 0 : i32
    return %c0_i32, %c0_i32_0 : i32, i32
  }
  func.func @transform_3(%arg0: i32, %arg1: i32) -> (i32, i32) {
    %c0_i32 = arith.constant 0 : i32
    %c0_i32_0 = arith.constant 0 : i32
    %c0_i32_1 = arith.constant 0 : i32
    return %c0_i32, %c0_i32_0 : i32, i32
  }
  func.func @transform_4(%arg0: i32, %arg1: i32) -> (i32, i32, i32) {
    %c0_i32 = arith.constant 0 : i32
    %c0_i32_0 = arith.constant 0 : i32
    return %arg0, %arg1, %c0_i32 : i32, i32, i32
  }
}

module attributes {stable_mosaic.version = 11 : i64} {
  func.func @_stats_kernel(%arg0: i32, %arg1: i32, %arg2: memref<1x328x4xbf16, #tpu.memory_space<vmem>>, %arg3: memref<9x4x128xbf16, #tpu.memory_space<vmem>>, %arg4: memref<1x128xf32, #tpu.memory_space<vmem>>, %arg5: memref<1x128xf32, #tpu.memory_space<vmem>>) attributes {dimension_semantics = [#tpu.dimension_semantics<arbitrary>, #tpu.dimension_semantics<arbitrary>], iteration_bounds = array<i64: 2, 2>, scalar_prefetch = 0 : i64, scratch_operands = 0 : i64, tpu.core_type = #tpu.core_type<tc>, window_params = [{transform_indices = @transform_0, window_bounds = array<i64: 1, 328, 4>}, {pipeline_mode = #tpu.pipeline_mode<synchronous>, transform_indices = @transform_1, window_bounds = array<i64: 9, 4, 128>}, {pipeline_mode = #tpu.pipeline_mode<synchronous>, transform_indices = @transform_2, window_bounds = array<i64: 1, 128>}, {pipeline_mode = #tpu.pipeline_mode<synchronous>, transform_indices = @transform_3, window_bounds = array<i64: 1, 128>}]} {
    %c0_i32 = arith.constant 0 : i32
    %0 = arith.cmpi eq, %arg0, %c0_i32 : i32
    %c0_i32_0 = arith.constant 0 : i32
    %1 = arith.cmpi eq, %arg1, %c0_i32_0 : i32
    %2 = arith.andi %0, %1 : i1
    %3 = arith.extui %2 : i1 to i32
    %c0_i32_1 = arith.constant 0 : i32
    %4 = arith.cmpi ne, %3, %c0_i32_1 : i32
    scf.if %4 {
      %cst_46 = arith.constant 0.000000e+00 : f32
      %92 = vector.broadcast %cst_46 : f32 to vector<1x128xf32>
      %c0_47 = arith.constant 0 : index
      %c0_48 = arith.constant 0 : index
      %93 = vector.load %arg4[%c0_47, %c0_48] : memref<1x128xf32, #tpu.memory_space<vmem>>, vector<1x128xf32>
      tpu.vector_store %arg4[%c0_47, %c0_48], %92 {strides = array<i32>} : memref<1x128xf32, #tpu.memory_space<vmem>>, vector<1x128xf32>,
      %cst_49 = arith.constant 0.000000e+00 : f32
      %94 = vector.broadcast %cst_49 : f32 to vector<1x128xf32>
      %c0_50 = arith.constant 0 : index
      %c0_51 = arith.constant 0 : index
      %95 = vector.load %arg5[%c0_50, %c0_51] : memref<1x128xf32, #tpu.memory_space<vmem>>, vector<1x128xf32>
      tpu.vector_store %arg5[%c0_50, %c0_51], %94 {strides = array<i32>} : memref<1x128xf32, #tpu.memory_space<vmem>>, vector<1x128xf32>,
    } else {
    }
    %c144_i32 = arith.constant 144 : i32
    %5 = arith.muli %arg1, %c144_i32 : i32
    %6 = tpu.assume_multiple %5, 8 : i32
    %c0 = arith.constant 0 : index
    %7 = arith.index_cast %6 : i32 to index
    %c0_2 = arith.constant 0 : index
    %8 = vector.load %arg2[%c0, %7, %c0_2] : memref<1x328x4xbf16, #tpu.memory_space<vmem>>, vector<1x184x4xbf16>
    %9 = vector.shape_cast %8 : vector<1x184x4xbf16> to vector<184x4xbf16>
    %10 = vector.extract_strided_slice %9 {offsets = [0, 0], sizes = [144, 4], strides = [1, 1]} : vector<184x4xbf16> to vector<144x4xbf16>
    %c0_3 = arith.constant 0 : index
    %c0_4 = arith.constant 0 : index
    %c0_5 = arith.constant 0 : index
    %11 = vector.load %arg3[%c0_3, %c0_4, %c0_5] : memref<9x4x128xbf16, #tpu.memory_space<vmem>>, vector<1x4x128xbf16>
    %12 = vector.shape_cast %11 : vector<1x4x128xbf16> to vector<4x128xbf16>
    %cst = arith.constant dense<0.000000e+00> : vector<144x128xf32>
    %13 = tpu.matmul %10, %12, %cst {dimension_numbers = #tpu.dot_dimension_numbers<[1], [0], [0], [1], [0, 0, 1, 1], [], []>} : vector<144x4xbf16>, vector<4x128xbf16>, vector<144x128xf32> -> vector<144x128xf32>
    %14 = vector.extract_strided_slice %9 {offsets = [1, 0], sizes = [144, 4], strides = [1, 1]} : vector<184x4xbf16> to vector<144x4xbf16>
    %c1 = arith.constant 1 : index
    %c0_6 = arith.constant 0 : index
    %c0_7 = arith.constant 0 : index
    %15 = vector.load %arg3[%c1, %c0_6, %c0_7] : memref<9x4x128xbf16, #tpu.memory_space<vmem>>, vector<1x4x128xbf16>
    %16 = vector.shape_cast %15 : vector<1x4x128xbf16> to vector<4x128xbf16>
    %cst_8 = arith.constant dense<0.000000e+00> : vector<144x128xf32>
    %17 = tpu.matmul %14, %16, %cst_8 {dimension_numbers = #tpu.dot_dimension_numbers<[1], [0], [0], [1], [0, 0, 1, 1], [], []>} : vector<144x4xbf16>, vector<4x128xbf16>, vector<144x128xf32> -> vector<144x128xf32>
    %18 = arith.addf %13, %17 : vector<144x128xf32>
    %19 = vector.extract_strided_slice %9 {offsets = [2, 0], sizes = [144, 4], strides = [1, 1]} : vector<184x4xbf16> to vector<144x4xbf16>
    %c2 = arith.constant 2 : index
    %c0_9 = arith.constant 0 : index
    %c0_10 = arith.constant 0 : index
    %20 = vector.load %arg3[%c2, %c0_9, %c0_10] : memref<9x4x128xbf16, #tpu.memory_space<vmem>>, vector<1x4x128xbf16>
    %21 = vector.shape_cast %20 : vector<1x4x128xbf16> to vector<4x128xbf16>
    %cst_11 = arith.constant dense<0.000000e+00> : vector<144x128xf32>
    %22 = tpu.matmul %19, %21, %cst_11 {dimension_numbers = #tpu.dot_dimension_numbers<[1], [0], [0], [1], [0, 0, 1, 1], [], []>} : vector<144x4xbf16>, vector<4x128xbf16>, vector<144x128xf32> -> vector<144x128xf32>
    %23 = arith.addf %18, %22 : vector<144x128xf32>
    %24 = vector.extract_strided_slice %9 {offsets = [18, 0], sizes = [144, 4], strides = [1, 1]} : vector<184x4xbf16> to vector<144x4xbf16>
    %c3 = arith.constant 3 : index
    %c0_12 = arith.constant 0 : index
    %c0_13 = arith.constant 0 : index
    %25 = vector.load %arg3[%c3, %c0_12, %c0_13] : memref<9x4x128xbf16, #tpu.memory_space<vmem>>, vector<1x4x128xbf16>
    %26 = vector.shape_cast %25 : vector<1x4x128xbf16> to vector<4x128xbf16>
    %cst_14 = arith.constant dense<0.000000e+00> : vector<144x128xf32>
    %27 = tpu.matmul %24, %26, %cst_14 {dimension_numbers = #tpu.dot_dimension_numbers<[1], [0], [0], [1], [0, 0, 1, 1], [], []>} : vector<144x4xbf16>, vector<4x128xbf16>, vector<144x128xf32> -> vector<144x128xf32>
    %28 = arith.addf %23, %27 : vector<144x128xf32>
    %29 = vector.extract_strided_slice %9 {offsets = [19, 0], sizes = [144, 4], strides = [1, 1]} : vector<184x4xbf16> to vector<144x4xbf16>
    %c4 = arith.constant 4 : index
    %c0_15 = arith.constant 0 : index
    %c0_16 = arith.constant 0 : index
    %30 = vector.load %arg3[%c4, %c0_15, %c0_16] : memref<9x4x128xbf16, #tpu.memory_space<vmem>>, vector<1x4x128xbf16>
    %31 = vector.shape_cast %30 : vector<1x4x128xbf16> to vector<4x128xbf16>
    %cst_17 = arith.constant dense<0.000000e+00> : vector<144x128xf32>
    %32 = tpu.matmul %29, %31, %cst_17 {dimension_numbers = #tpu.dot_dimension_numbers<[1], [0], [0], [1], [0, 0, 1, 1], [], []>} : vector<144x4xbf16>, vector<4x128xbf16>, vector<144x128xf32> -> vector<144x128xf32>
    %33 = arith.addf %28, %32 : vector<144x128xf32>
    %34 = vector.extract_strided_slice %9 {offsets = [20, 0], sizes = [144, 4], strides = [1, 1]} : vector<184x4xbf16> to vector<144x4xbf16>
    %c5 = arith.constant 5 : index
    %c0_18 = arith.constant 0 : index
    %c0_19 = arith.constant 0 : index
    %35 = vector.load %arg3[%c5, %c0_18, %c0_19] : memref<9x4x128xbf16, #tpu.memory_space<vmem>>, vector<1x4x128xbf16>
    %36 = vector.shape_cast %35 : vector<1x4x128xbf16> to vector<4x128xbf16>
    %cst_20 = arith.constant dense<0.000000e+00> : vector<144x128xf32>
    %37 = tpu.matmul %34, %36, %cst_20 {dimension_numbers = #tpu.dot_dimension_numbers<[1], [0], [0], [1], [0, 0, 1, 1], [], []>} : vector<144x4xbf16>, vector<4x128xbf16>, vector<144x128xf32> -> vector<144x128xf32>
    %38 = arith.addf %33, %37 : vector<144x128xf32>
    %39 = vector.extract_strided_slice %9 {offsets = [36, 0], sizes = [144, 4], strides = [1, 1]} : vector<184x4xbf16> to vector<144x4xbf16>
    %c6 = arith.constant 6 : index
    %c0_21 = arith.constant 0 : index
    %c0_22 = arith.constant 0 : index
    %40 = vector.load %arg3[%c6, %c0_21, %c0_22] : memref<9x4x128xbf16, #tpu.memory_space<vmem>>, vector<1x4x128xbf16>
    %41 = vector.shape_cast %40 : vector<1x4x128xbf16> to vector<4x128xbf16>
    %cst_23 = arith.constant dense<0.000000e+00> : vector<144x128xf32>
    %42 = tpu.matmul %39, %41, %cst_23 {dimension_numbers = #tpu.dot_dimension_numbers<[1], [0], [0], [1], [0, 0, 1, 1], [], []>} : vector<144x4xbf16>, vector<4x128xbf16>, vector<144x128xf32> -> vector<144x128xf32>
    %43 = arith.addf %38, %42 : vector<144x128xf32>
    %44 = vector.extract_strided_slice %9 {offsets = [37, 0], sizes = [144, 4], strides = [1, 1]} : vector<184x4xbf16> to vector<144x4xbf16>
    %c7 = arith.constant 7 : index
    %c0_24 = arith.constant 0 : index
    %c0_25 = arith.constant 0 : index
    %45 = vector.load %arg3[%c7, %c0_24, %c0_25] : memref<9x4x128xbf16, #tpu.memory_space<vmem>>, vector<1x4x128xbf16>
    %46 = vector.shape_cast %45 : vector<1x4x128xbf16> to vector<4x128xbf16>
    %cst_26 = arith.constant dense<0.000000e+00> : vector<144x128xf32>
    %47 = tpu.matmul %44, %46, %cst_26 {dimension_numbers = #tpu.dot_dimension_numbers<[1], [0], [0], [1], [0, 0, 1, 1], [], []>} : vector<144x4xbf16>, vector<4x128xbf16>, vector<144x128xf32> -> vector<144x128xf32>
    %48 = arith.addf %43, %47 : vector<144x128xf32>
    %49 = vector.extract_strided_slice %9 {offsets = [38, 0], sizes = [144, 4], strides = [1, 1]} : vector<184x4xbf16> to vector<144x4xbf16>
    %c8 = arith.constant 8 : index
    %c0_27 = arith.constant 0 : index
    %c0_28 = arith.constant 0 : index
    %50 = vector.load %arg3[%c8, %c0_27, %c0_28] : memref<9x4x128xbf16, #tpu.memory_space<vmem>>, vector<1x4x128xbf16>
    %51 = vector.shape_cast %50 : vector<1x4x128xbf16> to vector<4x128xbf16>
    %cst_29 = arith.constant dense<0.000000e+00> : vector<144x128xf32>
    %52 = tpu.matmul %49, %51, %cst_29 {dimension_numbers = #tpu.dot_dimension_numbers<[1], [0], [0], [1], [0, 0, 1, 1], [], []>} : vector<144x4xbf16>, vector<4x128xbf16>, vector<144x128xf32> -> vector<144x128xf32>
    %53 = arith.addf %48, %52 : vector<144x128xf32>
    %54 = tpu.iota {dimensions = array<i32: 0>} : vector<144x1xi32>
    %c18_i32 = arith.constant 18 : i32
    %c0_i32_30 = arith.constant 0 : i32
    %55 = arith.cmpi eq, %c18_i32, %c0_i32_30 : i32
    %c1_i32 = arith.constant 1 : i32
    %56 = arith.select %55, %c1_i32, %c18_i32 : i32
    %57 = vector.broadcast %56 : i32 to vector<144x1xi32>
    %58 = arith.remsi %54, %57 : vector<144x1xi32>
    %c0_i32_31 = arith.constant 0 : i32
    %59 = vector.broadcast %c0_i32_31 : i32 to vector<144x1xi32>
    %60 = arith.cmpi ne, %58, %59 : vector<144x1xi32>
    %c0_i32_32 = arith.constant 0 : i32
    %61 = vector.broadcast %c0_i32_32 : i32 to vector<144x1xi32>
    %62 = arith.cmpi slt, %58, %61 : vector<144x1xi32>
    %c0_i32_33 = arith.constant 0 : i32
    %63 = arith.cmpi slt, %56, %c0_i32_33 : i32
    %64 = vector.broadcast %63 : i1 to vector<144x1xi1>
    %65 = vector.broadcast %64 : vector<144x1xi1> to vector<144x1xi1>
    %66 = arith.xori %62, %65 : vector<144x1xi1>
    %67 = arith.andi %66, %60 : vector<144x1xi1>
    %68 = vector.broadcast %56 : i32 to vector<144x1xi32>
    %69 = arith.addi %58, %68 : vector<144x1xi32>
    %70 = arith.select %67, %69, %58 : vector<144x1xi1>, vector<144x1xi32>
    %c16_i32 = arith.constant 16 : i32
    %71 = vector.broadcast %c16_i32 : i32 to vector<144x1xi32>
    %72 = arith.cmpi slt, %70, %71 : vector<144x1xi32>
    %c0_34 = arith.constant 0 : index
    %c0_35 = arith.constant 0 : index
    %73 = vector.load %arg4[%c0_34, %c0_35] : memref<1x128xf32, #tpu.memory_space<vmem>>, vector<1x128xf32>
    %cst_36 = arith.constant 0.000000e+00 : f32
    %74 = vector.shape_cast %72 : vector<144x1xi1> to vector<144x1xi1>
    %75 = vector.broadcast %74 : vector<144x1xi1> to vector<144x128xi1>
    %76 = vector.broadcast %cst_36 : f32 to vector<144x128xf32>
    %77 = arith.select %75, %53, %76 : vector<144x128xi1>, vector<144x128xf32>
    %cst_37 = arith.constant dense<0.000000e+00> : vector<128xf32>
    %78 = vector.multi_reduction <add>, %77, %cst_37 [0] : vector<144x128xf32> to vector<128xf32>
    %79 = vector.shape_cast %78 : vector<128xf32> to vector<1x128xf32>
    %80 = arith.addf %73, %79 : vector<1x128xf32>
    %c0_38 = arith.constant 0 : index
    %c0_39 = arith.constant 0 : index
    %81 = vector.load %arg4[%c0_38, %c0_39] : memref<1x128xf32, #tpu.memory_space<vmem>>, vector<1x128xf32>
    tpu.vector_store %arg4[%c0_38, %c0_39], %80 {strides = array<i32>} : memref<1x128xf32, #tpu.memory_space<vmem>>, vector<1x128xf32>,
    %c0_40 = arith.constant 0 : index
    %c0_41 = arith.constant 0 : index
    %82 = vector.load %arg5[%c0_40, %c0_41] : memref<1x128xf32, #tpu.memory_space<vmem>>, vector<1x128xf32>
    %83 = arith.mulf %53, %53 : vector<144x128xf32>
    %cst_42 = arith.constant 0.000000e+00 : f32
    %84 = vector.shape_cast %72 : vector<144x1xi1> to vector<144x1xi1>
    %85 = vector.broadcast %84 : vector<144x1xi1> to vector<144x128xi1>
    %86 = vector.broadcast %cst_42 : f32 to vector<144x128xf32>
    %87 = arith.select %85, %83, %86 : vector<144x128xi1>, vector<144x128xf32>
    %cst_43 = arith.constant dense<0.000000e+00> : vector<128xf32>
    %88 = vector.multi_reduction <add>, %87, %cst_43 [0] : vector<144x128xf32> to vector<128xf32>
    %89 = vector.shape_cast %88 : vector<128xf32> to vector<1x128xf32>
    %90 = arith.addf %82, %89 : vector<1x128xf32>
    %c0_44 = arith.constant 0 : index
    %c0_45 = arith.constant 0 : index
    %91 = vector.load %arg5[%c0_44, %c0_45] : memref<1x128xf32, #tpu.memory_space<vmem>>, vector<1x128xf32>
    tpu.vector_store %arg5[%c0_44, %c0_45], %90 {strides = array<i32>} : memref<1x128xf32, #tpu.memory_space<vmem>>, vector<1x128xf32>,
    return
  }
  func.func @transform_0(%arg0: i32, %arg1: i32) -> (i32, i32, i32) {
    %c0_i32 = arith.constant 0 : i32
    %c0_i32_0 = arith.constant 0 : i32
    %c0_i32_1 = arith.constant 0 : i32
    return %arg0, %c0_i32, %c0_i32_0 : i32, i32, i32
  }
  func.func @transform_1(%arg0: i32, %arg1: i32) -> (i32, i32, i32) {
    %c0_i32 = arith.constant 0 : i32
    %c0_i32_0 = arith.constant 0 : i32
    %c0_i32_1 = arith.constant 0 : i32
    %c0_i32_2 = arith.constant 0 : i32
    return %c0_i32, %c0_i32_0, %c0_i32_1 : i32, i32, i32
  }
  func.func @transform_2(%arg0: i32, %arg1: i32) -> (i32, i32) {
    %c0_i32 = arith.constant 0 : i32
    %c0_i32_0 = arith.constant 0 : i32
    %c0_i32_1 = arith.constant 0 : i32
    return %c0_i32, %c0_i32_0 : i32, i32
  }
  func.func @transform_3(%arg0: i32, %arg1: i32) -> (i32, i32) {
    %c0_i32 = arith.constant 0 : i32
    %c0_i32_0 = arith.constant 0 : i32
    %c0_i32_1 = arith.constant 0 : i32
    return %c0_i32, %c0_i32_0 : i32, i32
  }
}

</mosaic_0001>

<llo_original>
// kernel: conv_bn_relu.3
$region0: #{conv_bn_relu.3}
  #allocation0 [shape = 'u32[]', space=smem, size = 0x4, offset = 0x4, fixed_abs, tag = 'smem constant byte address 0x4 - core index']
  #allocation1 [shape = 'u32[72,128]{1,0:T(1,128)}', space=vmem, size = 0x9000, scoped, tag = 'internal scratch']
  %s0 = inlined_call_operand.vmem [shape: bf16[2,328,4], index: 0, kind: input, shape index: {}]
  %s1 = inlined_call_operand.vmem [shape: bf16[9,4,128], index: 1, kind: input, shape index: {}]
  %s2 = inlined_call_operand.vmem [shape: f32[1,128], index: 2, kind: input, shape index: {}]
  %s3 = inlined_call_operand.vmem [shape: f32[1,128], index: 3, kind: input, shape index: {}]
  %s4 = inlined_call_operand.vmem [shape: f32[2,288,8], index: 4, kind: output, shape index: {}]
  %s5 = sld [smem:[#allocation0]]
  $region49: #{conv_bn_relu.3} parent=0
    _
  %s7 = ssub.s32 1, %s5
  %s8 = scalar_select 0, %s7, %s5
  loop: start=0, step=1, limit=6
  $region2: #{conv_bn_relu.3} parent=0 // loop_pre_header
    _
  $region3: #{conv_bn_relu.3} parent=0 // loop_header
    %s10 = sphi 0, %s14
    %p11 = scmp.ge.s32.totalorder %s10, 6
    %s17 = sphi 0, %s29
    %s18 = sphi 0, %s25
    %s19 = sphi 0, %s17
    %s20 = sphi 0, %s18
    %s21 = sphi 0, %s19
    %s22 = sphi 0, %s20
    %s32 = sphi 0, %s34
    %s35 = sphi 0, %s32
    %s36 = sphi 0, %s35
    %s52 = sphi 0, %s36
    %s56 = sphi 0, %s56
    %s58 = sphi 0, %s56
    %s59 = sphi 0, %s58
    %s73 = sphi 0, %s59
    %s77 = sphi 0, %s77
    %s79 = sphi 0, %s77
    %s80 = sphi 0, %s79
    %s94 = sphi 0, %s80
    %s98 = sphi 0, %s98
    %s100 = sphi 0, %s98
    %s101 = sphi 0, %s100
    %s115 = sphi 0, %s101
    %s123 = sphi 0, %s125
    %s126 = sphi 0, %s123
    %s127 = sphi 0, %s126
    %s143 = sphi 0, %s127
  $region4: #{conv_bn_relu.3} parent=0 // loop_header_branch
    %13 = sbr.rel (%p11) target = $region8
  $region5: #{conv_bn_relu.3} parent=0 // loop_body
    %s15 = ssub.s32 %s10, 1
    %s16 = ssub.s32 %s10, 2
    %s23 = sadd.s32 1, %s18
    %p24 = scmp.ge.s32.totalorder %s23, 2
    %s25 = scalar_select %p24, 0, %s23
    %s26 = sadd.s32 1, %s17
    %s27 = scalar_select %p24, %s26, %s17
    %p28 = scmp.ge.s32.totalorder %s27, 2
    %s29 = scalar_select %p28, 0, %s27
    %s30 = ssub.s32 %s17, %s29
    %p31 = scmp.eq.s32.totalorder %s30, 0
    %s33 = sadd.s32 %s32, 1
    %s34 = scalar_select %p31, %s32, %s33
    %p37 = pneg %p31
    %p38 = scmp.eq.s32.totalorder %s10, 3
    %p39 = por %p37, %p38
    %p40 = scmp.ne.s32.totalorder %s32, %s35
    %p41 = scmp.eq.s32.totalorder %s10, 0
    %p42 = por %p40, %p41
    %p43 = scmp.ne.s32.totalorder %s32, %s35
    %p44 = scmp.eq.s32.totalorder %s15, 3
    %p45 = por %p43, %p44
    %p46 = scmp.ne.s32.totalorder %s35, %s36
    %p47 = scmp.eq.s32.totalorder %s15, 0
    %p48 = por %p46, %p47
    %p49 = scmp.ne.s32.totalorder %s35, %s36
    %p50 = scmp.eq.s32.totalorder %s16, 3
    %p51 = por %p49, %p50
    %p53 = scmp.ne.s32.totalorder %s36, %s52
    %p54 = scmp.eq.s32.totalorder %s16, 0
    %p55 = por %p53, %p54
    %s57 = sadd.s32 %s56, 1
    %p60 = scmp.eq.s32.totalorder %s10, 3
    %p61 = scmp.ne.s32.totalorder %s56, %s58
    %p62 = scmp.eq.s32.totalorder %s10, 0
    %p63 = por %p61, %p62
    %p64 = scmp.ne.s32.totalorder %s56, %s58
    %p65 = scmp.eq.s32.totalorder %s15, 3
    %p66 = por %p64, %p65
    %p67 = scmp.ne.s32.totalorder %s58, %s59
    %p68 = scmp.eq.s32.totalorder %s15, 0
    %p69 = por %p67, %p68
    %p70 = scmp.ne.s32.totalorder %s58, %s59
    %p71 = scmp.eq.s32.totalorder %s16, 3
    %p72 = por %p70, %p71
    %p74 = scmp.ne.s32.totalorder %s59, %s73
    %p75 = scmp.eq.s32.totalorder %s16, 0
    %p76 = por %p74, %p75
    %s78 = sadd.s32 %s77, 1
    %p81 = scmp.eq.s32.totalorder %s10, 3
    %p82 = scmp.ne.s32.totalorder %s77, %s79
    %p83 = scmp.eq.s32.totalorder %s10, 0
    %p84 = por %p82, %p83
    %p85 = scmp.ne.s32.totalorder %s77, %s79
    %p86 = scmp.eq.s32.totalorder %s15, 3
    %p87 = por %p85, %p86
    %p88 = scmp.ne.s32.totalorder %s79, %s80
    %p89 = scmp.eq.s32.totalorder %s15, 0
    %p90 = por %p88, %p89
    %p91 = scmp.ne.s32.totalorder %s79, %s80
    %p92 = scmp.eq.s32.totalorder %s16, 3
    %p93 = por %p91, %p92
    %p95 = scmp.ne.s32.totalorder %s80, %s94
    %p96 = scmp.eq.s32.totalorder %s16, 0
    %p97 = por %p95, %p96
    %s99 = sadd.s32 %s98, 1
    %p102 = scmp.eq.s32.totalorder %s10, 3
    %p103 = scmp.ne.s32.totalorder %s98, %s100
    %p104 = scmp.eq.s32.totalorder %s10, 0
    %p105 = por %p103, %p104
    %p106 = scmp.ne.s32.totalorder %s98, %s100
    %p107 = scmp.eq.s32.totalorder %s15, 3
    %p108 = por %p106, %p107
    %p109 = scmp.ne.s32.totalorder %s100, %s101
    %p110 = scmp.eq.s32.totalorder %s15, 0
    %p111 = por %p109, %p110
    %p112 = scmp.ne.s32.totalorder %s100, %s101
    %p113 = scmp.eq.s32.totalorder %s16, 3
    %p114 = por %p112, %p113
    %p116 = scmp.ne.s32.totalorder %s101, %s115
    %p117 = scmp.eq.s32.totalorder %s16, 0
    %p118 = por %p116, %p117
    %s119 = ssub.s32 %s17, %s29
    %s120 = ssub.s32 %s18, %s25
    %s121 = sor.u32 %s119, %s120
    %p122 = scmp.eq.s32.totalorder %s121, 0
    %s124 = sadd.s32 %s123, 1
    %s125 = scalar_select %p122, %s123, %s124
    %p128 = pneg %p122
    %p129 = scmp.eq.s32.totalorder %s10, 3
    %p130 = por %p128, %p129
    %p131 = scmp.ne.s32.totalorder %s123, %s126
    %p132 = scmp.eq.s32.totalorder %s10, 0
    %p133 = por %p131, %p132
    %p134 = scmp.ne.s32.totalorder %s123, %s126
    %p135 = scmp.eq.s32.totalorder %s15, 3
    %p136 = por %p134, %p135
    %p137 = scmp.ne.s32.totalorder %s126, %s127
    %p138 = scmp.eq.s32.totalorder %s15, 0
    %p139 = por %p137, %p138
    %p140 = scmp.ne.s32.totalorder %s126, %s127
    %p141 = scmp.eq.s32.totalorder %s16, 3
    %p142 = por %p140, %p141
    %p144 = scmp.ne.s32.totalorder %s127, %s143
    %p145 = scmp.eq.s32.totalorder %s16, 0
    %p146 = por %p144, %p145
    %p147 = scmp.le.s32.totalorder 1, %s10
    %p148 = scmp.lt.s32.totalorder %s10, 5
    %p149 = pnand %p147, %p148
    %p150 = pneg %p149
    // Predicated region
    $region9: #{conv_bn_relu.3} parent=5 // pred_check
      _
    $region10: #{conv_bn_relu.3} parent=5 // pred_check_branch
      %152 = sbr.rel (%p149) target = $region12
    $region11: #{conv_bn_relu.3} parent=5 // pred_region
      %s153 = ssub.s32 %s10, 1
      // Predicated region
      $region13: #{conv_bn_relu.3} parent=11 // pred_check
        %p154 = pneg %p69
      $region14: #{conv_bn_relu.3} parent=11 // pred_check_branch
        %156 = sbr.rel (%p154) target = $region16
      $region15: #{conv_bn_relu.3} parent=11 // pred_region
        _
      $region16: #{conv_bn_relu.3} parent=11 // pred_fallthru
        _
      // Predicated region
      $region17: #{conv_bn_relu.3} parent=11 // pred_check
        %p157 = pneg %p90
      $region18: #{conv_bn_relu.3} parent=11 // pred_check_branch
        %159 = sbr.rel (%p157) target = $region20
      $region19: #{conv_bn_relu.3} parent=11 // pred_region
        _
      $region20: #{conv_bn_relu.3} parent=11 // pred_fallthru
        _
      // Predicated region
      $region21: #{conv_bn_relu.3} parent=11 // pred_check
        %p160 = pneg %p111
      $region22: #{conv_bn_relu.3} parent=11 // pred_check_branch
        %162 = sbr.rel (%p160) target = $region24
      $region23: #{conv_bn_relu.3} parent=11 // pred_region
        _
      $region24: #{conv_bn_relu.3} parent=11 // pred_fallthru
        _
    $region12: #{conv_bn_relu.3} parent=5 // pred_fallthru
      _
    %p163 = scmp.lt.s32.totalorder %s10, 4
    // Predicated region
    $region25: #{conv_bn_relu.3} parent=5 // pred_check
      %p164 = pneg %p163
    $region26: #{conv_bn_relu.3} parent=5 // pred_check_branch
      %166 = sbr.rel (%p164) target = $region28
    $region27: #{conv_bn_relu.3} parent=5 // pred_region
      // Predicated region
      $region29: #{conv_bn_relu.3} parent=27 // pred_check
        %p167 = pneg %p42
      $region30: #{conv_bn_relu.3} parent=27 // pred_check_branch
        %169 = sbr.rel (%p167) target = $region32
      $region31: #{conv_bn_relu.3} parent=27 // pred_region
        %p170 = scmp.lt.s32.totalorder %s17, 1
        %s171 = scalar_select %p170, %s17, 1
        %s172 = smul.addr %s171, 41
        %s173 = smul.addr %s172, 4
        %s174 = scalar_lea.vmem %s0, %s173
      $region32: #{conv_bn_relu.3} parent=27 // pred_fallthru
        _
    $region28: #{conv_bn_relu.3} parent=5 // pred_fallthru
      _
    %p175 = scmp.le.s32.totalorder 1, %s10
    %p176 = scmp.lt.s32.totalorder %s10, 5
    %p177 = pnand %p175, %p176
    %p178 = pneg %p177
    // Predicated region
    $region33: #{conv_bn_relu.3} parent=5 // pred_check
      _
    $region34: #{conv_bn_relu.3} parent=5 // pred_check_branch
      %180 = sbr.rel (%p177) target = $region36
    $region35: #{conv_bn_relu.3} parent=5 // pred_region
      %s181 = ssub.s32 %s10, 1
      %p182 = scmp.lt.s32.totalorder %s19, 1
      %s183 = scalar_select %p182, %s19, 1
      %s184 = smul.addr %s183, 41
      %s185 = smul.addr %s184, 4
      %s186 = scalar_lea.vmem %s0, %s185
      %p187 = pneg %p48
      %p188 = pneg %p45
      %p189 = pneg %p69
      %p190 = pneg %p66
      %p191 = pneg %p90
      %p192 = pneg %p87
      %p193 = pneg %p111
      %p194 = pneg %p108
      %p195 = pneg %p139
      %p196 = pneg %p136
      %s197 = smul.u32 18, %s20
      %p198 = scmp.lt.s32.totalorder %s19, 1
      %s199 = scalar_select %p198, %s19, 1
      %p200 = scmp.lt.s32.totalorder %s197, 35
      %s201 = scalar_select %p200, %s197, 35
      %s202 = smul.addr %s199, 36
      %s203 = sadd.s32 %s201, %s202
      %s204 = smul.addr %s203, 8
      %s205 = scalar_lea.vmem %s4, %s204
      %p206 = scmp.lt.s32.totalorder %s19, 1
      %s207 = scalar_select %p206, %s19, 1
      %s208 = smul.addr %s207, 41
      %s209 = smul.addr %s208, 4
      %s210 = scalar_lea.vmem %s0, %s209
      %s211 = smul.u32 18, %s20
      %p212 = scmp.lt.s32.totalorder %s19, 1
      %s213 = scalar_select %p212, %s19, 1
      %p214 = scmp.lt.s32.totalorder %s211, 35
      %s215 = scalar_select %p214, %s211, 35
      %s216 = smul.addr %s213, 36
      %s217 = sadd.s32 %s215, %s216
      %s218 = smul.addr %s217, 8
      %s219 = scalar_lea.vmem %s4, %s218
      %s220 = smul.u32 18, %s20
      %s222 = smul.u32 %s20, 144
      %s223 = sshra.s32 %s222, 3
      %s224 = sand.u32 %s222, 7
      %s225 = smul.addr %s223, 4
      %s226 = scalar_lea.vmem %s210, %s225
      %v227 = vld [vmem:[%s226] sm:$0xf]
      %v228 = vld [vmem:[%s226 + $0x4] sm:$0xf]
      %v229 = vld [vmem:[%s226 + $0x8] sm:$0xf]
      %v230 = vld [vmem:[%s226 + $0xc] sm:$0xf]
      %v231 = vld [vmem:[%s226 + $0x10] sm:$0xf]
      %v232 = vld [vmem:[%s226 + $0x14] sm:$0xf]
      %v233 = vld [vmem:[%s226 + $0x18] sm:$0xf]
      %v234 = vld [vmem:[%s226 + $0x1c] sm:$0xf]
      %v235 = vld [vmem:[%s226 + $0x20] sm:$0xf]
      %v236 = vld [vmem:[%s226 + $0x24] sm:$0xf]
      %v237 = vld [vmem:[%s226 + $0x28] sm:$0xf]
      %v238 = vld [vmem:[%s226 + $0x2c] sm:$0xf]
      %v239 = vld [vmem:[%s226 + $0x30] sm:$0xf]
      %v240 = vld [vmem:[%s226 + $0x34] sm:$0xf]
      %v241 = vld [vmem:[%s226 + $0x38] sm:$0xf]
      %v242 = vld [vmem:[%s226 + $0x3c] sm:$0xf]
      %v243 = vld [vmem:[%s226 + $0x40] sm:$0xf]
      %v244 = vld [vmem:[%s226 + $0x44] sm:$0xf]
      %v245 = vld [vmem:[%s226 + $0x48] sm:$0xf]
      %v246 = vld [vmem:[%s226 + $0x4c] sm:$0xf]
      %v247 = vld [vmem:[%s226 + $0x50] sm:$0xf]
      %v248 = vld [vmem:[%s226 + $0x54] sm:$0xf]
      %v249 = vld [vmem:[%s226 + $0x58] sm:$0xf]
      %v250 = vld [vmem:[%s1] sm:$0x3]
      %s251 = scalar_lea.vmem %s1, 2
      %v252 = vld [vmem:[%s251] sm:$0x3]
      %v272 = vunpack.c.l.b16 %v227
      %v273 = vunpack.c.l.b16 %v228
      %v274 = vunpack.c.l.b16 %v229
      %v275 = vunpack.c.l.b16 %v230
      %v276 = vunpack.c.l.b16 %v231
      %v277 = vunpack.c.l.b16 %v232
      %v278 = vunpack.c.l.b16 %v233
      %v279 = vunpack.c.l.b16 %v234
      %v280 = vunpack.c.l.b16 %v235
      %v281 = vunpack.c.l.b16 %v236
      %v282 = vunpack.c.l.b16 %v237
      %v283 = vunpack.c.l.b16 %v238
      %v284 = vunpack.c.l.b16 %v239
      %v285 = vunpack.c.l.b16 %v240
      %v286 = vunpack.c.l.b16 %v241
      %v287 = vunpack.c.l.b16 %v242
      %v288 = vunpack.c.l.b16 %v243
      %v289 = vunpack.c.l.b16 %v244
      %v290 = vunpack.c.l.b16 %v245
      %v291 = vpack.c.b16 %v273, %v272
      %v292 = vpack.c.b16 %v275, %v274
      %v293 = vpack.c.b16 %v277, %v276
      %v294 = vpack.c.b16 %v279, %v278
      %v295 = vpack.c.b16 %v281, %v280
      %v296 = vpack.c.b16 %v283, %v282
      %v297 = vpack.c.b16 %v285, %v284
      %v298 = vpack.c.b16 %v287, %v286
      %v299 = vpack.c.b16 %v289, %v288
      %v300 = vpack.c.b16 %v290, %v290
      %vm301 = vsmask.f32 7424
      %v303 = vshrl.u32 %v291, 16
      %v305 = vshll.u32 %v291, 16
      %v307 = vrot.slane %v305, 1
      %v308 = vor.u32 %v303, %v307
      %v310 = vshll.u32 %v292, 16
      %v312 = vrot.slane %v310, 1
      %v313 = vsel %vm301, %v308, %v312
      %v314 = vshrl.u32 %v292, 16
      %v316 = vor.u32 %v314, %v312
      %v318 = vshll.u32 %v293, 16
      %v320 = vrot.slane %v318, 1
      %v321 = vsel %vm301, %v316, %v320
      %v322 = vshrl.u32 %v293, 16
      %v324 = vor.u32 %v322, %v320
      %v326 = vshll.u32 %v294, 16
      %v328 = vrot.slane %v326, 1
      %v329 = vsel %vm301, %v324, %v328
      %v330 = vshrl.u32 %v294, 16
      %v332 = vor.u32 %v330, %v328
      %v334 = vshll.u32 %v295, 16
      %v336 = vrot.slane %v334, 1
      %v337 = vsel %vm301, %v332, %v336
      %v338 = vshrl.u32 %v295, 16
      %v340 = vor.u32 %v338, %v336
      %v342 = vshll.u32 %v296, 16
      %v344 = vrot.slane %v342, 1
      %v345 = vsel %vm301, %v340, %v344
      %v346 = vshrl.u32 %v296, 16
      %v348 = vor.u32 %v346, %v344
      %v350 = vshll.u32 %v297, 16
      %v352 = vrot.slane %v350, 1
      %v353 = vsel %vm301, %v348, %v352
      %v354 = vshrl.u32 %v297, 16
      %v356 = vor.u32 %v354, %v352
      %v358 = vshll.u32 %v298, 16
      %v360 = vrot.slane %v358, 1
      %v361 = vsel %vm301, %v356, %v360
      %v362 = vshrl.u32 %v298, 16
      %v364 = vor.u32 %v362, %v360
      %v366 = vshll.u32 %v299, 16
      %v368 = vrot.slane %v366, 1
      %v369 = vsel %vm301, %v364, %v368
      %v370 = vshrl.u32 %v299, 16
      %v372 = vor.u32 %v370, %v368
      %v374 = vshll.u32 %v300, 16
      %v376 = vrot.slane %v374, 1
      %v377 = vsel %vm301, %v372, %v376
      %vm378 = vcmask 31744
      %v380 = vsel %vm378, %v313, 0
      %v383 = vsel %vm378, %v321, 0
      %v386 = vsel %vm378, %v329, 0
      %v389 = vsel %vm378, %v337, 0
      %v392 = vsel %vm378, %v345, 0
      %v395 = vsel %vm378, %v353, 0
      %v398 = vsel %vm378, %v361, 0
      %v401 = vsel %vm378, %v369, 0
      %v404 = vsel %vm378, %v377, 0
      %vm406 = vcmask 1041408
      %v408 = vsel %vm406, %v252, 0
      %410 = vmatpush.bf16.msra.mxu0 0
      %411 = vmatpush.bf16.msra.mxu0 0
      %412 = vmatpush.bf16.msra.mxu0 0
      %413 = vmatpush.bf16.msra.mxu0 0
      %414 = vmatpush.bf16.msra.mxu0 0
      %415 = vmatpush.bf16.msra.mxu0 0
      %416 = vmatpush.bf16.msra.mxu0 0
      %417 = vmatpush.bf16.msra.mxu0 %v408
      %418 = vmatmul.bf16.gmra.mxu0 %v380
      %v419 = vpop.f32.mrf.mxu0
      %v420 = vadd.f32 0.0, %v419
      %v421 = vpop.f32.mrf.mxu0
      %v422 = vadd.f32 0.0, %v421
      %423 = vmatmul.bf16.gmra.mxu0 %v383
      %v424 = vpop.f32.mrf.mxu0
      %v425 = vadd.f32 0.0, %v424
      %v426 = vpop.f32.mrf.mxu0
      %v427 = vadd.f32 0.0, %v426
      %428 = vmatmul.bf16.gmra.mxu0 %v386
      %v429 = vpop.f32.mrf.mxu0
      %v430 = vadd.f32 0.0, %v429
      %v431 = vpop.f32.mrf.mxu0
      %v432 = vadd.f32 0.0, %v431
      %433 = vmatmul.bf16.gmra.mxu0 %v389
      %v434 = vpop.f32.mrf.mxu0
      %v435 = vadd.f32 0.0, %v434
      %v436 = vpop.f32.mrf.mxu0
      %v437 = vadd.f32 0.0, %v436
      %438 = vmatmul.bf16.gmra.mxu0 %v392
      %v439 = vpop.f32.mrf.mxu0
      %v440 = vadd.f32 0.0, %v439
      %v441 = vpop.f32.mrf.mxu0
      %v442 = vadd.f32 0.0, %v441
      %443 = vmatmul.bf16.gmra.mxu0 %v395
      %v444 = vpop.f32.mrf.mxu0
      %v445 = vadd.f32 0.0, %v444
      %v446 = vpop.f32.mrf.mxu0
      %v447 = vadd.f32 0.0, %v446
      %448 = vmatmul.bf16.gmra.mxu0 %v398
      %v449 = vpop.f32.mrf.mxu0
      %v450 = vadd.f32 0.0, %v449
      %v451 = vpop.f32.mrf.mxu0
      %v452 = vadd.f32 0.0, %v451
      %453 = vmatmul.bf16.gmra.mxu0 %v401
      %v454 = vpop.f32.mrf.mxu0
      %v455 = vadd.f32 0.0, %v454
      %v456 = vpop.f32.mrf.mxu0
      %v457 = vadd.f32 0.0, %v456
      %458 = vmatmul.bf16.gmra.mxu0 %v404
      %v459 = vpop.f32.mrf.mxu0
      %v460 = vadd.f32 0.0, %v459
      %v461 = vpop.f32.mrf.mxu0
      %v462 = vadd.f32 0.0, %v461
      %463 = vdwg.mxu0
      %v464 = vsel %vm378, %v291, 0
      %v466 = vsel %vm378, %v292, 0
      %v468 = vsel %vm378, %v293, 0
      %v470 = vsel %vm378, %v294, 0
      %v472 = vsel %vm378, %v295, 0
      %v474 = vsel %vm378, %v296, 0
      %v476 = vsel %vm378, %v297, 0
      %v478 = vsel %vm378, %v298, 0
      %v480 = vsel %vm378, %v299, 0
      %v483 = vsel %vm406, %v250, 0
      %485 = vmatpush.bf16.msra.mxu0 0
      %486 = vmatpush.bf16.msra.mxu0 0
      %487 = vmatpush.bf16.msra.mxu0 0
      %488 = vmatpush.bf16.msra.mxu0 0
      %489 = vmatpush.bf16.msra.mxu0 0
      %490 = vmatpush.bf16.msra.mxu0 0
      %491 = vmatpush.bf16.msra.mxu0 0
      %492 = vmatpush.bf16.msra.mxu0 %v483
      %493 = vmatmul.bf16.gmra.mxu0 %v464
      %v494 = vpop.f32.mrf.mxu0
      %v495 = vadd.f32 %v420, %v494
      %v496 = vpop.f32.mrf.mxu0
      %v497 = vadd.f32 %v422, %v496
      %498 = vmatmul.bf16.gmra.mxu0 %v466
      %v499 = vpop.f32.mrf.mxu0
      %v500 = vadd.f32 %v425, %v499
      %v501 = vpop.f32.mrf.mxu0
      %v502 = vadd.f32 %v427, %v501
      %503 = vmatmul.bf16.gmra.mxu0 %v468
      %v504 = vpop.f32.mrf.mxu0
      %v505 = vadd.f32 %v430, %v504
      %v506 = vpop.f32.mrf.mxu0
      %v507 = vadd.f32 %v432, %v506
      %508 = vmatmul.bf16.gmra.mxu0 %v470
      %v509 = vpop.f32.mrf.mxu0
      %v510 = vadd.f32 %v435, %v509
      %v511 = vpop.f32.mrf.mxu0
      %v512 = vadd.f32 %v437, %v511
      %513 = vmatmul.bf16.gmra.mxu0 %v472
      %v514 = vpop.f32.mrf.mxu0
      %v515 = vadd.f32 %v440, %v514
      %v516 = vpop.f32.mrf.mxu0
      %v517 = vadd.f32 %v442, %v516
      %518 = vmatmul.bf16.gmra.mxu0 %v474
      %v519 = vpop.f32.mrf.mxu0
      %v520 = vadd.f32 %v445, %v519
      %v521 = vpop.f32.mrf.mxu0
      %v522 = vadd.f32 %v447, %v521
      %523 = vmatmul.bf16.gmra.mxu0 %v476
      %v524 = vpop.f32.mrf.mxu0
      %v525 = vadd.f32 %v450, %v524
      %v526 = vpop.f32.mrf.mxu0
      %v527 = vadd.f32 %v452, %v526
      %528 = vmatmul.bf16.gmra.mxu0 %v478
      %v529 = vpop.f32.mrf.mxu0
      %v530 = vadd.f32 %v455, %v529
      %v531 = vpop.f32.mrf.mxu0
      %v532 = vadd.f32 %v457, %v531
      %533 = vmatmul.bf16.gmra.mxu0 %v480
      %v534 = vpop.f32.mrf.mxu0
      %v535 = vadd.f32 %v460, %v534
      %v536 = vpop.f32.mrf.mxu0
      %v537 = vadd.f32 %v462, %v536
      %538 = vdwg.mxu0
      %s539 = scalar_lea.vmem %s1, 4
      %v540 = vld [vmem:[%s539] sm:$0x3]
      %vm541 = vcmask 1046528
      %v542 = vrot.slane %v291, 1
      %v543 = vrot.slane %v292, 1
      %v544 = vsel %vm541, %v542, %v543
      %v545 = vrot.slane %v293, 1
      %v546 = vsel %vm541, %v543, %v545
      %v547 = vrot.slane %v294, 1
      %v548 = vsel %vm541, %v545, %v547
      %v549 = vrot.slane %v295, 1
      %v550 = vsel %vm541, %v547, %v549
      %v551 = vrot.slane %v296, 1
      %v552 = vsel %vm541, %v549, %v551
      %v553 = vrot.slane %v297, 1
      %v554 = vsel %vm541, %v551, %v553
      %v555 = vrot.slane %v298, 1
      %v556 = vsel %vm541, %v553, %v555
      %v557 = vrot.slane %v299, 1
      %v558 = vsel %vm541, %v555, %v557
      %v559 = vrot.slane %v300, 1
      %v560 = vsel %vm541, %v557, %v559
      %v562 = vsel %vm378, %v544, 0
      %v565 = vsel %vm378, %v546, 0
      %v568 = vsel %vm378, %v548, 0
      %v571 = vsel %vm378, %v550, 0
      %v574 = vsel %vm378, %v552, 0
      %v577 = vsel %vm378, %v554, 0
      %v580 = vsel %vm378, %v556, 0
      %v583 = vsel %vm378, %v558, 0
      %v586 = vsel %vm378, %v560, 0
      %v589 = vsel %vm406, %v540, 0
      %591 = vmatpush.bf16.msra.mxu0 0
      %592 = vmatpush.bf16.msra.mxu0 0
      %593 = vmatpush.bf16.msra.mxu0 0
      %594 = vmatpush.bf16.msra.mxu0 0
      %595 = vmatpush.bf16.msra.mxu0 0
      %596 = vmatpush.bf16.msra.mxu0 0
      %597 = vmatpush.bf16.msra.mxu0 0
      %598 = vmatpush.bf16.msra.mxu0 %v589
      %599 = vmatmul.bf16.gmra.mxu0 %v562
      %v600 = vpop.f32.mrf.mxu0
      %v601 = vadd.f32 0.0, %v600
      %v602 = vpop.f32.mrf.mxu0
      %v603 = vadd.f32 0.0, %v602
      %604 = vmatmul.bf16.gmra.mxu0 %v565
      %v605 = vpop.f32.mrf.mxu0
      %v606 = vadd.f32 0.0, %v605
      %v607 = vpop.f32.mrf.mxu0
      %v608 = vadd.f32 0.0, %v607
      %609 = vmatmul.bf16.gmra.mxu0 %v568
      %v610 = vpop.f32.mrf.mxu0
      %v611 = vadd.f32 0.0, %v610
      %v612 = vpop.f32.mrf.mxu0
      %v613 = vadd.f32 0.0, %v612
      %614 = vmatmul.bf16.gmra.mxu0 %v571
      %v615 = vpop.f32.mrf.mxu0
      %v616 = vadd.f32 0.0, %v615
      %v617 = vpop.f32.mrf.mxu0
      %v618 = vadd.f32 0.0, %v617
      %619 = vmatmul.bf16.gmra.mxu0 %v574
      %v620 = vpop.f32.mrf.mxu0
      %v621 = vadd.f32 0.0, %v620
      %v622 = vpop.f32.mrf.mxu0
      %v623 = vadd.f32 0.0, %v622
      %624 = vmatmul.bf16.gmra.mxu0 %v577
      %v625 = vpop.f32.mrf.mxu0
      %v626 = vadd.f32 0.0, %v625
      %v627 = vpop.f32.mrf.mxu0
      %v628 = vadd.f32 0.0, %v627
      %629 = vmatmul.bf16.gmra.mxu0 %v580
      %v630 = vpop.f32.mrf.mxu0
      %v631 = vadd.f32 0.0, %v630
      %v632 = vpop.f32.mrf.mxu0
      %v633 = vadd.f32 0.0, %v632
      %634 = vmatmul.bf16.gmra.mxu0 %v583
      %v635 = vpop.f32.mrf.mxu0
      %v636 = vadd.f32 0.0, %v635
      %v637 = vpop.f32.mrf.mxu0
      %v638 = vadd.f32 0.0, %v637
      %639 = vmatmul.bf16.gmra.mxu0 %v586
      %v640 = vpop.f32.mrf.mxu0
      %v641 = vadd.f32 0.0, %v640
      %v642 = vpop.f32.mrf.mxu0
      %v643 = vadd.f32 0.0, %v642
      %644 = vdwg.mxu0
      %v645 = vadd.f32 %v495, %v601
      %v646 = vadd.f32 %v497, %v603
      %v647 = vadd.f32 %v500, %v606
      %v648 = vadd.f32 %v502, %v608
      %v649 = vadd.f32 %v505, %v611
      %v650 = vadd.f32 %v507, %v613
      %v651 = vadd.f32 %v510, %v616
      %v652 = vadd.f32 %v512, %v618
      %v653 = vadd.f32 %v515, %v621
      %v654 = vadd.f32 %v517, %v623
      %v655 = vadd.f32 %v520, %v626
      %v656 = vadd.f32 %v522, %v628
      %v657 = vadd.f32 %v525, %v631
      %v658 = vadd.f32 %v527, %v633
      %v659 = vadd.f32 %v530, %v636
      %v660 = vadd.f32 %v532, %v638
      %v661 = vadd.f32 %v535, %v641
      %v662 = vadd.f32 %v537, %v643
      %s663 = scalar_lea.vmem %s1, 6
      %v664 = vld [vmem:[%s663] sm:$0x3]
      %v667 = vunpack.c.l.b16 %v246
      %v668 = vunpack.c.l.b16 %v247
      %v669 = vpack.c.b16 %v667, %v290
      %v670 = vpack.c.b16 %v668, %v668
      %v671 = vrot.slane %v669, 1
      %v672 = vsel %vm541, %v557, %v671
      %v673 = vrot.slane %v670, 1
      %v674 = vsel %vm541, %v671, %v673
      %v676 = vsel %vm378, %v672, 0
      %v679 = vsel %vm378, %v674, 0
      %v682 = vsel %vm406, %v664, 0
      %684 = vmatpush.bf16.msra.mxu0 0
      %685 = vmatpush.bf16.msra.mxu0 0
      %686 = vmatpush.bf16.msra.mxu0 0
      %687 = vmatpush.bf16.msra.mxu0 0
      %688 = vmatpush.bf16.msra.mxu0 0
      %689 = vmatpush.bf16.msra.mxu0 0
      %690 = vmatpush.bf16.msra.mxu0 0
      %691 = vmatpush.bf16.msra.mxu0 %v682
      %692 = vmatmul.bf16.gmra.mxu0 %v565
      %v693 = vpop.f32.mrf.mxu0
      %v694 = vadd.f32 0.0, %v693
      %v695 = vpop.f32.mrf.mxu0
      %v696 = vadd.f32 0.0, %v695
      %697 = vmatmul.bf16.gmra.mxu0 %v568
      %v698 = vpop.f32.mrf.mxu0
      %v699 = vadd.f32 0.0, %v698
      %v700 = vpop.f32.mrf.mxu0
      %v701 = vadd.f32 0.0, %v700
      %702 = vmatmul.bf16.gmra.mxu0 %v571
      %v703 = vpop.f32.mrf.mxu0
      %v704 = vadd.f32 0.0, %v703
      %v705 = vpop.f32.mrf.mxu0
      %v706 = vadd.f32 0.0, %v705
      %707 = vmatmul.bf16.gmra.mxu0 %v574
      %v708 = vpop.f32.mrf.mxu0
      %v709 = vadd.f32 0.0, %v708
      %v710 = vpop.f32.mrf.mxu0
      %v711 = vadd.f32 0.0, %v710
      %712 = vmatmul.bf16.gmra.mxu0 %v577
      %v713 = vpop.f32.mrf.mxu0
      %v714 = vadd.f32 0.0, %v713
      %v715 = vpop.f32.mrf.mxu0
      %v716 = vadd.f32 0.0, %v715
      %717 = vmatmul.bf16.gmra.mxu0 %v580
      %v718 = vpop.f32.mrf.mxu0
      %v719 = vadd.f32 0.0, %v718
      %v720 = vpop.f32.mrf.mxu0
      %v721 = vadd.f32 0.0, %v720
      %722 = vmatmul.bf16.gmra.mxu0 %v583
      %v723 = vpop.f32.mrf.mxu0
      %v724 = vadd.f32 0.0, %v723
      %v725 = vpop.f32.mrf.mxu0
      %v726 = vadd.f32 0.0, %v725
      %727 = vmatmul.bf16.gmra.mxu0 %v676
      %v728 = vpop.f32.mrf.mxu0
      %v729 = vadd.f32 0.0, %v728
      %v730 = vpop.f32.mrf.mxu0
      %v731 = vadd.f32 0.0, %v730
      %732 = vmatmul.bf16.gmra.mxu0 %v679
      %v733 = vpop.f32.mrf.mxu0
      %v734 = vadd.f32 0.0, %v733
      %v735 = vpop.f32.mrf.mxu0
      %v736 = vadd.f32 0.0, %v735
      %737 = vdwg.mxu0
      %v738 = vadd.f32 %v645, %v694
      %v739 = vadd.f32 %v646, %v696
      %v740 = vadd.f32 %v647, %v699
      %v741 = vadd.f32 %v648, %v701
      %v742 = vadd.f32 %v649, %v704
      %v743 = vadd.f32 %v650, %v706
      %v744 = vadd.f32 %v651, %v709
      %v745 = vadd.f32 %v652, %v711
      %v746 = vadd.f32 %v653, %v714
      %v747 = vadd.f32 %v654, %v716
      %v748 = vadd.f32 %v655, %v719
      %v749 = vadd.f32 %v656, %v721
      %v750 = vadd.f32 %v657, %v724
      %v751 = vadd.f32 %v658, %v726
      %v752 = vadd.f32 %v659, %v729
      %v753 = vadd.f32 %v660, %v731
      %v754 = vadd.f32 %v661, %v734
      %v755 = vadd.f32 %v662, %v736
      %s756 = scalar_lea.vmem %s1, 8
      %v757 = vld [vmem:[%s756] sm:$0x3]
      %vm758 = vsmask.f32 6400
      %v759 = vrot.slane %v314, 1
      %v760 = vrot.slane %v310, 2
      %v761 = vor.u32 %v759, %v760
      %v762 = vrot.slane %v322, 1
      %v763 = vrot.slane %v318, 2
      %v764 = vor.u32 %v762, %v763
      %v765 = vsel %vm758, %v761, %v764
      %v766 = vrot.slane %v330, 1
      %v767 = vrot.slane %v326, 2
      %v768 = vor.u32 %v766, %v767
      %v769 = vsel %vm758, %v764, %v768
      %v770 = vrot.slane %v338, 1
      %v771 = vrot.slane %v334, 2
      %v772 = vor.u32 %v770, %v771
      %v773 = vsel %vm758, %v768, %v772
      %v774 = vrot.slane %v346, 1
      %v775 = vrot.slane %v342, 2
      %v776 = vor.u32 %v774, %v775
      %v777 = vsel %vm758, %v772, %v776
      %v778 = vrot.slane %v354, 1
      %v779 = vrot.slane %v350, 2
      %v780 = vor.u32 %v778, %v779
      %v781 = vsel %vm758, %v776, %v780
      %v782 = vrot.slane %v362, 1
      %v783 = vrot.slane %v358, 2
      %v784 = vor.u32 %v782, %v783
      %v785 = vsel %vm758, %v780, %v784
      %v786 = vrot.slane %v370, 1
      %v787 = vrot.slane %v366, 2
      %v788 = vor.u32 %v786, %v787
      %v789 = vsel %vm758, %v784, %v788
      %v791 = vshrl.u32 %v669, 16
      %v793 = vrot.slane %v791, 1
      %v794 = vshll.u32 %v669, 16
      %v796 = vrot.slane %v794, 2
      %v797 = vor.u32 %v793, %v796
      %v798 = vsel %vm758, %v788, %v797
      %v800 = vshrl.u32 %v670, 16
      %v802 = vrot.slane %v800, 1
      %v803 = vshll.u32 %v670, 16
      %v805 = vrot.slane %v803, 2
      %v806 = vor.u32 %v802, %v805
      %v807 = vsel %vm758, %v797, %v806
      %v809 = vsel %vm378, %v765, 0
      %v812 = vsel %vm378, %v769, 0
      %v815 = vsel %vm378, %v773, 0
      %v818 = vsel %vm378, %v777, 0
      %v821 = vsel %vm378, %v781, 0
      %v824 = vsel %vm378, %v785, 0
      %v827 = vsel %vm378, %v789, 0
      %v830 = vsel %vm378, %v798, 0
      %v833 = vsel %vm378, %v807, 0
      %v836 = vsel %vm406, %v757, 0
      %838 = vmatpush.bf16.msra.mxu0 0
      %839 = vmatpush.bf16.msra.mxu0 0
      %840 = vmatpush.bf16.msra.mxu0 0
      %841 = vmatpush.bf16.msra.mxu0 0
      %842 = vmatpush.bf16.msra.mxu0 0
      %843 = vmatpush.bf16.msra.mxu0 0
      %844 = vmatpush.bf16.msra.mxu0 0
      %845 = vmatpush.bf16.msra.mxu0 %v836
      %846 = vmatmul.bf16.gmra.mxu0 %v809
      %v847 = vpop.f32.mrf.mxu0
      %v848 = vadd.f32 0.0, %v847
      %v849 = vpop.f32.mrf.mxu0
      %v850 = vadd.f32 0.0, %v849
      %851 = vmatmul.bf16.gmra.mxu0 %v812
      %v852 = vpop.f32.mrf.mxu0
      %v853 = vadd.f32 0.0, %v852
      %v854 = vpop.f32.mrf.mxu0
      %v855 = vadd.f32 0.0, %v854
      %856 = vmatmul.bf16.gmra.mxu0 %v815
      %v857 = vpop.f32.mrf.mxu0
      %v858 = vadd.f32 0.0, %v857
      %v859 = vpop.f32.mrf.mxu0
      %v860 = vadd.f32 0.0, %v859
      %861 = vmatmul.bf16.gmra.mxu0 %v818
      %v862 = vpop.f32.mrf.mxu0
      %v863 = vadd.f32 0.0, %v862
      %v864 = vpop.f32.mrf.mxu0
      %v865 = vadd.f32 0.0, %v864
      %866 = vmatmul.bf16.gmra.mxu0 %v821
      %v867 = vpop.f32.mrf.mxu0
      %v868 = vadd.f32 0.0, %v867
      %v869 = vpop.f32.mrf.mxu0
      %v870 = vadd.f32 0.0, %v869
      %871 = vmatmul.bf16.gmra.mxu0 %v824
      %v872 = vpop.f32.mrf.mxu0
      %v873 = vadd.f32 0.0, %v872
      %v874 = vpop.f32.mrf.mxu0
      %v875 = vadd.f32 0.0, %v874
      %876 = vmatmul.bf16.gmra.mxu0 %v827
      %v877 = vpop.f32.mrf.mxu0
      %v878 = vadd.f32 0.0, %v877
      %v879 = vpop.f32.mrf.mxu0
      %v880 = vadd.f32 0.0, %v879
      %881 = vmatmul.bf16.gmra.mxu0 %v830
      %v882 = vpop.f32.mrf.mxu0
      %v883 = vadd.f32 0.0, %v882
      %v884 = vpop.f32.mrf.mxu0
      %v885 = vadd.f32 0.0, %v884
      %886 = vmatmul.bf16.gmra.mxu0 %v833
      %v887 = vpop.f32.mrf.mxu0
      %v888 = vadd.f32 0.0, %v887
      %v889 = vpop.f32.mrf.mxu0
      %v890 = vadd.f32 0.0, %v889
      %891 = vdwg.mxu0
      %v892 = vadd.f32 %v738, %v848
      %v893 = vadd.f32 %v739, %v850
      %v894 = vadd.f32 %v740, %v853
      %v895 = vadd.f32 %v741, %v855
      %v896 = vadd.f32 %v742, %v858
      %v897 = vadd.f32 %v743, %v860
      %v898 = vadd.f32 %v744, %v863
      %v899 = vadd.f32 %v745, %v865
      %v900 = vadd.f32 %v746, %v868
      %v901 = vadd.f32 %v747, %v870
      %v902 = vadd.f32 %v748, %v873
      %v903 = vadd.f32 %v749, %v875
      %v904 = vadd.f32 %v750, %v878
      %v905 = vadd.f32 %v751, %v880
      %v906 = vadd.f32 %v752, %v883
      %v907 = vadd.f32 %v753, %v885
      %v908 = vadd.f32 %v754, %v888
      %v909 = vadd.f32 %v755, %v890
      %s910 = scalar_lea.vmem %s1, 10
      %v911 = vld [vmem:[%s910] sm:$0x3]
      %vm912 = vcmask 1045504
      %v913 = vrot.slane %v292, 2
      %v914 = vrot.slane %v293, 2
      %v915 = vsel %vm912, %v913, %v914
      %v916 = vrot.slane %v294, 2
      %v917 = vsel %vm912, %v914, %v916
      %v918 = vrot.slane %v295, 2
      %v919 = vsel %vm912, %v916, %v918
      %v920 = vrot.slane %v296, 2
      %v921 = vsel %vm912, %v918, %v920
      %v922 = vrot.slane %v297, 2
      %v923 = vsel %vm912, %v920, %v922
      %v924 = vrot.slane %v298, 2
      %v925 = vsel %vm912, %v922, %v924
      %v926 = vrot.slane %v299, 2
      %v927 = vsel %vm912, %v924, %v926
      %v928 = vrot.slane %v669, 2
      %v929 = vsel %vm912, %v926, %v928
      %v930 = vrot.slane %v670, 2
      %v931 = vsel %vm912, %v928, %v930
      %v933 = vsel %vm378, %v915, 0
      %v936 = vsel %vm378, %v917, 0
      %v939 = vsel %vm378, %v919, 0
      %v942 = vsel %vm378, %v921, 0
      %v945 = vsel %vm378, %v923, 0
      %v948 = vsel %vm378, %v925, 0
      %v951 = vsel %vm378, %v927, 0
      %v954 = vsel %vm378, %v929, 0
      %v957 = vsel %vm378, %v931, 0
      %v960 = vsel %vm406, %v911, 0
      %962 = vmatpush.bf16.msra.mxu0 0
      %963 = vmatpush.bf16.msra.mxu0 0
      %964 = vmatpush.bf16.msra.mxu0 0
      %965 = vmatpush.bf16.msra.mxu0 0
      %966 = vmatpush.bf16.msra.mxu0 0
      %967 = vmatpush.bf16.msra.mxu0 0
      %968 = vmatpush.bf16.msra.mxu0 0
      %969 = vmatpush.bf16.msra.mxu0 %v960
      %970 = vmatmul.bf16.gmra.mxu0 %v933
      %v971 = vpop.f32.mrf.mxu0
      %v972 = vadd.f32 0.0, %v971
      %v973 = vpop.f32.mrf.mxu0
      %v974 = vadd.f32 0.0, %v973
      %975 = vmatmul.bf16.gmra.mxu0 %v936
      %v976 = vpop.f32.mrf.mxu0
      %v977 = vadd.f32 0.0, %v976
      %v978 = vpop.f32.mrf.mxu0
      %v979 = vadd.f32 0.0, %v978
      %980 = vmatmul.bf16.gmra.mxu0 %v939
      %v981 = vpop.f32.mrf.mxu0
      %v982 = vadd.f32 0.0, %v981
      %v983 = vpop.f32.mrf.mxu0
      %v984 = vadd.f32 0.0, %v983
      %985 = vmatmul.bf16.gmra.mxu0 %v942
      %v986 = vpop.f32.mrf.mxu0
      %v987 = vadd.f32 0.0, %v986
      %v988 = vpop.f32.mrf.mxu0
      %v989 = vadd.f32 0.0, %v988
      %990 = vmatmul.bf16.gmra.mxu0 %v945
      %v991 = vpop.f32.mrf.mxu0
      %v992 = vadd.f32 0.0, %v991
      %v993 = vpop.f32.mrf.mxu0
      %v994 = vadd.f32 0.0, %v993
      %995 = vmatmul.bf16.gmra.mxu0 %v948
      %v996 = vpop.f32.mrf.mxu0
      %v997 = vadd.f32 0.0, %v996
      %v998 = vpop.f32.mrf.mxu0
      %v999 = vadd.f32 0.0, %v998
      %1000 = vmatmul.bf16.gmra.mxu0 %v951
      %v1001 = vpop.f32.mrf.mxu0
      %v1002 = vadd.f32 0.0, %v1001
      %v1003 = vpop.f32.mrf.mxu0
      %v1004 = vadd.f32 0.0, %v1003
      %1005 = vmatmul.bf16.gmra.mxu0 %v954
      %v1006 = vpop.f32.mrf.mxu0
      %v1007 = vadd.f32 0.0, %v1006
      %v1008 = vpop.f32.mrf.mxu0
      %v1009 = vadd.f32 0.0, %v1008
      %1010 = vmatmul.bf16.gmra.mxu0 %v957
      %v1011 = vpop.f32.mrf.mxu0
      %v1012 = vadd.f32 0.0, %v1011
      %v1013 = vpop.f32.mrf.mxu0
      %v1014 = vadd.f32 0.0, %v1013
      %1015 = vdwg.mxu0
      %v1016 = vadd.f32 %v892, %v972
      %v1017 = vadd.f32 %v893, %v974
      %v1018 = vadd.f32 %v894, %v977
      %v1019 = vadd.f32 %v895, %v979
      %v1020 = vadd.f32 %v896, %v982
      %v1021 = vadd.f32 %v897, %v984
      %v1022 = vadd.f32 %v898, %v987
      %v1023 = vadd.f32 %v899, %v989
      %v1024 = vadd.f32 %v900, %v992
      %v1025 = vadd.f32 %v901, %v994
      %v1026 = vadd.f32 %v902, %v997
      %v1027 = vadd.f32 %v903, %v999
      %v1028 = vadd.f32 %v904, %v1002
      %v1029 = vadd.f32 %v905, %v1004
      %v1030 = vadd.f32 %v906, %v1007
      %v1031 = vadd.f32 %v907, %v1009
      %v1032 = vadd.f32 %v908, %v1012
      %v1033 = vadd.f32 %v909, %v1014
      %s1034 = scalar_lea.vmem %s1, 12
      %v1035 = vld [vmem:[%s1034] sm:$0x3]
      %v1038 = vunpack.c.l.b16 %v248
      %v1039 = vunpack.c.l.b16 %v249
      %v1040 = vpack.c.b16 %v1038, %v668
      %v1041 = vpack.c.b16 %v1039, %v1039
      %v1042 = vrot.slane %v1040, 2
      %v1043 = vsel %vm912, %v928, %v1042
      %v1044 = vrot.slane %v1041, 2
      %v1045 = vsel %vm912, %v1042, %v1044
      %v1047 = vsel %vm378, %v1043, 0
      %v1050 = vsel %vm378, %v1045, 0
      %v1053 = vsel %vm406, %v1035, 0
      %1055 = vmatpush.bf16.msra.mxu0 0
      %1056 = vmatpush.bf16.msra.mxu0 0
      %1057 = vmatpush.bf16.msra.mxu0 0
      %1058 = vmatpush.bf16.msra.mxu0 0
      %1059 = vmatpush.bf16.msra.mxu0 0
      %1060 = vmatpush.bf16.msra.mxu0 0
      %1061 = vmatpush.bf16.msra.mxu0 0
      %1062 = vmatpush.bf16.msra.mxu0 %v1053
      %1063 = vmatmul.bf16.gmra.mxu0 %v936
      %v1064 = vpop.f32.mrf.mxu0
      %v1065 = vadd.f32 0.0, %v1064
      %v1066 = vpop.f32.mrf.mxu0
      %v1067 = vadd.f32 0.0, %v1066
      %1068 = vmatmul.bf16.gmra.mxu0 %v939
      %v1069 = vpop.f32.mrf.mxu0
      %v1070 = vadd.f32 0.0, %v1069
      %v1071 = vpop.f32.mrf.mxu0
      %v1072 = vadd.f32 0.0, %v1071
      %1073 = vmatmul.bf16.gmra.mxu0 %v942
      %v1074 = vpop.f32.mrf.mxu0
      %v1075 = vadd.f32 0.0, %v1074
      %v1076 = vpop.f32.mrf.mxu0
      %v1077 = vadd.f32 0.0, %v1076
      %1078 = vmatmul.bf16.gmra.mxu0 %v945
      %v1079 = vpop.f32.mrf.mxu0
      %v1080 = vadd.f32 0.0, %v1079
      %v1081 = vpop.f32.mrf.mxu0
      %v1082 = vadd.f32 0.0, %v1081
      %1083 = vmatmul.bf16.gmra.mxu0 %v948
      %v1084 = vpop.f32.mrf.mxu0
      %v1085 = vadd.f32 0.0, %v1084
      %v1086 = vpop.f32.mrf.mxu0
      %v1087 = vadd.f32 0.0, %v1086
      %1088 = vmatmul.bf16.gmra.mxu0 %v951
      %v1089 = vpop.f32.mrf.mxu0
      %v1090 = vadd.f32 0.0, %v1089
      %v1091 = vpop.f32.mrf.mxu0
      %v1092 = vadd.f32 0.0, %v1091
      %1093 = vmatmul.bf16.gmra.mxu0 %v954
      %v1094 = vpop.f32.mrf.mxu0
      %v1095 = vadd.f32 0.0, %v1094
      %v1096 = vpop.f32.mrf.mxu0
      %v1097 = vadd.f32 0.0, %v1096
      %1098 = vmatmul.bf16.gmra.mxu0 %v1047
      %v1099 = vpop.f32.mrf.mxu0
      %v1100 = vadd.f32 0.0, %v1099
      %v1101 = vpop.f32.mrf.mxu0
      %v1102 = vadd.f32 0.0, %v1101
      %1103 = vmatmul.bf16.gmra.mxu0 %v1050
      %v1104 = vpop.f32.mrf.mxu0
      %v1105 = vadd.f32 0.0, %v1104
      %v1106 = vpop.f32.mrf.mxu0
      %v1107 = vadd.f32 0.0, %v1106
      %1108 = vdwg.mxu0
      %v1109 = vadd.f32 %v1016, %v1065
      %v1110 = vadd.f32 %v1017, %v1067
      %v1111 = vadd.f32 %v1018, %v1070
      %v1112 = vadd.f32 %v1019, %v1072
      %v1113 = vadd.f32 %v1020, %v1075
      %v1114 = vadd.f32 %v1021, %v1077
      %v1115 = vadd.f32 %v1022, %v1080
      %v1116 = vadd.f32 %v1023, %v1082
      %v1117 = vadd.f32 %v1024, %v1085
      %v1118 = vadd.f32 %v1025, %v1087
      %v1119 = vadd.f32 %v1026, %v1090
      %v1120 = vadd.f32 %v1027, %v1092
      %v1121 = vadd.f32 %v1028, %v1095
      %v1122 = vadd.f32 %v1029, %v1097
      %v1123 = vadd.f32 %v1030, %v1100
      %v1124 = vadd.f32 %v1031, %v1102
      %v1125 = vadd.f32 %v1032, %v1105
      %v1126 = vadd.f32 %v1033, %v1107
      %s1127 = scalar_lea.vmem %s1, 14
      %v1128 = vld [vmem:[%s1127] sm:$0x3]
      %vm1129 = vsmask.f32 5376
      %v1130 = vrot.slane %v322, 2
      %v1131 = vrot.slane %v318, 3
      %v1132 = vor.u32 %v1130, %v1131
      %v1133 = vrot.slane %v330, 2
      %v1134 = vrot.slane %v326, 3
      %v1135 = vor.u32 %v1133, %v1134
      %v1136 = vsel %vm1129, %v1132, %v1135
      %v1137 = vrot.slane %v338, 2
      %v1138 = vrot.slane %v334, 3
      %v1139 = vor.u32 %v1137, %v1138
      %v1140 = vsel %vm1129, %v1135, %v1139
      %v1141 = vrot.slane %v346, 2
      %v1142 = vrot.slane %v342, 3
      %v1143 = vor.u32 %v1141, %v1142
      %v1144 = vsel %vm1129, %v1139, %v1143
      %v1145 = vrot.slane %v354, 2
      %v1146 = vrot.slane %v350, 3
      %v1147 = vor.u32 %v1145, %v1146
      %v1148 = vsel %vm1129, %v1143, %v1147
      %v1149 = vrot.slane %v362, 2
      %v1150 = vrot.slane %v358, 3
      %v1151 = vor.u32 %v1149, %v1150
      %v1152 = vsel %vm1129, %v1147, %v1151
      %v1153 = vrot.slane %v370, 2
      %v1154 = vrot.slane %v366, 3
      %v1155 = vor.u32 %v1153, %v1154
      %v1156 = vsel %vm1129, %v1151, %v1155
      %v1157 = vrot.slane %v791, 2
      %v1158 = vrot.slane %v794, 3
      %v1159 = vor.u32 %v1157, %v1158
      %v1160 = vsel %vm1129, %v1155, %v1159
      %v1162 = vshrl.u32 %v1040, 16
      %v1164 = vrot.slane %v1162, 2
      %v1165 = vshll.u32 %v1040, 16
      %v1167 = vrot.slane %v1165, 3
      %v1168 = vor.u32 %v1164, %v1167
      %v1169 = vsel %vm1129, %v1159, %v1168
      %v1171 = vshrl.u32 %v1041, 16
      %v1173 = vrot.slane %v1171, 2
      %v1174 = vshll.u32 %v1041, 16
      %v1176 = vrot.slane %v1174, 3
      %v1177 = vor.u32 %v1173, %v1176
      %v1178 = vsel %vm1129, %v1168, %v1177
      %v1180 = vsel %vm378, %v1136, 0
      %v1183 = vsel %vm378, %v1140, 0
      %v1186 = vsel %vm378, %v1144, 0
      %v1189 = vsel %vm378, %v1148, 0
      %v1192 = vsel %vm378, %v1152, 0
      %v1195 = vsel %vm378, %v1156, 0
      %v1198 = vsel %vm378, %v1160, 0
      %v1201 = vsel %vm378, %v1169, 0
      %v1204 = vsel %vm378, %v1178, 0
      %v1207 = vsel %vm406, %v1128, 0
      %1209 = vmatpush.bf16.msra.mxu0 0
      %1210 = vmatpush.bf16.msra.mxu0 0
      %1211 = vmatpush.bf16.msra.mxu0 0
      %1212 = vmatpush.bf16.msra.mxu0 0
      %1213 = vmatpush.bf16.msra.mxu0 0
      %1214 = vmatpush.bf16.msra.mxu0 0
      %1215 = vmatpush.bf16.msra.mxu0 0
      %1216 = vmatpush.bf16.msra.mxu0 %v1207
      %1217 = vmatmul.bf16.gmra.mxu0 %v1180
      %v1218 = vpop.f32.mrf.mxu0
      %v1219 = vadd.f32 0.0, %v1218
      %v1220 = vpop.f32.mrf.mxu0
      %v1221 = vadd.f32 0.0, %v1220
      %1222 = vmatmul.bf16.gmra.mxu0 %v1183
      %v1223 = vpop.f32.mrf.mxu0
      %v1224 = vadd.f32 0.0, %v1223
      %v1225 = vpop.f32.mrf.mxu0
      %v1226 = vadd.f32 0.0, %v1225
      %1227 = vmatmul.bf16.gmra.mxu0 %v1186
      %v1228 = vpop.f32.mrf.mxu0
      %v1229 = vadd.f32 0.0, %v1228
      %v1230 = vpop.f32.mrf.mxu0
      %v1231 = vadd.f32 0.0, %v1230
      %1232 = vmatmul.bf16.gmra.mxu0 %v1189
      %v1233 = vpop.f32.mrf.mxu0
      %v1234 = vadd.f32 0.0, %v1233
      %v1235 = vpop.f32.mrf.mxu0
      %v1236 = vadd.f32 0.0, %v1235
      %1237 = vmatmul.bf16.gmra.mxu0 %v1192
      %v1238 = vpop.f32.mrf.mxu0
      %v1239 = vadd.f32 0.0, %v1238
      %v1240 = vpop.f32.mrf.mxu0
      %v1241 = vadd.f32 0.0, %v1240
      %1242 = vmatmul.bf16.gmra.mxu0 %v1195
      %v1243 = vpop.f32.mrf.mxu0
      %v1244 = vadd.f32 0.0, %v1243
      %v1245 = vpop.f32.mrf.mxu0
      %v1246 = vadd.f32 0.0, %v1245
      %1247 = vmatmul.bf16.gmra.mxu0 %v1198
      %v1248 = vpop.f32.mrf.mxu0
      %v1249 = vadd.f32 0.0, %v1248
      %v1250 = vpop.f32.mrf.mxu0
      %v1251 = vadd.f32 0.0, %v1250
      %1252 = vmatmul.bf16.gmra.mxu0 %v1201
      %v1253 = vpop.f32.mrf.mxu0
      %v1254 = vadd.f32 0.0, %v1253
      %v1255 = vpop.f32.mrf.mxu0
      %v1256 = vadd.f32 0.0, %v1255
      %1257 = vmatmul.bf16.gmra.mxu0 %v1204
      %v1258 = vpop.f32.mrf.mxu0
      %v1259 = vadd.f32 0.0, %v1258
      %v1260 = vpop.f32.mrf.mxu0
      %v1261 = vadd.f32 0.0, %v1260
      %1262 = vdwg.mxu0
      %v1263 = vadd.f32 %v1109, %v1219
      %v1264 = vadd.f32 %v1110, %v1221
      %v1265 = vadd.f32 %v1111, %v1224
      %v1266 = vadd.f32 %v1112, %v1226
      %v1267 = vadd.f32 %v1113, %v1229
      %v1268 = vadd.f32 %v1114, %v1231
      %v1269 = vadd.f32 %v1115, %v1234
      %v1270 = vadd.f32 %v1116, %v1236
      %v1271 = vadd.f32 %v1117, %v1239
      %v1272 = vadd.f32 %v1118, %v1241
      %v1273 = vadd.f32 %v1119, %v1244
      %v1274 = vadd.f32 %v1120, %v1246
      %v1275 = vadd.f32 %v1121, %v1249
      %v1276 = vadd.f32 %v1122, %v1251
      %v1277 = vadd.f32 %v1123, %v1254
      %v1278 = vadd.f32 %v1124, %v1256
      %v1279 = vadd.f32 %v1125, %v1259
      %v1280 = vadd.f32 %v1126, %v1261
      %s1281 = scalar_lea.vmem %s1, 16
      %v1282 = vld [vmem:[%s1281] sm:$0x3]
      %vm1283 = vcmask 1044480
      %v1284 = vrot.slane %v293, 3
      %v1285 = vrot.slane %v294, 3
      %v1286 = vsel %vm1283, %v1284, %v1285
      %v1287 = vrot.slane %v295, 3
      %v1288 = vsel %vm1283, %v1285, %v1287
      %v1289 = vrot.slane %v296, 3
      %v1290 = vsel %vm1283, %v1287, %v1289
      %v1291 = vrot.slane %v297, 3
      %v1292 = vsel %vm1283, %v1289, %v1291
      %v1293 = vrot.slane %v298, 3
      %v1294 = vsel %vm1283, %v1291, %v1293
      %v1295 = vrot.slane %v299, 3
      %v1296 = vsel %vm1283, %v1293, %v1295
      %v1297 = vrot.slane %v669, 3
      %v1298 = vsel %vm1283, %v1295, %v1297
      %v1299 = vrot.slane %v1040, 3
      %v1300 = vsel %vm1283, %v1297, %v1299
      %v1301 = vrot.slane %v1041, 3
      %v1302 = vsel %vm1283, %v1299, %v1301
      %v1304 = vsel %vm378, %v1286, 0
      %v1307 = vsel %vm378, %v1288, 0
      %v1310 = vsel %vm378, %v1290, 0
      %v1313 = vsel %vm378, %v1292, 0
      %v1316 = vsel %vm378, %v1294, 0
      %v1319 = vsel %vm378, %v1296, 0
      %v1322 = vsel %vm378, %v1298, 0
      %v1325 = vsel %vm378, %v1300, 0
      %v1328 = vsel %vm378, %v1302, 0
      %v1331 = vsel %vm406, %v1282, 0
      %1333 = vmatpush.bf16.msra.mxu0 0
      %1334 = vmatpush.bf16.msra.mxu0 0
      %1335 = vmatpush.bf16.msra.mxu0 0
      %1336 = vmatpush.bf16.msra.mxu0 0
      %1337 = vmatpush.bf16.msra.mxu0 0
      %1338 = vmatpush.bf16.msra.mxu0 0
      %1339 = vmatpush.bf16.msra.mxu0 0
      %1340 = vmatpush.bf16.msra.mxu0 %v1331
      %1341 = vmatmul.bf16.gmra.mxu0 %v1304
      %v1342 = vpop.f32.mrf.mxu0
      %v1343 = vadd.f32 0.0, %v1342
      %v1344 = vpop.f32.mrf.mxu0
      %v1345 = vadd.f32 0.0, %v1344
      %1346 = vmatmul.bf16.gmra.mxu0 %v1307
      %v1347 = vpop.f32.mrf.mxu0
      %v1348 = vadd.f32 0.0, %v1347
      %v1349 = vpop.f32.mrf.mxu0
      %v1350 = vadd.f32 0.0, %v1349
      %1351 = vmatmul.bf16.gmra.mxu0 %v1310
      %v1352 = vpop.f32.mrf.mxu0
      %v1353 = vadd.f32 0.0, %v1352
      %v1354 = vpop.f32.mrf.mxu0
      %v1355 = vadd.f32 0.0, %v1354
      %1356 = vmatmul.bf16.gmra.mxu0 %v1313
      %v1357 = vpop.f32.mrf.mxu0
      %v1358 = vadd.f32 0.0, %v1357
      %v1359 = vpop.f32.mrf.mxu0
      %v1360 = vadd.f32 0.0, %v1359
      %1361 = vmatmul.bf16.gmra.mxu0 %v1316
      %v1362 = vpop.f32.mrf.mxu0
      %v1363 = vadd.f32 0.0, %v1362
      %v1364 = vpop.f32.mrf.mxu0
      %v1365 = vadd.f32 0.0, %v1364
      %1366 = vmatmul.bf16.gmra.mxu0 %v1319
      %v1367 = vpop.f32.mrf.mxu0
      %v1368 = vadd.f32 0.0, %v1367
      %v1369 = vpop.f32.mrf.mxu0
      %v1370 = vadd.f32 0.0, %v1369
      %1371 = vmatmul.bf16.gmra.mxu0 %v1322
      %v1372 = vpop.f32.mrf.mxu0
      %v1373 = vadd.f32 0.0, %v1372
      %v1374 = vpop.f32.mrf.mxu0
      %v1375 = vadd.f32 0.0, %v1374
      %1376 = vmatmul.bf16.gmra.mxu0 %v1325
      %v1377 = vpop.f32.mrf.mxu0
      %v1378 = vadd.f32 0.0, %v1377
      %v1379 = vpop.f32.mrf.mxu0
      %v1380 = vadd.f32 0.0, %v1379
      %1381 = vmatmul.bf16.gmra.mxu0 %v1328
      %v1382 = vpop.f32.mrf.mxu0
      %v1383 = vadd.f32 0.0, %v1382
      %v1384 = vpop.f32.mrf.mxu0
      %v1385 = vadd.f32 0.0, %v1384
      %1386 = vdwg.mxu0
      %v1387 = vadd.f32 %v1263, %v1343
      %v1388 = vadd.f32 %v1264, %v1345
      %v1389 = vadd.f32 %v1265, %v1348
      %v1390 = vadd.f32 %v1266, %v1350
      %v1391 = vadd.f32 %v1267, %v1353
      %v1392 = vadd.f32 %v1268, %v1355
      %v1393 = vadd.f32 %v1269, %v1358
      %v1394 = vadd.f32 %v1270, %v1360
      %v1395 = vadd.f32 %v1271, %v1363
      %v1396 = vadd.f32 %v1272, %v1365
      %v1397 = vadd.f32 %v1273, %v1368
      %v1398 = vadd.f32 %v1274, %v1370
      %v1399 = vadd.f32 %v1275, %v1373
      %v1400 = vadd.f32 %v1276, %v1375
      %v1401 = vadd.f32 %v1277, %v1378
      %v1402 = vadd.f32 %v1278, %v1380
      %v1403 = vadd.f32 %v1279, %v1383
      %v1404 = vadd.f32 %v1280, %v1385
      %v1405 = vld [vmem:[%s2] sm:$0x1]
      %v1407 = vperm.slane %v1405, 0
      %v1409 = vmul.f32 %v1387, %v1407
      %v1410 = vmul.f32 %v1388, %v1407
      %v1411 = vmul.f32 %v1389, %v1407
      %v1412 = vmul.f32 %v1390, %v1407
      %v1413 = vmul.f32 %v1391, %v1407
      %v1414 = vmul.f32 %v1392, %v1407
      %v1415 = vmul.f32 %v1393, %v1407
      %v1416 = vmul.f32 %v1394, %v1407
      %v1417 = vmul.f32 %v1395, %v1407
      %v1418 = vmul.f32 %v1396, %v1407
      %v1419 = vmul.f32 %v1397, %v1407
      %v1420 = vmul.f32 %v1398, %v1407
      %v1421 = vmul.f32 %v1399, %v1407
      %v1422 = vmul.f32 %v1400, %v1407
      %v1423 = vmul.f32 %v1401, %v1407
      %v1424 = vmul.f32 %v1402, %v1407
      %v1425 = vmul.f32 %v1403, %v1407
      %v1426 = vmul.f32 %v1404, %v1407
      %v1427 = vld [vmem:[%s3] sm:$0x1]
      %v1429 = vperm.slane %v1427, 0
      %v1431 = vadd.f32 %v1409, %v1429
      %v1432 = vadd.f32 %v1410, %v1429
      %v1433 = vadd.f32 %v1411, %v1429
      %v1434 = vadd.f32 %v1412, %v1429
      %v1435 = vadd.f32 %v1413, %v1429
      %v1436 = vadd.f32 %v1414, %v1429
      %v1437 = vadd.f32 %v1415, %v1429
      %v1438 = vadd.f32 %v1416, %v1429
      %v1439 = vadd.f32 %v1417, %v1429
      %v1440 = vadd.f32 %v1418, %v1429
      %v1441 = vadd.f32 %v1419, %v1429
      %v1442 = vadd.f32 %v1420, %v1429
      %v1443 = vadd.f32 %v1421, %v1429
      %v1444 = vadd.f32 %v1422, %v1429
      %v1445 = vadd.f32 %v1423, %v1429
      %v1446 = vadd.f32 %v1424, %v1429
      %v1447 = vadd.f32 %v1425, %v1429
      %v1448 = vadd.f32 %v1426, %v1429
      %v1449 = vmax.f32 %v1431, 0.0
      %v1450 = vmax.f32 %v1432, 0.0
      %v1451 = vmax.f32 %v1433, 0.0
      %v1452 = vmax.f32 %v1434, 0.0
      %v1453 = vmax.f32 %v1435, 0.0
      %v1454 = vmax.f32 %v1436, 0.0
      %v1455 = vmax.f32 %v1437, 0.0
      %v1456 = vmax.f32 %v1438, 0.0
      %v1457 = vmax.f32 %v1439, 0.0
      %v1458 = vmax.f32 %v1440, 0.0
      %v1459 = vmax.f32 %v1441, 0.0
      %v1460 = vmax.f32 %v1442, 0.0
      %v1461 = vmax.f32 %v1443, 0.0
      %v1462 = vmax.f32 %v1444, 0.0
      %v1463 = vmax.f32 %v1445, 0.0
      %v1464 = vmax.f32 %v1446, 0.0
      %v1465 = vmax.f32 %v1447, 0.0
      %v1466 = vmax.f32 %v1448, 0.0
      %vm1467 = vcmask 64512
      %1468 = vst.msk [vmem:[%s219] sm:$0xff] %vm1467, %v1449
      %1469 = vst.msk [vmem:[%s219 + $0x8] sm:$0xff] %vm1467, %v1450
      %1470 = vst.msk [vmem:[%s219 + $0x10] sm:$0xff] %vm1467, %v1451
      %1471 = vst.msk [vmem:[%s219 + $0x18] sm:$0xff] %vm1467, %v1452
      %1472 = vst.msk [vmem:[%s219 + $0x20] sm:$0xff] %vm1467, %v1453
      %1473 = vst.msk [vmem:[%s219 + $0x28] sm:$0xff] %vm1467, %v1454
      %1474 = vst.msk [vmem:[%s219 + $0x30] sm:$0xff] %vm1467, %v1455
      %1475 = vst.msk [vmem:[%s219 + $0x38] sm:$0xff] %vm1467, %v1456
      %1476 = vst.msk [vmem:[%s219 + $0x40] sm:$0xff] %vm1467, %v1457
      %1477 = vst.msk [vmem:[%s219 + $0x48] sm:$0xff] %vm1467, %v1458
      %1478 = vst.msk [vmem:[%s219 + $0x50] sm:$0xff] %vm1467, %v1459
      %1479 = vst.msk [vmem:[%s219 + $0x58] sm:$0xff] %vm1467, %v1460
      %1480 = vst.msk [vmem:[%s219 + $0x60] sm:$0xff] %vm1467, %v1461
      %1481 = vst.msk [vmem:[%s219 + $0x68] sm:$0xff] %vm1467, %v1462
      %1482 = vst.msk [vmem:[%s219 + $0x70] sm:$0xff] %vm1467, %v1463
      %1483 = vst.msk [vmem:[%s219 + $0x78] sm:$0xff] %vm1467, %v1464
      %1484 = vst.msk [vmem:[%s219 + $0x80] sm:$0xff] %vm1467, %v1465
      %1485 = vst.msk [vmem:[%s219 + $0x88] sm:$0xff] %vm1467, %v1466
      %s1486 = smul.u32 18, %s20
      %p1487 = scmp.lt.s32.totalorder %s19, 1
      %s1488 = scalar_select %p1487, %s19, 1
      %p1489 = scmp.lt.s32.totalorder %s1486, 35
      %s1490 = scalar_select %p1489, %s1486, 35
      %s1491 = smul.addr %s1488, 36
      %s1492 = sadd.s32 %s1490, %s1491
      %s1493 = smul.addr %s1492, 8
      %s1494 = scalar_lea.vmem %s4, %s1493
      // Predicated region
      $region37: #{conv_bn_relu.3} parent=35 // pred_check
        %p1495 = pneg %p136
      $region38: #{conv_bn_relu.3} parent=35 // pred_check_branch
        %1497 = sbr.rel (%p1495) target = $region40
      $region39: #{conv_bn_relu.3} parent=35 // pred_region
        %s1498 = smul.u32 18, %s20
      $region40: #{conv_bn_relu.3} parent=35 // pred_fallthru
        _
    $region36: #{conv_bn_relu.3} parent=5 // pred_fallthru
      _
    %p1499 = scmp.le.s32.totalorder 2, %s10
    // Predicated region
    $region41: #{conv_bn_relu.3} parent=5 // pred_check
      %p1500 = pneg %p1499
    $region42: #{conv_bn_relu.3} parent=5 // pred_check_branch
      %1502 = sbr.rel (%p1500) target = $region44
    $region43: #{conv_bn_relu.3} parent=5 // pred_region
      %s1503 = ssub.s32 %s10, 2
      // Predicated region
      $region45: #{conv_bn_relu.3} parent=43 // pred_check
        %p1504 = pneg %p142
      $region46: #{conv_bn_relu.3} parent=43 // pred_check_branch
        %1506 = sbr.rel (%p1504) target = $region48
      $region47: #{conv_bn_relu.3} parent=43 // pred_region
        %s1507 = smul.u32 18, %s22
        %p1508 = scmp.lt.s32.totalorder %s21, 1
        %s1509 = scalar_select %p1508, %s21, 1
        %p1510 = scmp.lt.s32.totalorder %s1507, 35
        %s1511 = scalar_select %p1510, %s1507, 35
        %s1512 = smul.addr %s1509, 36
        %s1513 = sadd.s32 %s1511, %s1512
        %s1514 = smul.addr %s1513, 8
        %s1515 = scalar_lea.vmem %s4, %s1514
      $region48: #{conv_bn_relu.3} parent=43 // pred_fallthru
        _
    $region44: #{conv_bn_relu.3} parent=5 // pred_fallthru
      _
  $region6: #{conv_bn_relu.3} parent=0 // loop_footer
    %s14 = sadd.s32 1, %s10
  $region7: #{conv_bn_relu.3} parent=0 // loop_footer_branch
    %9 = sbr.rel target = $region3
  $region8: #{conv_bn_relu.3} parent=0 // loop_exit
    _

// kernel: conv_bn_relu.2
$region0: #{conv_bn_relu.2}
  #allocation0 [shape = 'u32[]', space=smem, size = 0x4, offset = 0x4, fixed_abs, tag = 'smem constant byte address 0x4 - core index']
  #allocation1 [shape = 'u32[72,128]{1,0:T(1,128)}', space=vmem, size = 0x9000, scoped, tag = 'internal scratch']
  %s0 = inlined_call_operand.vmem [shape: bf16[2,328,4], index: 0, kind: input, shape index: {}]
  %s1 = inlined_call_operand.vmem [shape: bf16[9,4,128], index: 1, kind: input, shape index: {}]
  %s2 = inlined_call_operand.vmem [shape: f32[1,128], index: 2, kind: output, shape index: {0}]
  %s3 = inlined_call_operand.vmem [shape: f32[1,128], index: 3, kind: output, shape index: {1}]
  %4 = xla_tuple %s2, %s3
  %s5 = sld [smem:[#allocation0]]
  $region53: #{conv_bn_relu.2} parent=0
    _
  %s7 = ssub.s32 1, %s5
  %s8 = scalar_select 0, %s7, %s5
  loop: start=0, step=1, limit=6
  $region2: #{conv_bn_relu.2} parent=0 // loop_pre_header
    _
  $region3: #{conv_bn_relu.2} parent=0 // loop_header
    %s10 = sphi 0, %s14
    %p11 = scmp.ge.s32.totalorder %s10, 6
    %s17 = sphi 0, %s29
    %s18 = sphi 0, %s25
    %s19 = sphi 0, %s17
    %s20 = sphi 0, %s18
    %s21 = sphi 0, %s19
    %s22 = sphi 0, %s20
    %s32 = sphi 0, %s34
    %s35 = sphi 0, %s32
    %s36 = sphi 0, %s35
    %s52 = sphi 0, %s36
    %s56 = sphi 0, %s56
    %s58 = sphi 0, %s56
    %s59 = sphi 0, %s58
    %s73 = sphi 0, %s59
    %s77 = sphi 0, %s77
    %s79 = sphi 0, %s77
    %s80 = sphi 0, %s79
    %s94 = sphi 0, %s80
    %s98 = sphi 0, %s98
    %s100 = sphi 0, %s98
    %s101 = sphi 0, %s100
    %s115 = sphi 0, %s101
  $region4: #{conv_bn_relu.2} parent=0 // loop_header_branch
    %13 = sbr.rel (%p11) target = $region8
  $region5: #{conv_bn_relu.2} parent=0 // loop_body
    %s15 = ssub.s32 %s10, 1
    %s16 = ssub.s32 %s10, 2
    %s23 = sadd.s32 1, %s18
    %p24 = scmp.ge.s32.totalorder %s23, 2
    %s25 = scalar_select %p24, 0, %s23
    %s26 = sadd.s32 1, %s17
    %s27 = scalar_select %p24, %s26, %s17
    %p28 = scmp.ge.s32.totalorder %s27, 2
    %s29 = scalar_select %p28, 0, %s27
    %s30 = ssub.s32 %s17, %s29
    %p31 = scmp.eq.s32.totalorder %s30, 0
    %s33 = sadd.s32 %s32, 1
    %s34 = scalar_select %p31, %s32, %s33
    %p37 = pneg %p31
    %p38 = scmp.eq.s32.totalorder %s10, 3
    %p39 = por %p37, %p38
    %p40 = scmp.ne.s32.totalorder %s32, %s35
    %p41 = scmp.eq.s32.totalorder %s10, 0
    %p42 = por %p40, %p41
    %p43 = scmp.ne.s32.totalorder %s32, %s35
    %p44 = scmp.eq.s32.totalorder %s15, 3
    %p45 = por %p43, %p44
    %p46 = scmp.ne.s32.totalorder %s35, %s36
    %p47 = scmp.eq.s32.totalorder %s15, 0
    %p48 = por %p46, %p47
    %p49 = scmp.ne.s32.totalorder %s35, %s36
    %p50 = scmp.eq.s32.totalorder %s16, 3
    %p51 = por %p49, %p50
    %p53 = scmp.ne.s32.totalorder %s36, %s52
    %p54 = scmp.eq.s32.totalorder %s16, 0
    %p55 = por %p53, %p54
    %s57 = sadd.s32 %s56, 1
    %p60 = scmp.eq.s32.totalorder %s10, 3
    %p61 = scmp.ne.s32.totalorder %s56, %s58
    %p62 = scmp.eq.s32.totalorder %s10, 0
    %p63 = por %p61, %p62
    %p64 = scmp.ne.s32.totalorder %s56, %s58
    %p65 = scmp.eq.s32.totalorder %s15, 3
    %p66 = por %p64, %p65
    %p67 = scmp.ne.s32.totalorder %s58, %s59
    %p68 = scmp.eq.s32.totalorder %s15, 0
    %p69 = por %p67, %p68
    %p70 = scmp.ne.s32.totalorder %s58, %s59
    %p71 = scmp.eq.s32.totalorder %s16, 3
    %p72 = por %p70, %p71
    %p74 = scmp.ne.s32.totalorder %s59, %s73
    %p75 = scmp.eq.s32.totalorder %s16, 0
    %p76 = por %p74, %p75
    %s78 = sadd.s32 %s77, 1
    %p81 = scmp.eq.s32.totalorder %s10, 3
    %p82 = scmp.ne.s32.totalorder %s77, %s79
    %p83 = scmp.eq.s32.totalorder %s10, 0
    %p84 = por %p82, %p83
    %p85 = scmp.ne.s32.totalorder %s77, %s79
    %p86 = scmp.eq.s32.totalorder %s15, 3
    %p87 = por %p85, %p86
    %p88 = scmp.ne.s32.totalorder %s79, %s80
    %p89 = scmp.eq.s32.totalorder %s15, 0
    %p90 = por %p88, %p89
    %p91 = scmp.ne.s32.totalorder %s79, %s80
    %p92 = scmp.eq.s32.totalorder %s16, 3
    %p93 = por %p91, %p92
    %p95 = scmp.ne.s32.totalorder %s80, %s94
    %p96 = scmp.eq.s32.totalorder %s16, 0
    %p97 = por %p95, %p96
    %s99 = sadd.s32 %s98, 1
    %p102 = scmp.eq.s32.totalorder %s10, 3
    %p103 = scmp.ne.s32.totalorder %s98, %s100
    %p104 = scmp.eq.s32.totalorder %s10, 0
    %p105 = por %p103, %p104
    %p106 = scmp.ne.s32.totalorder %s98, %s100
    %p107 = scmp.eq.s32.totalorder %s15, 3
    %p108 = por %p106, %p107
    %p109 = scmp.ne.s32.totalorder %s100, %s101
    %p110 = scmp.eq.s32.totalorder %s15, 0
    %p111 = por %p109, %p110
    %p112 = scmp.ne.s32.totalorder %s100, %s101
    %p113 = scmp.eq.s32.totalorder %s16, 3
    %p114 = por %p112, %p113
    %p116 = scmp.ne.s32.totalorder %s101, %s115
    %p117 = scmp.eq.s32.totalorder %s16, 0
    %p118 = por %p116, %p117
    %p119 = scmp.le.s32.totalorder 1, %s10
    %p120 = scmp.lt.s32.totalorder %s10, 5
    %p121 = pnand %p119, %p120
    %p122 = pneg %p121
    // Predicated region
    $region9: #{conv_bn_relu.2} parent=5 // pred_check
      _
    $region10: #{conv_bn_relu.2} parent=5 // pred_check_branch
      %124 = sbr.rel (%p121) target = $region12
    $region11: #{conv_bn_relu.2} parent=5 // pred_region
      %s125 = ssub.s32 %s10, 1
      // Predicated region
      $region13: #{conv_bn_relu.2} parent=11 // pred_check
        %p126 = pneg %p69
      $region14: #{conv_bn_relu.2} parent=11 // pred_check_branch
        %128 = sbr.rel (%p126) target = $region16
      $region15: #{conv_bn_relu.2} parent=11 // pred_region
        _
      $region16: #{conv_bn_relu.2} parent=11 // pred_fallthru
        _
    $region12: #{conv_bn_relu.2} parent=5 // pred_fallthru
      _
    %p129 = scmp.lt.s32.totalorder %s10, 4
    // Predicated region
    $region17: #{conv_bn_relu.2} parent=5 // pred_check
      %p130 = pneg %p129
    $region18: #{conv_bn_relu.2} parent=5 // pred_check_branch
      %132 = sbr.rel (%p130) target = $region20
    $region19: #{conv_bn_relu.2} parent=5 // pred_region
      // Predicated region
      $region21: #{conv_bn_relu.2} parent=19 // pred_check
        %p133 = pneg %p42
      $region22: #{conv_bn_relu.2} parent=19 // pred_check_branch
        %135 = sbr.rel (%p133) target = $region24
      $region23: #{conv_bn_relu.2} parent=19 // pred_region
        %p136 = scmp.lt.s32.totalorder %s17, 1
        %s137 = scalar_select %p136, %s17, 1
        %s138 = smul.addr %s137, 41
        %s139 = smul.addr %s138, 4
        %s140 = scalar_lea.vmem %s0, %s139
      $region24: #{conv_bn_relu.2} parent=19 // pred_fallthru
        _
    $region20: #{conv_bn_relu.2} parent=5 // pred_fallthru
      _
    %p141 = scmp.le.s32.totalorder 1, %s10
    %p142 = scmp.lt.s32.totalorder %s10, 5
    %p143 = pnand %p141, %p142
    %p144 = pneg %p143
    // Predicated region
    $region25: #{conv_bn_relu.2} parent=5 // pred_check
      _
    $region26: #{conv_bn_relu.2} parent=5 // pred_check_branch
      %146 = sbr.rel (%p143) target = $region28
    $region27: #{conv_bn_relu.2} parent=5 // pred_region
      %s147 = ssub.s32 %s10, 1
      %p148 = scmp.lt.s32.totalorder %s19, 1
      %s149 = scalar_select %p148, %s19, 1
      %s150 = smul.addr %s149, 41
      %s151 = smul.addr %s150, 4
      %s152 = scalar_lea.vmem %s0, %s151
      %p153 = pneg %p48
      %p154 = pneg %p45
      %p155 = pneg %p69
      %p156 = pneg %p66
      %p157 = pneg %p90
      %p158 = pneg %p87
      %p159 = pneg %p111
      %p160 = pneg %p108
      %p161 = scmp.lt.s32.totalorder %s19, 1
      %s162 = scalar_select %p161, %s19, 1
      %s163 = smul.addr %s162, 41
      %s164 = smul.addr %s163, 4
      %s165 = scalar_lea.vmem %s0, %s164
      %p167 = scmp.eq.s32.totalorder %s19, 0
      %p168 = scmp.eq.s32.totalorder %s20, 0
      %p169 = pnand %p167, %p168
      %p170 = pneg %p169
      // Predicated region
      $region29: #{conv_bn_relu.2} parent=27 // pred_check
        _
      $region30: #{conv_bn_relu.2} parent=27 // pred_check_branch
        %172 = sbr.rel (%p169) target = $region32
      $region31: #{conv_bn_relu.2} parent=27 // pred_region
        %173 = vst [vmem:[%s2] sm:$0x1] 0.0
        %174 = vst [vmem:[%s3] sm:$0x1] 0.0
      $region32: #{conv_bn_relu.2} parent=27 // pred_fallthru
        _
      %s175 = smul.u32 %s20, 144
      %s176 = sshra.s32 %s175, 3
      %s177 = sand.u32 %s175, 7
      %s178 = smul.addr %s176, 4
      %s179 = scalar_lea.vmem %s165, %s178
      %v180 = vld [vmem:[%s179] sm:$0xf]
      %v181 = vld [vmem:[%s179 + $0x4] sm:$0xf]
      %v182 = vld [vmem:[%s179 + $0x8] sm:$0xf]
      %v183 = vld [vmem:[%s179 + $0xc] sm:$0xf]
      %v184 = vld [vmem:[%s179 + $0x10] sm:$0xf]
      %v185 = vld [vmem:[%s179 + $0x14] sm:$0xf]
      %v186 = vld [vmem:[%s179 + $0x18] sm:$0xf]
      %v187 = vld [vmem:[%s179 + $0x1c] sm:$0xf]
      %v188 = vld [vmem:[%s179 + $0x20] sm:$0xf]
      %v189 = vld [vmem:[%s179 + $0x24] sm:$0xf]
      %v190 = vld [vmem:[%s179 + $0x28] sm:$0xf]
      %v191 = vld [vmem:[%s179 + $0x2c] sm:$0xf]
      %v192 = vld [vmem:[%s179 + $0x30] sm:$0xf]
      %v193 = vld [vmem:[%s179 + $0x34] sm:$0xf]
      %v194 = vld [vmem:[%s179 + $0x38] sm:$0xf]
      %v195 = vld [vmem:[%s179 + $0x3c] sm:$0xf]
      %v196 = vld [vmem:[%s179 + $0x40] sm:$0xf]
      %v197 = vld [vmem:[%s179 + $0x44] sm:$0xf]
      %v198 = vld [vmem:[%s179 + $0x48] sm:$0xf]
      %v199 = vld [vmem:[%s179 + $0x4c] sm:$0xf]
      %v200 = vld [vmem:[%s179 + $0x50] sm:$0xf]
      %v201 = vld [vmem:[%s179 + $0x54] sm:$0xf]
      %v202 = vld [vmem:[%s179 + $0x58] sm:$0xf]
      %v203 = vld [vmem:[%s1] sm:$0x3]
      %s204 = scalar_lea.vmem %s1, 2
      %v205 = vld [vmem:[%s204] sm:$0x3]
      %v225 = vunpack.c.l.b16 %v180
      %v226 = vunpack.c.l.b16 %v181
      %v227 = vunpack.c.l.b16 %v182
      %v228 = vunpack.c.l.b16 %v183
      %v229 = vunpack.c.l.b16 %v184
      %v230 = vunpack.c.l.b16 %v185
      %v231 = vunpack.c.l.b16 %v186
      %v232 = vunpack.c.l.b16 %v187
      %v233 = vunpack.c.l.b16 %v188
      %v234 = vunpack.c.l.b16 %v189
      %v235 = vunpack.c.l.b16 %v190
      %v236 = vunpack.c.l.b16 %v191
      %v237 = vunpack.c.l.b16 %v192
      %v238 = vunpack.c.l.b16 %v193
      %v239 = vunpack.c.l.b16 %v194
      %v240 = vunpack.c.l.b16 %v195
      %v241 = vunpack.c.l.b16 %v196
      %v242 = vunpack.c.l.b16 %v197
      %v243 = vunpack.c.l.b16 %v198
      %v244 = vpack.c.b16 %v226, %v225
      %v245 = vpack.c.b16 %v228, %v227
      %v246 = vpack.c.b16 %v230, %v229
      %v247 = vpack.c.b16 %v232, %v231
      %v248 = vpack.c.b16 %v234, %v233
      %v249 = vpack.c.b16 %v236, %v235
      %v250 = vpack.c.b16 %v238, %v237
      %v251 = vpack.c.b16 %v240, %v239
      %v252 = vpack.c.b16 %v242, %v241
      %v253 = vpack.c.b16 %v243, %v243
      %vm254 = vsmask.f32 7424
      %v256 = vshrl.u32 %v244, 16
      %v258 = vshll.u32 %v244, 16
      %v260 = vrot.slane %v258, 1
      %v261 = vor.u32 %v256, %v260
      %v263 = vshll.u32 %v245, 16
      %v265 = vrot.slane %v263, 1
      %v266 = vsel %vm254, %v261, %v265
      %v267 = vshrl.u32 %v245, 16
      %v269 = vor.u32 %v267, %v265
      %v271 = vshll.u32 %v246, 16
      %v273 = vrot.slane %v271, 1
      %v274 = vsel %vm254, %v269, %v273
      %v275 = vshrl.u32 %v246, 16
      %v277 = vor.u32 %v275, %v273
      %v279 = vshll.u32 %v247, 16
      %v281 = vrot.slane %v279, 1
      %v282 = vsel %vm254, %v277, %v281
      %v283 = vshrl.u32 %v247, 16
      %v285 = vor.u32 %v283, %v281
      %v287 = vshll.u32 %v248, 16
      %v289 = vrot.slane %v287, 1
      %v290 = vsel %vm254, %v285, %v289
      %v291 = vshrl.u32 %v248, 16
      %v293 = vor.u32 %v291, %v289
      %v295 = vshll.u32 %v249, 16
      %v297 = vrot.slane %v295, 1
      %v298 = vsel %vm254, %v293, %v297
      %v299 = vshrl.u32 %v249, 16
      %v301 = vor.u32 %v299, %v297
      %v303 = vshll.u32 %v250, 16
      %v305 = vrot.slane %v303, 1
      %v306 = vsel %vm254, %v301, %v305
      %v307 = vshrl.u32 %v250, 16
      %v309 = vor.u32 %v307, %v305
      %v311 = vshll.u32 %v251, 16
      %v313 = vrot.slane %v311, 1
      %v314 = vsel %vm254, %v309, %v313
      %v315 = vshrl.u32 %v251, 16
      %v317 = vor.u32 %v315, %v313
      %v319 = vshll.u32 %v252, 16
      %v321 = vrot.slane %v319, 1
      %v322 = vsel %vm254, %v317, %v321
      %v323 = vshrl.u32 %v252, 16
      %v325 = vor.u32 %v323, %v321
      %v327 = vshll.u32 %v253, 16
      %v329 = vrot.slane %v327, 1
      %v330 = vsel %vm254, %v325, %v329
      %vm331 = vcmask 31744
      %v333 = vsel %vm331, %v266, 0
      %v336 = vsel %vm331, %v274, 0
      %v339 = vsel %vm331, %v282, 0
      %v342 = vsel %vm331, %v290, 0
      %v345 = vsel %vm331, %v298, 0
      %v348 = vsel %vm331, %v306, 0
      %v351 = vsel %vm331, %v314, 0
      %v354 = vsel %vm331, %v322, 0
      %v357 = vsel %vm331, %v330, 0
      %vm359 = vcmask 1041408
      %v361 = vsel %vm359, %v205, 0
      %363 = vmatpush.bf16.msra.mxu0 0
      %364 = vmatpush.bf16.msra.mxu0 0
      %365 = vmatpush.bf16.msra.mxu0 0
      %366 = vmatpush.bf16.msra.mxu0 0
      %367 = vmatpush.bf16.msra.mxu0 0
      %368 = vmatpush.bf16.msra.mxu0 0
      %369 = vmatpush.bf16.msra.mxu0 0
      %370 = vmatpush.bf16.msra.mxu0 %v361
      %371 = vmatmul.bf16.gmra.mxu0 %v333
      %v372 = vpop.f32.mrf.mxu0
      %v373 = vadd.f32 0.0, %v372
      %v374 = vpop.f32.mrf.mxu0
      %v375 = vadd.f32 0.0, %v374
      %376 = vmatmul.bf16.gmra.mxu0 %v336
      %v377 = vpop.f32.mrf.mxu0
      %v378 = vadd.f32 0.0, %v377
      %v379 = vpop.f32.mrf.mxu0
      %v380 = vadd.f32 0.0, %v379
      %381 = vmatmul.bf16.gmra.mxu0 %v339
      %v382 = vpop.f32.mrf.mxu0
      %v383 = vadd.f32 0.0, %v382
      %v384 = vpop.f32.mrf.mxu0
      %v385 = vadd.f32 0.0, %v384
      %386 = vmatmul.bf16.gmra.mxu0 %v342
      %v387 = vpop.f32.mrf.mxu0
      %v388 = vadd.f32 0.0, %v387
      %v389 = vpop.f32.mrf.mxu0
      %v390 = vadd.f32 0.0, %v389
      %391 = vmatmul.bf16.gmra.mxu0 %v345
      %v392 = vpop.f32.mrf.mxu0
      %v393 = vadd.f32 0.0, %v392
      %v394 = vpop.f32.mrf.mxu0
      %v395 = vadd.f32 0.0, %v394
      %396 = vmatmul.bf16.gmra.mxu0 %v348
      %v397 = vpop.f32.mrf.mxu0
      %v398 = vadd.f32 0.0, %v397
      %v399 = vpop.f32.mrf.mxu0
      %v400 = vadd.f32 0.0, %v399
      %401 = vmatmul.bf16.gmra.mxu0 %v351
      %v402 = vpop.f32.mrf.mxu0
      %v403 = vadd.f32 0.0, %v402
      %v404 = vpop.f32.mrf.mxu0
      %v405 = vadd.f32 0.0, %v404
      %406 = vmatmul.bf16.gmra.mxu0 %v354
      %v407 = vpop.f32.mrf.mxu0
      %v408 = vadd.f32 0.0, %v407
      %v409 = vpop.f32.mrf.mxu0
      %v410 = vadd.f32 0.0, %v409
      %411 = vmatmul.bf16.gmra.mxu0 %v357
      %v412 = vpop.f32.mrf.mxu0
      %v413 = vadd.f32 0.0, %v412
      %v414 = vpop.f32.mrf.mxu0
      %v415 = vadd.f32 0.0, %v414
      %416 = vdwg.mxu0
      %v417 = vsel %vm331, %v244, 0
      %v419 = vsel %vm331, %v245, 0
      %v421 = vsel %vm331, %v246, 0
      %v423 = vsel %vm331, %v247, 0
      %v425 = vsel %vm331, %v248, 0
      %v427 = vsel %vm331, %v249, 0
      %v429 = vsel %vm331, %v250, 0
      %v431 = vsel %vm331, %v251, 0
      %v433 = vsel %vm331, %v252, 0
      %v436 = vsel %vm359, %v203, 0
      %438 = vmatpush.bf16.msra.mxu0 0
      %439 = vmatpush.bf16.msra.mxu0 0
      %440 = vmatpush.bf16.msra.mxu0 0
      %441 = vmatpush.bf16.msra.mxu0 0
      %442 = vmatpush.bf16.msra.mxu0 0
      %443 = vmatpush.bf16.msra.mxu0 0
      %444 = vmatpush.bf16.msra.mxu0 0
      %445 = vmatpush.bf16.msra.mxu0 %v436
      %446 = vmatmul.bf16.gmra.mxu0 %v417
      %v447 = vpop.f32.mrf.mxu0
      %v448 = vadd.f32 %v373, %v447
      %v449 = vpop.f32.mrf.mxu0
      %v450 = vadd.f32 %v375, %v449
      %451 = vmatmul.bf16.gmra.mxu0 %v419
      %v452 = vpop.f32.mrf.mxu0
      %v453 = vadd.f32 %v378, %v452
      %v454 = vpop.f32.mrf.mxu0
      %v455 = vadd.f32 %v380, %v454
      %456 = vmatmul.bf16.gmra.mxu0 %v421
      %v457 = vpop.f32.mrf.mxu0
      %v458 = vadd.f32 %v383, %v457
      %v459 = vpop.f32.mrf.mxu0
      %v460 = vadd.f32 %v385, %v459
      %461 = vmatmul.bf16.gmra.mxu0 %v423
      %v462 = vpop.f32.mrf.mxu0
      %v463 = vadd.f32 %v388, %v462
      %v464 = vpop.f32.mrf.mxu0
      %v465 = vadd.f32 %v390, %v464
      %466 = vmatmul.bf16.gmra.mxu0 %v425
      %v467 = vpop.f32.mrf.mxu0
      %v468 = vadd.f32 %v393, %v467
      %v469 = vpop.f32.mrf.mxu0
      %v470 = vadd.f32 %v395, %v469
      %471 = vmatmul.bf16.gmra.mxu0 %v427
      %v472 = vpop.f32.mrf.mxu0
      %v473 = vadd.f32 %v398, %v472
      %v474 = vpop.f32.mrf.mxu0
      %v475 = vadd.f32 %v400, %v474
      %476 = vmatmul.bf16.gmra.mxu0 %v429
      %v477 = vpop.f32.mrf.mxu0
      %v478 = vadd.f32 %v403, %v477
      %v479 = vpop.f32.mrf.mxu0
      %v480 = vadd.f32 %v405, %v479
      %481 = vmatmul.bf16.gmra.mxu0 %v431
      %v482 = vpop.f32.mrf.mxu0
      %v483 = vadd.f32 %v408, %v482
      %v484 = vpop.f32.mrf.mxu0
      %v485 = vadd.f32 %v410, %v484
      %486 = vmatmul.bf16.gmra.mxu0 %v433
      %v487 = vpop.f32.mrf.mxu0
      %v488 = vadd.f32 %v413, %v487
      %v489 = vpop.f32.mrf.mxu0
      %v490 = vadd.f32 %v415, %v489
      %491 = vdwg.mxu0
      %s492 = scalar_lea.vmem %s1, 4
      %v493 = vld [vmem:[%s492] sm:$0x3]
      %vm494 = vcmask 1046528
      %v495 = vrot.slane %v244, 1
      %v496 = vrot.slane %v245, 1
      %v497 = vsel %vm494, %v495, %v496
      %v498 = vrot.slane %v246, 1
      %v499 = vsel %vm494, %v496, %v498
      %v500 = vrot.slane %v247, 1
      %v501 = vsel %vm494, %v498, %v500
      %v502 = vrot.slane %v248, 1
      %v503 = vsel %vm494, %v500, %v502
      %v504 = vrot.slane %v249, 1
      %v505 = vsel %vm494, %v502, %v504
      %v506 = vrot.slane %v250, 1
      %v507 = vsel %vm494, %v504, %v506
      %v508 = vrot.slane %v251, 1
      %v509 = vsel %vm494, %v506, %v508
      %v510 = vrot.slane %v252, 1
      %v511 = vsel %vm494, %v508, %v510
      %v512 = vrot.slane %v253, 1
      %v513 = vsel %vm494, %v510, %v512
      %v515 = vsel %vm331, %v497, 0
      %v518 = vsel %vm331, %v499, 0
      %v521 = vsel %vm331, %v501, 0
      %v524 = vsel %vm331, %v503, 0
      %v527 = vsel %vm331, %v505, 0
      %v530 = vsel %vm331, %v507, 0
      %v533 = vsel %vm331, %v509, 0
      %v536 = vsel %vm331, %v511, 0
      %v539 = vsel %vm331, %v513, 0
      %v542 = vsel %vm359, %v493, 0
      %544 = vmatpush.bf16.msra.mxu0 0
      %545 = vmatpush.bf16.msra.mxu0 0
      %546 = vmatpush.bf16.msra.mxu0 0
      %547 = vmatpush.bf16.msra.mxu0 0
      %548 = vmatpush.bf16.msra.mxu0 0
      %549 = vmatpush.bf16.msra.mxu0 0
      %550 = vmatpush.bf16.msra.mxu0 0
      %551 = vmatpush.bf16.msra.mxu0 %v542
      %552 = vmatmul.bf16.gmra.mxu0 %v515
      %v553 = vpop.f32.mrf.mxu0
      %v554 = vadd.f32 0.0, %v553
      %v555 = vpop.f32.mrf.mxu0
      %v556 = vadd.f32 0.0, %v555
      %557 = vmatmul.bf16.gmra.mxu0 %v518
      %v558 = vpop.f32.mrf.mxu0
      %v559 = vadd.f32 0.0, %v558
      %v560 = vpop.f32.mrf.mxu0
      %v561 = vadd.f32 0.0, %v560
      %562 = vmatmul.bf16.gmra.mxu0 %v521
      %v563 = vpop.f32.mrf.mxu0
      %v564 = vadd.f32 0.0, %v563
      %v565 = vpop.f32.mrf.mxu0
      %v566 = vadd.f32 0.0, %v565
      %567 = vmatmul.bf16.gmra.mxu0 %v524
      %v568 = vpop.f32.mrf.mxu0
      %v569 = vadd.f32 0.0, %v568
      %v570 = vpop.f32.mrf.mxu0
      %v571 = vadd.f32 0.0, %v570
      %572 = vmatmul.bf16.gmra.mxu0 %v527
      %v573 = vpop.f32.mrf.mxu0
      %v574 = vadd.f32 0.0, %v573
      %v575 = vpop.f32.mrf.mxu0
      %v576 = vadd.f32 0.0, %v575
      %577 = vmatmul.bf16.gmra.mxu0 %v530
      %v578 = vpop.f32.mrf.mxu0
      %v579 = vadd.f32 0.0, %v578
      %v580 = vpop.f32.mrf.mxu0
      %v581 = vadd.f32 0.0, %v580
      %582 = vmatmul.bf16.gmra.mxu0 %v533
      %v583 = vpop.f32.mrf.mxu0
      %v584 = vadd.f32 0.0, %v583
      %v585 = vpop.f32.mrf.mxu0
      %v586 = vadd.f32 0.0, %v585
      %587 = vmatmul.bf16.gmra.mxu0 %v536
      %v588 = vpop.f32.mrf.mxu0
      %v589 = vadd.f32 0.0, %v588
      %v590 = vpop.f32.mrf.mxu0
      %v591 = vadd.f32 0.0, %v590
      %592 = vmatmul.bf16.gmra.mxu0 %v539
      %v593 = vpop.f32.mrf.mxu0
      %v594 = vadd.f32 0.0, %v593
      %v595 = vpop.f32.mrf.mxu0
      %v596 = vadd.f32 0.0, %v595
      %597 = vdwg.mxu0
      %v598 = vadd.f32 %v448, %v554
      %v599 = vadd.f32 %v450, %v556
      %v600 = vadd.f32 %v453, %v559
      %v601 = vadd.f32 %v455, %v561
      %v602 = vadd.f32 %v458, %v564
      %v603 = vadd.f32 %v460, %v566
      %v604 = vadd.f32 %v463, %v569
      %v605 = vadd.f32 %v465, %v571
      %v606 = vadd.f32 %v468, %v574
      %v607 = vadd.f32 %v470, %v576
      %v608 = vadd.f32 %v473, %v579
      %v609 = vadd.f32 %v475, %v581
      %v610 = vadd.f32 %v478, %v584
      %v611 = vadd.f32 %v480, %v586
      %v612 = vadd.f32 %v483, %v589
      %v613 = vadd.f32 %v485, %v591
      %v614 = vadd.f32 %v488, %v594
      %v615 = vadd.f32 %v490, %v596
      %s616 = scalar_lea.vmem %s1, 6
      %v617 = vld [vmem:[%s616] sm:$0x3]
      %v620 = vunpack.c.l.b16 %v199
      %v621 = vunpack.c.l.b16 %v200
      %v622 = vpack.c.b16 %v620, %v243
      %v623 = vpack.c.b16 %v621, %v621
      %v624 = vrot.slane %v622, 1
      %v625 = vsel %vm494, %v510, %v624
      %v626 = vrot.slane %v623, 1
      %v627 = vsel %vm494, %v624, %v626
      %v629 = vsel %vm331, %v625, 0
      %v632 = vsel %vm331, %v627, 0
      %v635 = vsel %vm359, %v617, 0
      %637 = vmatpush.bf16.msra.mxu0 0
      %638 = vmatpush.bf16.msra.mxu0 0
      %639 = vmatpush.bf16.msra.mxu0 0
      %640 = vmatpush.bf16.msra.mxu0 0
      %641 = vmatpush.bf16.msra.mxu0 0
      %642 = vmatpush.bf16.msra.mxu0 0
      %643 = vmatpush.bf16.msra.mxu0 0
      %644 = vmatpush.bf16.msra.mxu0 %v635
      %645 = vmatmul.bf16.gmra.mxu0 %v518
      %v646 = vpop.f32.mrf.mxu0
      %v647 = vadd.f32 0.0, %v646
      %v648 = vpop.f32.mrf.mxu0
      %v649 = vadd.f32 0.0, %v648
      %650 = vmatmul.bf16.gmra.mxu0 %v521
      %v651 = vpop.f32.mrf.mxu0
      %v652 = vadd.f32 0.0, %v651
      %v653 = vpop.f32.mrf.mxu0
      %v654 = vadd.f32 0.0, %v653
      %655 = vmatmul.bf16.gmra.mxu0 %v524
      %v656 = vpop.f32.mrf.mxu0
      %v657 = vadd.f32 0.0, %v656
      %v658 = vpop.f32.mrf.mxu0
      %v659 = vadd.f32 0.0, %v658
      %660 = vmatmul.bf16.gmra.mxu0 %v527
      %v661 = vpop.f32.mrf.mxu0
      %v662 = vadd.f32 0.0, %v661
      %v663 = vpop.f32.mrf.mxu0
      %v664 = vadd.f32 0.0, %v663
      %665 = vmatmul.bf16.gmra.mxu0 %v530
      %v666 = vpop.f32.mrf.mxu0
      %v667 = vadd.f32 0.0, %v666
      %v668 = vpop.f32.mrf.mxu0
      %v669 = vadd.f32 0.0, %v668
      %670 = vmatmul.bf16.gmra.mxu0 %v533
      %v671 = vpop.f32.mrf.mxu0
      %v672 = vadd.f32 0.0, %v671
      %v673 = vpop.f32.mrf.mxu0
      %v674 = vadd.f32 0.0, %v673
      %675 = vmatmul.bf16.gmra.mxu0 %v536
      %v676 = vpop.f32.mrf.mxu0
      %v677 = vadd.f32 0.0, %v676
      %v678 = vpop.f32.mrf.mxu0
      %v679 = vadd.f32 0.0, %v678
      %680 = vmatmul.bf16.gmra.mxu0 %v629
      %v681 = vpop.f32.mrf.mxu0
      %v682 = vadd.f32 0.0, %v681
      %v683 = vpop.f32.mrf.mxu0
      %v684 = vadd.f32 0.0, %v683
      %685 = vmatmul.bf16.gmra.mxu0 %v632
      %v686 = vpop.f32.mrf.mxu0
      %v687 = vadd.f32 0.0, %v686
      %v688 = vpop.f32.mrf.mxu0
      %v689 = vadd.f32 0.0, %v688
      %690 = vdwg.mxu0
      %v691 = vadd.f32 %v598, %v647
      %v692 = vadd.f32 %v599, %v649
      %v693 = vadd.f32 %v600, %v652
      %v694 = vadd.f32 %v601, %v654
      %v695 = vadd.f32 %v602, %v657
      %v696 = vadd.f32 %v603, %v659
      %v697 = vadd.f32 %v604, %v662
      %v698 = vadd.f32 %v605, %v664
      %v699 = vadd.f32 %v606, %v667
      %v700 = vadd.f32 %v607, %v669
      %v701 = vadd.f32 %v608, %v672
      %v702 = vadd.f32 %v609, %v674
      %v703 = vadd.f32 %v610, %v677
      %v704 = vadd.f32 %v611, %v679
      %v705 = vadd.f32 %v612, %v682
      %v706 = vadd.f32 %v613, %v684
      %v707 = vadd.f32 %v614, %v687
      %v708 = vadd.f32 %v615, %v689
      %s709 = scalar_lea.vmem %s1, 8
      %v710 = vld [vmem:[%s709] sm:$0x3]
      %vm711 = vsmask.f32 6400
      %v712 = vrot.slane %v267, 1
      %v713 = vrot.slane %v263, 2
      %v714 = vor.u32 %v712, %v713
      %v715 = vrot.slane %v275, 1
      %v716 = vrot.slane %v271, 2
      %v717 = vor.u32 %v715, %v716
      %v718 = vsel %vm711, %v714, %v717
      %v719 = vrot.slane %v283, 1
      %v720 = vrot.slane %v279, 2
      %v721 = vor.u32 %v719, %v720
      %v722 = vsel %vm711, %v717, %v721
      %v723 = vrot.slane %v291, 1
      %v724 = vrot.slane %v287, 2
      %v725 = vor.u32 %v723, %v724
      %v726 = vsel %vm711, %v721, %v725
      %v727 = vrot.slane %v299, 1
      %v728 = vrot.slane %v295, 2
      %v729 = vor.u32 %v727, %v728
      %v730 = vsel %vm711, %v725, %v729
      %v731 = vrot.slane %v307, 1
      %v732 = vrot.slane %v303, 2
      %v733 = vor.u32 %v731, %v732
      %v734 = vsel %vm711, %v729, %v733
      %v735 = vrot.slane %v315, 1
      %v736 = vrot.slane %v311, 2
      %v737 = vor.u32 %v735, %v736
      %v738 = vsel %vm711, %v733, %v737
      %v739 = vrot.slane %v323, 1
      %v740 = vrot.slane %v319, 2
      %v741 = vor.u32 %v739, %v740
      %v742 = vsel %vm711, %v737, %v741
      %v744 = vshrl.u32 %v622, 16
      %v746 = vrot.slane %v744, 1
      %v747 = vshll.u32 %v622, 16
      %v749 = vrot.slane %v747, 2
      %v750 = vor.u32 %v746, %v749
      %v751 = vsel %vm711, %v741, %v750
      %v753 = vshrl.u32 %v623, 16
      %v755 = vrot.slane %v753, 1
      %v756 = vshll.u32 %v623, 16
      %v758 = vrot.slane %v756, 2
      %v759 = vor.u32 %v755, %v758
      %v760 = vsel %vm711, %v750, %v759
      %v762 = vsel %vm331, %v718, 0
      %v765 = vsel %vm331, %v722, 0
      %v768 = vsel %vm331, %v726, 0
      %v771 = vsel %vm331, %v730, 0
      %v774 = vsel %vm331, %v734, 0
      %v777 = vsel %vm331, %v738, 0
      %v780 = vsel %vm331, %v742, 0
      %v783 = vsel %vm331, %v751, 0
      %v786 = vsel %vm331, %v760, 0
      %v789 = vsel %vm359, %v710, 0
      %791 = vmatpush.bf16.msra.mxu0 0
      %792 = vmatpush.bf16.msra.mxu0 0
      %793 = vmatpush.bf16.msra.mxu0 0
      %794 = vmatpush.bf16.msra.mxu0 0
      %795 = vmatpush.bf16.msra.mxu0 0
      %796 = vmatpush.bf16.msra.mxu0 0
      %797 = vmatpush.bf16.msra.mxu0 0
      %798 = vmatpush.bf16.msra.mxu0 %v789
      %799 = vmatmul.bf16.gmra.mxu0 %v762
      %v800 = vpop.f32.mrf.mxu0
      %v801 = vadd.f32 0.0, %v800
      %v802 = vpop.f32.mrf.mxu0
      %v803 = vadd.f32 0.0, %v802
      %804 = vmatmul.bf16.gmra.mxu0 %v765
      %v805 = vpop.f32.mrf.mxu0
      %v806 = vadd.f32 0.0, %v805
      %v807 = vpop.f32.mrf.mxu0
      %v808 = vadd.f32 0.0, %v807
      %809 = vmatmul.bf16.gmra.mxu0 %v768
      %v810 = vpop.f32.mrf.mxu0
      %v811 = vadd.f32 0.0, %v810
      %v812 = vpop.f32.mrf.mxu0
      %v813 = vadd.f32 0.0, %v812
      %814 = vmatmul.bf16.gmra.mxu0 %v771
      %v815 = vpop.f32.mrf.mxu0
      %v816 = vadd.f32 0.0, %v815
      %v817 = vpop.f32.mrf.mxu0
      %v818 = vadd.f32 0.0, %v817
      %819 = vmatmul.bf16.gmra.mxu0 %v774
      %v820 = vpop.f32.mrf.mxu0
      %v821 = vadd.f32 0.0, %v820
      %v822 = vpop.f32.mrf.mxu0
      %v823 = vadd.f32 0.0, %v822
      %824 = vmatmul.bf16.gmra.mxu0 %v777
      %v825 = vpop.f32.mrf.mxu0
      %v826 = vadd.f32 0.0, %v825
      %v827 = vpop.f32.mrf.mxu0
      %v828 = vadd.f32 0.0, %v827
      %829 = vmatmul.bf16.gmra.mxu0 %v780
      %v830 = vpop.f32.mrf.mxu0
      %v831 = vadd.f32 0.0, %v830
      %v832 = vpop.f32.mrf.mxu0
      %v833 = vadd.f32 0.0, %v832
      %834 = vmatmul.bf16.gmra.mxu0 %v783
      %v835 = vpop.f32.mrf.mxu0
      %v836 = vadd.f32 0.0, %v835
      %v837 = vpop.f32.mrf.mxu0
      %v838 = vadd.f32 0.0, %v837
      %839 = vmatmul.bf16.gmra.mxu0 %v786
      %v840 = vpop.f32.mrf.mxu0
      %v841 = vadd.f32 0.0, %v840
      %v842 = vpop.f32.mrf.mxu0
      %v843 = vadd.f32 0.0, %v842
      %844 = vdwg.mxu0
      %v845 = vadd.f32 %v691, %v801
      %v846 = vadd.f32 %v692, %v803
      %v847 = vadd.f32 %v693, %v806
      %v848 = vadd.f32 %v694, %v808
      %v849 = vadd.f32 %v695, %v811
      %v850 = vadd.f32 %v696, %v813
      %v851 = vadd.f32 %v697, %v816
      %v852 = vadd.f32 %v698, %v818
      %v853 = vadd.f32 %v699, %v821
      %v854 = vadd.f32 %v700, %v823
      %v855 = vadd.f32 %v701, %v826
      %v856 = vadd.f32 %v702, %v828
      %v857 = vadd.f32 %v703, %v831
      %v858 = vadd.f32 %v704, %v833
      %v859 = vadd.f32 %v705, %v836
      %v860 = vadd.f32 %v706, %v838
      %v861 = vadd.f32 %v707, %v841
      %v862 = vadd.f32 %v708, %v843
      %s863 = scalar_lea.vmem %s1, 10
      %v864 = vld [vmem:[%s863] sm:$0x3]
      %vm865 = vcmask 1045504
      %v866 = vrot.slane %v245, 2
      %v867 = vrot.slane %v246, 2
      %v868 = vsel %vm865, %v866, %v867
      %v869 = vrot.slane %v247, 2
      %v870 = vsel %vm865, %v867, %v869
      %v871 = vrot.slane %v248, 2
      %v872 = vsel %vm865, %v869, %v871
      %v873 = vrot.slane %v249, 2
      %v874 = vsel %vm865, %v871, %v873
      %v875 = vrot.slane %v250, 2
      %v876 = vsel %vm865, %v873, %v875
      %v877 = vrot.slane %v251, 2
      %v878 = vsel %vm865, %v875, %v877
      %v879 = vrot.slane %v252, 2
      %v880 = vsel %vm865, %v877, %v879
      %v881 = vrot.slane %v622, 2
      %v882 = vsel %vm865, %v879, %v881
      %v883 = vrot.slane %v623, 2
      %v884 = vsel %vm865, %v881, %v883
      %v886 = vsel %vm331, %v868, 0
      %v889 = vsel %vm331, %v870, 0
      %v892 = vsel %vm331, %v872, 0
      %v895 = vsel %vm331, %v874, 0
      %v898 = vsel %vm331, %v876, 0
      %v901 = vsel %vm331, %v878, 0
      %v904 = vsel %vm331, %v880, 0
      %v907 = vsel %vm331, %v882, 0
      %v910 = vsel %vm331, %v884, 0
      %v913 = vsel %vm359, %v864, 0
      %915 = vmatpush.bf16.msra.mxu0 0
      %916 = vmatpush.bf16.msra.mxu0 0
      %917 = vmatpush.bf16.msra.mxu0 0
      %918 = vmatpush.bf16.msra.mxu0 0
      %919 = vmatpush.bf16.msra.mxu0 0
      %920 = vmatpush.bf16.msra.mxu0 0
      %921 = vmatpush.bf16.msra.mxu0 0
      %922 = vmatpush.bf16.msra.mxu0 %v913
      %923 = vmatmul.bf16.gmra.mxu0 %v886
      %v924 = vpop.f32.mrf.mxu0
      %v925 = vadd.f32 0.0, %v924
      %v926 = vpop.f32.mrf.mxu0
      %v927 = vadd.f32 0.0, %v926
      %928 = vmatmul.bf16.gmra.mxu0 %v889
      %v929 = vpop.f32.mrf.mxu0
      %v930 = vadd.f32 0.0, %v929
      %v931 = vpop.f32.mrf.mxu0
      %v932 = vadd.f32 0.0, %v931
      %933 = vmatmul.bf16.gmra.mxu0 %v892
      %v934 = vpop.f32.mrf.mxu0
      %v935 = vadd.f32 0.0, %v934
      %v936 = vpop.f32.mrf.mxu0
      %v937 = vadd.f32 0.0, %v936
      %938 = vmatmul.bf16.gmra.mxu0 %v895
      %v939 = vpop.f32.mrf.mxu0
      %v940 = vadd.f32 0.0, %v939
      %v941 = vpop.f32.mrf.mxu0
      %v942 = vadd.f32 0.0, %v941
      %943 = vmatmul.bf16.gmra.mxu0 %v898
      %v944 = vpop.f32.mrf.mxu0
      %v945 = vadd.f32 0.0, %v944
      %v946 = vpop.f32.mrf.mxu0
      %v947 = vadd.f32 0.0, %v946
      %948 = vmatmul.bf16.gmra.mxu0 %v901
      %v949 = vpop.f32.mrf.mxu0
      %v950 = vadd.f32 0.0, %v949
      %v951 = vpop.f32.mrf.mxu0
      %v952 = vadd.f32 0.0, %v951
      %953 = vmatmul.bf16.gmra.mxu0 %v904
      %v954 = vpop.f32.mrf.mxu0
      %v955 = vadd.f32 0.0, %v954
      %v956 = vpop.f32.mrf.mxu0
      %v957 = vadd.f32 0.0, %v956
      %958 = vmatmul.bf16.gmra.mxu0 %v907
      %v959 = vpop.f32.mrf.mxu0
      %v960 = vadd.f32 0.0, %v959
      %v961 = vpop.f32.mrf.mxu0
      %v962 = vadd.f32 0.0, %v961
      %963 = vmatmul.bf16.gmra.mxu0 %v910
      %v964 = vpop.f32.mrf.mxu0
      %v965 = vadd.f32 0.0, %v964
      %v966 = vpop.f32.mrf.mxu0
      %v967 = vadd.f32 0.0, %v966
      %968 = vdwg.mxu0
      %v969 = vadd.f32 %v845, %v925
      %v970 = vadd.f32 %v846, %v927
      %v971 = vadd.f32 %v847, %v930
      %v972 = vadd.f32 %v848, %v932
      %v973 = vadd.f32 %v849, %v935
      %v974 = vadd.f32 %v850, %v937
      %v975 = vadd.f32 %v851, %v940
      %v976 = vadd.f32 %v852, %v942
      %v977 = vadd.f32 %v853, %v945
      %v978 = vadd.f32 %v854, %v947
      %v979 = vadd.f32 %v855, %v950
      %v980 = vadd.f32 %v856, %v952
      %v981 = vadd.f32 %v857, %v955
      %v982 = vadd.f32 %v858, %v957
      %v983 = vadd.f32 %v859, %v960
      %v984 = vadd.f32 %v860, %v962
      %v985 = vadd.f32 %v861, %v965
      %v986 = vadd.f32 %v862, %v967
      %s987 = scalar_lea.vmem %s1, 12
      %v988 = vld [vmem:[%s987] sm:$0x3]
      %v991 = vunpack.c.l.b16 %v201
      %v992 = vunpack.c.l.b16 %v202
      %v993 = vpack.c.b16 %v991, %v621
      %v994 = vpack.c.b16 %v992, %v992
      %v995 = vrot.slane %v993, 2
      %v996 = vsel %vm865, %v881, %v995
      %v997 = vrot.slane %v994, 2
      %v998 = vsel %vm865, %v995, %v997
      %v1000 = vsel %vm331, %v996, 0
      %v1003 = vsel %vm331, %v998, 0
      %v1006 = vsel %vm359, %v988, 0
      %1008 = vmatpush.bf16.msra.mxu0 0
      %1009 = vmatpush.bf16.msra.mxu0 0
      %1010 = vmatpush.bf16.msra.mxu0 0
      %1011 = vmatpush.bf16.msra.mxu0 0
      %1012 = vmatpush.bf16.msra.mxu0 0
      %1013 = vmatpush.bf16.msra.mxu0 0
      %1014 = vmatpush.bf16.msra.mxu0 0
      %1015 = vmatpush.bf16.msra.mxu0 %v1006
      %1016 = vmatmul.bf16.gmra.mxu0 %v889
      %v1017 = vpop.f32.mrf.mxu0
      %v1018 = vadd.f32 0.0, %v1017
      %v1019 = vpop.f32.mrf.mxu0
      %v1020 = vadd.f32 0.0, %v1019
      %1021 = vmatmul.bf16.gmra.mxu0 %v892
      %v1022 = vpop.f32.mrf.mxu0
      %v1023 = vadd.f32 0.0, %v1022
      %v1024 = vpop.f32.mrf.mxu0
      %v1025 = vadd.f32 0.0, %v1024
      %1026 = vmatmul.bf16.gmra.mxu0 %v895
      %v1027 = vpop.f32.mrf.mxu0
      %v1028 = vadd.f32 0.0, %v1027
      %v1029 = vpop.f32.mrf.mxu0
      %v1030 = vadd.f32 0.0, %v1029
      %1031 = vmatmul.bf16.gmra.mxu0 %v898
      %v1032 = vpop.f32.mrf.mxu0
      %v1033 = vadd.f32 0.0, %v1032
      %v1034 = vpop.f32.mrf.mxu0
      %v1035 = vadd.f32 0.0, %v1034
      %1036 = vmatmul.bf16.gmra.mxu0 %v901
      %v1037 = vpop.f32.mrf.mxu0
      %v1038 = vadd.f32 0.0, %v1037
      %v1039 = vpop.f32.mrf.mxu0
      %v1040 = vadd.f32 0.0, %v1039
      %1041 = vmatmul.bf16.gmra.mxu0 %v904
      %v1042 = vpop.f32.mrf.mxu0
      %v1043 = vadd.f32 0.0, %v1042
      %v1044 = vpop.f32.mrf.mxu0
      %v1045 = vadd.f32 0.0, %v1044
      %1046 = vmatmul.bf16.gmra.mxu0 %v907
      %v1047 = vpop.f32.mrf.mxu0
      %v1048 = vadd.f32 0.0, %v1047
      %v1049 = vpop.f32.mrf.mxu0
      %v1050 = vadd.f32 0.0, %v1049
      %1051 = vmatmul.bf16.gmra.mxu0 %v1000
      %v1052 = vpop.f32.mrf.mxu0
      %v1053 = vadd.f32 0.0, %v1052
      %v1054 = vpop.f32.mrf.mxu0
      %v1055 = vadd.f32 0.0, %v1054
      %1056 = vmatmul.bf16.gmra.mxu0 %v1003
      %v1057 = vpop.f32.mrf.mxu0
      %v1058 = vadd.f32 0.0, %v1057
      %v1059 = vpop.f32.mrf.mxu0
      %v1060 = vadd.f32 0.0, %v1059
      %1061 = vdwg.mxu0
      %v1062 = vadd.f32 %v969, %v1018
      %v1063 = vadd.f32 %v970, %v1020
      %v1064 = vadd.f32 %v971, %v1023
      %v1065 = vadd.f32 %v972, %v1025
      %v1066 = vadd.f32 %v973, %v1028
      %v1067 = vadd.f32 %v974, %v1030
      %v1068 = vadd.f32 %v975, %v1033
      %v1069 = vadd.f32 %v976, %v1035
      %v1070 = vadd.f32 %v977, %v1038
      %v1071 = vadd.f32 %v978, %v1040
      %v1072 = vadd.f32 %v979, %v1043
      %v1073 = vadd.f32 %v980, %v1045
      %v1074 = vadd.f32 %v981, %v1048
      %v1075 = vadd.f32 %v982, %v1050
      %v1076 = vadd.f32 %v983, %v1053
      %v1077 = vadd.f32 %v984, %v1055
      %v1078 = vadd.f32 %v985, %v1058
      %v1079 = vadd.f32 %v986, %v1060
      %s1080 = scalar_lea.vmem %s1, 14
      %v1081 = vld [vmem:[%s1080] sm:$0x3]
      %vm1082 = vsmask.f32 5376
      %v1083 = vrot.slane %v275, 2
      %v1084 = vrot.slane %v271, 3
      %v1085 = vor.u32 %v1083, %v1084
      %v1086 = vrot.slane %v283, 2
      %v1087 = vrot.slane %v279, 3
      %v1088 = vor.u32 %v1086, %v1087
      %v1089 = vsel %vm1082, %v1085, %v1088
      %v1090 = vrot.slane %v291, 2
      %v1091 = vrot.slane %v287, 3
      %v1092 = vor.u32 %v1090, %v1091
      %v1093 = vsel %vm1082, %v1088, %v1092
      %v1094 = vrot.slane %v299, 2
      %v1095 = vrot.slane %v295, 3
      %v1096 = vor.u32 %v1094, %v1095
      %v1097 = vsel %vm1082, %v1092, %v1096
      %v1098 = vrot.slane %v307, 2
      %v1099 = vrot.slane %v303, 3
      %v1100 = vor.u32 %v1098, %v1099
      %v1101 = vsel %vm1082, %v1096, %v1100
      %v1102 = vrot.slane %v315, 2
      %v1103 = vrot.slane %v311, 3
      %v1104 = vor.u32 %v1102, %v1103
      %v1105 = vsel %vm1082, %v1100, %v1104
      %v1106 = vrot.slane %v323, 2
      %v1107 = vrot.slane %v319, 3
      %v1108 = vor.u32 %v1106, %v1107
      %v1109 = vsel %vm1082, %v1104, %v1108
      %v1110 = vrot.slane %v744, 2
      %v1111 = vrot.slane %v747, 3
      %v1112 = vor.u32 %v1110, %v1111
      %v1113 = vsel %vm1082, %v1108, %v1112
      %v1115 = vshrl.u32 %v993, 16
      %v1117 = vrot.slane %v1115, 2
      %v1118 = vshll.u32 %v993, 16
      %v1120 = vrot.slane %v1118, 3
      %v1121 = vor.u32 %v1117, %v1120
      %v1122 = vsel %vm1082, %v1112, %v1121
      %v1124 = vshrl.u32 %v994, 16
      %v1126 = vrot.slane %v1124, 2
      %v1127 = vshll.u32 %v994, 16
      %v1129 = vrot.slane %v1127, 3
      %v1130 = vor.u32 %v1126, %v1129
      %v1131 = vsel %vm1082, %v1121, %v1130
      %v1133 = vsel %vm331, %v1089, 0
      %v1136 = vsel %vm331, %v1093, 0
      %v1139 = vsel %vm331, %v1097, 0
      %v1142 = vsel %vm331, %v1101, 0
      %v1145 = vsel %vm331, %v1105, 0
      %v1148 = vsel %vm331, %v1109, 0
      %v1151 = vsel %vm331, %v1113, 0
      %v1154 = vsel %vm331, %v1122, 0
      %v1157 = vsel %vm331, %v1131, 0
      %v1160 = vsel %vm359, %v1081, 0
      %1162 = vmatpush.bf16.msra.mxu0 0
      %1163 = vmatpush.bf16.msra.mxu0 0
      %1164 = vmatpush.bf16.msra.mxu0 0
      %1165 = vmatpush.bf16.msra.mxu0 0
      %1166 = vmatpush.bf16.msra.mxu0 0
      %1167 = vmatpush.bf16.msra.mxu0 0
      %1168 = vmatpush.bf16.msra.mxu0 0
      %1169 = vmatpush.bf16.msra.mxu0 %v1160
      %1170 = vmatmul.bf16.gmra.mxu0 %v1133
      %v1171 = vpop.f32.mrf.mxu0
      %v1172 = vadd.f32 0.0, %v1171
      %v1173 = vpop.f32.mrf.mxu0
      %v1174 = vadd.f32 0.0, %v1173
      %1175 = vmatmul.bf16.gmra.mxu0 %v1136
      %v1176 = vpop.f32.mrf.mxu0
      %v1177 = vadd.f32 0.0, %v1176
      %v1178 = vpop.f32.mrf.mxu0
      %v1179 = vadd.f32 0.0, %v1178
      %1180 = vmatmul.bf16.gmra.mxu0 %v1139
      %v1181 = vpop.f32.mrf.mxu0
      %v1182 = vadd.f32 0.0, %v1181
      %v1183 = vpop.f32.mrf.mxu0
      %v1184 = vadd.f32 0.0, %v1183
      %1185 = vmatmul.bf16.gmra.mxu0 %v1142
      %v1186 = vpop.f32.mrf.mxu0
      %v1187 = vadd.f32 0.0, %v1186
      %v1188 = vpop.f32.mrf.mxu0
      %v1189 = vadd.f32 0.0, %v1188
      %1190 = vmatmul.bf16.gmra.mxu0 %v1145
      %v1191 = vpop.f32.mrf.mxu0
      %v1192 = vadd.f32 0.0, %v1191
      %v1193 = vpop.f32.mrf.mxu0
      %v1194 = vadd.f32 0.0, %v1193
      %1195 = vmatmul.bf16.gmra.mxu0 %v1148
      %v1196 = vpop.f32.mrf.mxu0
      %v1197 = vadd.f32 0.0, %v1196
      %v1198 = vpop.f32.mrf.mxu0
      %v1199 = vadd.f32 0.0, %v1198
      %1200 = vmatmul.bf16.gmra.mxu0 %v1151
      %v1201 = vpop.f32.mrf.mxu0
      %v1202 = vadd.f32 0.0, %v1201
      %v1203 = vpop.f32.mrf.mxu0
      %v1204 = vadd.f32 0.0, %v1203
      %1205 = vmatmul.bf16.gmra.mxu0 %v1154
      %v1206 = vpop.f32.mrf.mxu0
      %v1207 = vadd.f32 0.0, %v1206
      %v1208 = vpop.f32.mrf.mxu0
      %v1209 = vadd.f32 0.0, %v1208
      %1210 = vmatmul.bf16.gmra.mxu0 %v1157
      %v1211 = vpop.f32.mrf.mxu0
      %v1212 = vadd.f32 0.0, %v1211
      %v1213 = vpop.f32.mrf.mxu0
      %v1214 = vadd.f32 0.0, %v1213
      %1215 = vdwg.mxu0
      %v1216 = vadd.f32 %v1062, %v1172
      %v1217 = vadd.f32 %v1063, %v1174
      %v1218 = vadd.f32 %v1064, %v1177
      %v1219 = vadd.f32 %v1065, %v1179
      %v1220 = vadd.f32 %v1066, %v1182
      %v1221 = vadd.f32 %v1067, %v1184
      %v1222 = vadd.f32 %v1068, %v1187
      %v1223 = vadd.f32 %v1069, %v1189
      %v1224 = vadd.f32 %v1070, %v1192
      %v1225 = vadd.f32 %v1071, %v1194
      %v1226 = vadd.f32 %v1072, %v1197
      %v1227 = vadd.f32 %v1073, %v1199
      %v1228 = vadd.f32 %v1074, %v1202
      %v1229 = vadd.f32 %v1075, %v1204
      %v1230 = vadd.f32 %v1076, %v1207
      %v1231 = vadd.f32 %v1077, %v1209
      %v1232 = vadd.f32 %v1078, %v1212
      %v1233 = vadd.f32 %v1079, %v1214
      %s1234 = scalar_lea.vmem %s1, 16
      %v1235 = vld [vmem:[%s1234] sm:$0x3]
      %vm1236 = vcmask 1044480
      %v1237 = vrot.slane %v246, 3
      %v1238 = vrot.slane %v247, 3
      %v1239 = vsel %vm1236, %v1237, %v1238
      %v1240 = vrot.slane %v248, 3
      %v1241 = vsel %vm1236, %v1238, %v1240
      %v1242 = vrot.slane %v249, 3
      %v1243 = vsel %vm1236, %v1240, %v1242
      %v1244 = vrot.slane %v250, 3
      %v1245 = vsel %vm1236, %v1242, %v1244
      %v1246 = vrot.slane %v251, 3
      %v1247 = vsel %vm1236, %v1244, %v1246
      %v1248 = vrot.slane %v252, 3
      %v1249 = vsel %vm1236, %v1246, %v1248
      %v1250 = vrot.slane %v622, 3
      %v1251 = vsel %vm1236, %v1248, %v1250
      %v1252 = vrot.slane %v993, 3
      %v1253 = vsel %vm1236, %v1250, %v1252
      %v1254 = vrot.slane %v994, 3
      %v1255 = vsel %vm1236, %v1252, %v1254
      %v1257 = vsel %vm331, %v1239, 0
      %v1260 = vsel %vm331, %v1241, 0
      %v1263 = vsel %vm331, %v1243, 0
      %v1266 = vsel %vm331, %v1245, 0
      %v1269 = vsel %vm331, %v1247, 0
      %v1272 = vsel %vm331, %v1249, 0
      %v1275 = vsel %vm331, %v1251, 0
      %v1278 = vsel %vm331, %v1253, 0
      %v1281 = vsel %vm331, %v1255, 0
      %v1284 = vsel %vm359, %v1235, 0
      %1286 = vmatpush.bf16.msra.mxu0 0
      %1287 = vmatpush.bf16.msra.mxu0 0
      %1288 = vmatpush.bf16.msra.mxu0 0
      %1289 = vmatpush.bf16.msra.mxu0 0
      %1290 = vmatpush.bf16.msra.mxu0 0
      %1291 = vmatpush.bf16.msra.mxu0 0
      %1292 = vmatpush.bf16.msra.mxu0 0
      %1293 = vmatpush.bf16.msra.mxu0 %v1284
      %1294 = vmatmul.bf16.gmra.mxu0 %v1257
      %v1295 = vpop.f32.mrf.mxu0
      %v1296 = vadd.f32 0.0, %v1295
      %v1297 = vpop.f32.mrf.mxu0
      %v1298 = vadd.f32 0.0, %v1297
      %1299 = vmatmul.bf16.gmra.mxu0 %v1260
      %v1300 = vpop.f32.mrf.mxu0
      %v1301 = vadd.f32 0.0, %v1300
      %v1302 = vpop.f32.mrf.mxu0
      %v1303 = vadd.f32 0.0, %v1302
      %1304 = vmatmul.bf16.gmra.mxu0 %v1263
      %v1305 = vpop.f32.mrf.mxu0
      %v1306 = vadd.f32 0.0, %v1305
      %v1307 = vpop.f32.mrf.mxu0
      %v1308 = vadd.f32 0.0, %v1307
      %1309 = vmatmul.bf16.gmra.mxu0 %v1266
      %v1310 = vpop.f32.mrf.mxu0
      %v1311 = vadd.f32 0.0, %v1310
      %v1312 = vpop.f32.mrf.mxu0
      %v1313 = vadd.f32 0.0, %v1312
      %1314 = vmatmul.bf16.gmra.mxu0 %v1269
      %v1315 = vpop.f32.mrf.mxu0
      %v1316 = vadd.f32 0.0, %v1315
      %v1317 = vpop.f32.mrf.mxu0
      %v1318 = vadd.f32 0.0, %v1317
      %1319 = vmatmul.bf16.gmra.mxu0 %v1272
      %v1320 = vpop.f32.mrf.mxu0
      %v1321 = vadd.f32 0.0, %v1320
      %v1322 = vpop.f32.mrf.mxu0
      %v1323 = vadd.f32 0.0, %v1322
      %1324 = vmatmul.bf16.gmra.mxu0 %v1275
      %v1325 = vpop.f32.mrf.mxu0
      %v1326 = vadd.f32 0.0, %v1325
      %v1327 = vpop.f32.mrf.mxu0
      %v1328 = vadd.f32 0.0, %v1327
      %1329 = vmatmul.bf16.gmra.mxu0 %v1278
      %v1330 = vpop.f32.mrf.mxu0
      %v1331 = vadd.f32 0.0, %v1330
      %v1332 = vpop.f32.mrf.mxu0
      %v1333 = vadd.f32 0.0, %v1332
      %1334 = vmatmul.bf16.gmra.mxu0 %v1281
      %v1335 = vpop.f32.mrf.mxu0
      %v1336 = vadd.f32 0.0, %v1335
      %v1337 = vpop.f32.mrf.mxu0
      %v1338 = vadd.f32 0.0, %v1337
      %1339 = vdwg.mxu0
      %v1340 = vadd.f32 %v1216, %v1296
      %v1341 = vadd.f32 %v1217, %v1298
      %v1342 = vadd.f32 %v1218, %v1301
      %v1343 = vadd.f32 %v1219, %v1303
      %v1344 = vadd.f32 %v1220, %v1306
      %v1345 = vadd.f32 %v1221, %v1308
      %v1346 = vadd.f32 %v1222, %v1311
      %v1347 = vadd.f32 %v1223, %v1313
      %v1348 = vadd.f32 %v1224, %v1316
      %v1349 = vadd.f32 %v1225, %v1318
      %v1350 = vadd.f32 %v1226, %v1321
      %v1351 = vadd.f32 %v1227, %v1323
      %v1352 = vadd.f32 %v1228, %v1326
      %v1353 = vadd.f32 %v1229, %v1328
      %v1354 = vadd.f32 %v1230, %v1331
      %v1355 = vadd.f32 %v1231, %v1333
      %v1356 = vadd.f32 %v1232, %v1336
      %v1357 = vadd.f32 %v1233, %v1338
      %v1358 = vlaneseq
      %v1359 = vshrl.u32 %v1358, 7
      %v1360 = vadd.s32 %v1359, 8
      %v1361 = vadd.s32 %v1359, 16
      %v1362 = vadd.s32 %v1359, 24
      %v1363 = vadd.s32 %v1359, 32
      %v1364 = vadd.s32 %v1359, 40
      %v1365 = vadd.s32 %v1359, 48
      %v1366 = vadd.s32 %v1359, 56
      %v1367 = vadd.s32 %v1359, 64
      %v1368 = vadd.s32 %v1359, 72
      %v1369 = vadd.s32 %v1359, 80
      %v1370 = vadd.s32 %v1359, 88
      %v1371 = vadd.s32 %v1359, 96
      %v1372 = vadd.s32 %v1359, 104
      %v1373 = vadd.s32 %v1359, 112
      %v1374 = vadd.s32 %v1359, 120
      %v1375 = vadd.s32 %v1359, 128
      %v1376 = vadd.s32 %v1359, 136
      %vm1377 = vcmp.lt.s32.totalorder %v1359, 0
      %v1378 = vsub.s32 0, %v1359
      %v1379 = vsel %vm1377, %v1378, %v1359
      %v1380 = vand.u32 %v1379, 65535
      %v1381 = vshrl.u32 %v1379, 16
      %v1383 = vmul.u32 %v1380, 14564
      %v1384 = vmul.u32 %v1380, 58254
      %v1385 = vmul.u32 %v1381, 14564
      %v1386 = vmul.u32 %v1381, 58254
      %v1387 = vshll.u32 %v1384, 16
      %v1388 = vshrl.u32 %v1384, 16
      %v1389 = vshll.u32 %v1385, 16
      %v1390 = vshrl.u32 %v1385, 16
      %vm1391 = vc.u32 %v1383, %v1387
      %v1392 = vsel %vm1391, 1, 0
      %v1393 = vadd.s32 %v1383, %v1387
      %v1394 = vadd.s32 %v1386, %v1392
      %vm1395 = vc.u32 %v1393, %v1389
      %v1396 = vsel %vm1395, 1, 0
      %v1397 = vadd.s32 %v1393, %v1389
      %v1398 = vadd.s32 %v1394, %v1396
      %v1399 = vadd.s32 %v1398, %v1388
      %v1400 = vadd.s32 %v1399, %v1390
      %v1401 = vshrl.u32 %v1400, 4
      %v1402 = vmul.u32 %v1401, 18
      %v1403 = vsub.s32 %v1379, %v1402
      %v1404 = vsub.s32 0, %v1403
      %v1405 = vsel %vm1377, %v1404, %v1403
      %vm1406 = vcmp.lt.s32.totalorder %v1360, 0
      %v1407 = vsub.s32 0, %v1360
      %v1408 = vsel %vm1406, %v1407, %v1360
      %v1409 = vand.u32 %v1408, 65535
      %v1410 = vshrl.u32 %v1408, 16
      %v1412 = vmul.u32 %v1409, 14564
      %v1413 = vmul.u32 %v1409, 58254
      %v1414 = vmul.u32 %v1410, 14564
      %v1415 = vmul.u32 %v1410, 58254
      %v1416 = vshll.u32 %v1413, 16
      %v1417 = vshrl.u32 %v1413, 16
      %v1418 = vshll.u32 %v1414, 16
      %v1419 = vshrl.u32 %v1414, 16
      %vm1420 = vc.u32 %v1412, %v1416
      %v1421 = vsel %vm1420, 1, 0
      %v1422 = vadd.s32 %v1412, %v1416
      %v1423 = vadd.s32 %v1415, %v1421
      %vm1424 = vc.u32 %v1422, %v1418
      %v1425 = vsel %vm1424, 1, 0
      %v1426 = vadd.s32 %v1422, %v1418
      %v1427 = vadd.s32 %v1423, %v1425
      %v1428 = vadd.s32 %v1427, %v1417
      %v1429 = vadd.s32 %v1428, %v1419
      %v1430 = vshrl.u32 %v1429, 4
      %v1431 = vmul.u32 %v1430, 18
      %v1432 = vsub.s32 %v1408, %v1431
      %v1433 = vsub.s32 0, %v1432
      %v1434 = vsel %vm1406, %v1433, %v1432
      %vm1435 = vcmp.lt.s32.totalorder %v1361, 0
      %v1436 = vsub.s32 0, %v1361
      %v1437 = vsel %vm1435, %v1436, %v1361
      %v1438 = vand.u32 %v1437, 65535
      %v1439 = vshrl.u32 %v1437, 16
      %v1441 = vmul.u32 %v1438, 14564
      %v1442 = vmul.u32 %v1438, 58254
      %v1443 = vmul.u32 %v1439, 14564
      %v1444 = vmul.u32 %v1439, 58254
      %v1445 = vshll.u32 %v1442, 16
      %v1446 = vshrl.u32 %v1442, 16
      %v1447 = vshll.u32 %v1443, 16
      %v1448 = vshrl.u32 %v1443, 16
      %vm1449 = vc.u32 %v1441, %v1445
      %v1450 = vsel %vm1449, 1, 0
      %v1451 = vadd.s32 %v1441, %v1445
      %v1452 = vadd.s32 %v1444, %v1450
      %vm1453 = vc.u32 %v1451, %v1447
      %v1454 = vsel %vm1453, 1, 0
      %v1455 = vadd.s32 %v1451, %v1447
      %v1456 = vadd.s32 %v1452, %v1454
      %v1457 = vadd.s32 %v1456, %v1446
      %v1458 = vadd.s32 %v1457, %v1448
      %v1459 = vshrl.u32 %v1458, 4
      %v1460 = vmul.u32 %v1459, 18
      %v1461 = vsub.s32 %v1437, %v1460
      %v1462 = vsub.s32 0, %v1461
      %v1463 = vsel %vm1435, %v1462, %v1461
      %vm1464 = vcmp.lt.s32.totalorder %v1362, 0
      %v1465 = vsub.s32 0, %v1362
      %v1466 = vsel %vm1464, %v1465, %v1362
      %v1467 = vand.u32 %v1466, 65535
      %v1468 = vshrl.u32 %v1466, 16
      %v1470 = vmul.u32 %v1467, 14564
      %v1471 = vmul.u32 %v1467, 58254
      %v1472 = vmul.u32 %v1468, 14564
      %v1473 = vmul.u32 %v1468, 58254
      %v1474 = vshll.u32 %v1471, 16
      %v1475 = vshrl.u32 %v1471, 16
      %v1476 = vshll.u32 %v1472, 16
      %v1477 = vshrl.u32 %v1472, 16
      %vm1478 = vc.u32 %v1470, %v1474
      %v1479 = vsel %vm1478, 1, 0
      %v1480 = vadd.s32 %v1470, %v1474
      %v1481 = vadd.s32 %v1473, %v1479
      %vm1482 = vc.u32 %v1480, %v1476
      %v1483 = vsel %vm1482, 1, 0
      %v1484 = vadd.s32 %v1480, %v1476
      %v1485 = vadd.s32 %v1481, %v1483
      %v1486 = vadd.s32 %v1485, %v1475
      %v1487 = vadd.s32 %v1486, %v1477
      %v1488 = vshrl.u32 %v1487, 4
      %v1489 = vmul.u32 %v1488, 18
      %v1490 = vsub.s32 %v1466, %v1489
      %v1491 = vsub.s32 0, %v1490
      %v1492 = vsel %vm1464, %v1491, %v1490
      %vm1493 = vcmp.lt.s32.totalorder %v1363, 0
      %v1494 = vsub.s32 0, %v1363
      %v1495 = vsel %vm1493, %v1494, %v1363
      %v1496 = vand.u32 %v1495, 65535
      %v1497 = vshrl.u32 %v1495, 16
      %v1499 = vmul.u32 %v1496, 14564
      %v1500 = vmul.u32 %v1496, 58254
      %v1501 = vmul.u32 %v1497, 14564
      %v1502 = vmul.u32 %v1497, 58254
      %v1503 = vshll.u32 %v1500, 16
      %v1504 = vshrl.u32 %v1500, 16
      %v1505 = vshll.u32 %v1501, 16
      %v1506 = vshrl.u32 %v1501, 16
      %vm1507 = vc.u32 %v1499, %v1503
      %v1508 = vsel %vm1507, 1, 0
      %v1509 = vadd.s32 %v1499, %v1503
      %v1510 = vadd.s32 %v1502, %v1508
      %vm1511 = vc.u32 %v1509, %v1505
      %v1512 = vsel %vm1511, 1, 0
      %v1513 = vadd.s32 %v1509, %v1505
      %v1514 = vadd.s32 %v1510, %v1512
      %v1515 = vadd.s32 %v1514, %v1504
      %v1516 = vadd.s32 %v1515, %v1506
      %v1517 = vshrl.u32 %v1516, 4
      %v1518 = vmul.u32 %v1517, 18
      %v1519 = vsub.s32 %v1495, %v1518
      %v1520 = vsub.s32 0, %v1519
      %v1521 = vsel %vm1493, %v1520, %v1519
      %vm1522 = vcmp.lt.s32.totalorder %v1364, 0
      %v1523 = vsub.s32 0, %v1364
      %v1524 = vsel %vm1522, %v1523, %v1364
      %v1525 = vand.u32 %v1524, 65535
      %v1526 = vshrl.u32 %v1524, 16
      %v1528 = vmul.u32 %v1525, 14564
      %v1529 = vmul.u32 %v1525, 58254
      %v1530 = vmul.u32 %v1526, 14564
      %v1531 = vmul.u32 %v1526, 58254
      %v1532 = vshll.u32 %v1529, 16
      %v1533 = vshrl.u32 %v1529, 16
      %v1534 = vshll.u32 %v1530, 16
      %v1535 = vshrl.u32 %v1530, 16
      %vm1536 = vc.u32 %v1528, %v1532
      %v1537 = vsel %vm1536, 1, 0
      %v1538 = vadd.s32 %v1528, %v1532
      %v1539 = vadd.s32 %v1531, %v1537
      %vm1540 = vc.u32 %v1538, %v1534
      %v1541 = vsel %vm1540, 1, 0
      %v1542 = vadd.s32 %v1538, %v1534
      %v1543 = vadd.s32 %v1539, %v1541
      %v1544 = vadd.s32 %v1543, %v1533
      %v1545 = vadd.s32 %v1544, %v1535
      %v1546 = vshrl.u32 %v1545, 4
      %v1547 = vmul.u32 %v1546, 18
      %v1548 = vsub.s32 %v1524, %v1547
      %v1549 = vsub.s32 0, %v1548
      %v1550 = vsel %vm1522, %v1549, %v1548
      %vm1551 = vcmp.lt.s32.totalorder %v1365, 0
      %v1552 = vsub.s32 0, %v1365
      %v1553 = vsel %vm1551, %v1552, %v1365
      %v1554 = vand.u32 %v1553, 65535
      %v1555 = vshrl.u32 %v1553, 16
      %v1557 = vmul.u32 %v1554, 14564
      %v1558 = vmul.u32 %v1554, 58254
      %v1559 = vmul.u32 %v1555, 14564
      %v1560 = vmul.u32 %v1555, 58254
      %v1561 = vshll.u32 %v1558, 16
      %v1562 = vshrl.u32 %v1558, 16
      %v1563 = vshll.u32 %v1559, 16
      %v1564 = vshrl.u32 %v1559, 16
      %vm1565 = vc.u32 %v1557, %v1561
      %v1566 = vsel %vm1565, 1, 0
      %v1567 = vadd.s32 %v1557, %v1561
      %v1568 = vadd.s32 %v1560, %v1566
      %vm1569 = vc.u32 %v1567, %v1563
      %v1570 = vsel %vm1569, 1, 0
      %v1571 = vadd.s32 %v1567, %v1563
      %v1572 = vadd.s32 %v1568, %v1570
      %v1573 = vadd.s32 %v1572, %v1562
      %v1574 = vadd.s32 %v1573, %v1564
      %v1575 = vshrl.u32 %v1574, 4
      %v1576 = vmul.u32 %v1575, 18
      %v1577 = vsub.s32 %v1553, %v1576
      %v1578 = vsub.s32 0, %v1577
      %v1579 = vsel %vm1551, %v1578, %v1577
      %vm1580 = vcmp.lt.s32.totalorder %v1366, 0
      %v1581 = vsub.s32 0, %v1366
      %v1582 = vsel %vm1580, %v1581, %v1366
      %v1583 = vand.u32 %v1582, 65535
      %v1584 = vshrl.u32 %v1582, 16
      %v1586 = vmul.u32 %v1583, 14564
      %v1587 = vmul.u32 %v1583, 58254
      %v1588 = vmul.u32 %v1584, 14564
      %v1589 = vmul.u32 %v1584, 58254
      %v1590 = vshll.u32 %v1587, 16
      %v1591 = vshrl.u32 %v1587, 16
      %v1592 = vshll.u32 %v1588, 16
      %v1593 = vshrl.u32 %v1588, 16
      %vm1594 = vc.u32 %v1586, %v1590
      %v1595 = vsel %vm1594, 1, 0
      %v1596 = vadd.s32 %v1586, %v1590
      %v1597 = vadd.s32 %v1589, %v1595
      %vm1598 = vc.u32 %v1596, %v1592
      %v1599 = vsel %vm1598, 1, 0
      %v1600 = vadd.s32 %v1596, %v1592
      %v1601 = vadd.s32 %v1597, %v1599
      %v1602 = vadd.s32 %v1601, %v1591
      %v1603 = vadd.s32 %v1602, %v1593
      %v1604 = vshrl.u32 %v1603, 4
      %v1605 = vmul.u32 %v1604, 18
      %v1606 = vsub.s32 %v1582, %v1605
      %v1607 = vsub.s32 0, %v1606
      %v1608 = vsel %vm1580, %v1607, %v1606
      %vm1609 = vcmp.lt.s32.totalorder %v1367, 0
      %v1610 = vsub.s32 0, %v1367
      %v1611 = vsel %vm1609, %v1610, %v1367
      %v1612 = vand.u32 %v1611, 65535
      %v1613 = vshrl.u32 %v1611, 16
      %v1615 = vmul.u32 %v1612, 14564
      %v1616 = vmul.u32 %v1612, 58254
      %v1617 = vmul.u32 %v1613, 14564
      %v1618 = vmul.u32 %v1613, 58254
      %v1619 = vshll.u32 %v1616, 16
      %v1620 = vshrl.u32 %v1616, 16
      %v1621 = vshll.u32 %v1617, 16
      %v1622 = vshrl.u32 %v1617, 16
      %vm1623 = vc.u32 %v1615, %v1619
      %v1624 = vsel %vm1623, 1, 0
      %v1625 = vadd.s32 %v1615, %v1619
      %v1626 = vadd.s32 %v1618, %v1624
      %vm1627 = vc.u32 %v1625, %v1621
      %v1628 = vsel %vm1627, 1, 0
      %v1629 = vadd.s32 %v1625, %v1621
      %v1630 = vadd.s32 %v1626, %v1628
      %v1631 = vadd.s32 %v1630, %v1620
      %v1632 = vadd.s32 %v1631, %v1622
      %v1633 = vshrl.u32 %v1632, 4
      %v1634 = vmul.u32 %v1633, 18
      %v1635 = vsub.s32 %v1611, %v1634
      %v1636 = vsub.s32 0, %v1635
      %v1637 = vsel %vm1609, %v1636, %v1635
      %vm1638 = vcmp.lt.s32.totalorder %v1368, 0
      %v1639 = vsub.s32 0, %v1368
      %v1640 = vsel %vm1638, %v1639, %v1368
      %v1641 = vand.u32 %v1640, 65535
      %v1642 = vshrl.u32 %v1640, 16
      %v1644 = vmul.u32 %v1641, 14564
      %v1645 = vmul.u32 %v1641, 58254
      %v1646 = vmul.u32 %v1642, 14564
      %v1647 = vmul.u32 %v1642, 58254
      %v1648 = vshll.u32 %v1645, 16
      %v1649 = vshrl.u32 %v1645, 16
      %v1650 = vshll.u32 %v1646, 16
      %v1651 = vshrl.u32 %v1646, 16
      %vm1652 = vc.u32 %v1644, %v1648
      %v1653 = vsel %vm1652, 1, 0
      %v1654 = vadd.s32 %v1644, %v1648
      %v1655 = vadd.s32 %v1647, %v1653
      %vm1656 = vc.u32 %v1654, %v1650
      %v1657 = vsel %vm1656, 1, 0
      %v1658 = vadd.s32 %v1654, %v1650
      %v1659 = vadd.s32 %v1655, %v1657
      %v1660 = vadd.s32 %v1659, %v1649
      %v1661 = vadd.s32 %v1660, %v1651
      %v1662 = vshrl.u32 %v1661, 4
      %v1663 = vmul.u32 %v1662, 18
      %v1664 = vsub.s32 %v1640, %v1663
      %v1665 = vsub.s32 0, %v1664
      %v1666 = vsel %vm1638, %v1665, %v1664
      %vm1667 = vcmp.lt.s32.totalorder %v1369, 0
      %v1668 = vsub.s32 0, %v1369
      %v1669 = vsel %vm1667, %v1668, %v1369
      %v1670 = vand.u32 %v1669, 65535
      %v1671 = vshrl.u32 %v1669, 16
      %v1673 = vmul.u32 %v1670, 14564
      %v1674 = vmul.u32 %v1670, 58254
      %v1675 = vmul.u32 %v1671, 14564
      %v1676 = vmul.u32 %v1671, 58254
      %v1677 = vshll.u32 %v1674, 16
      %v1678 = vshrl.u32 %v1674, 16
      %v1679 = vshll.u32 %v1675, 16
      %v1680 = vshrl.u32 %v1675, 16
      %vm1681 = vc.u32 %v1673, %v1677
      %v1682 = vsel %vm1681, 1, 0
      %v1683 = vadd.s32 %v1673, %v1677
      %v1684 = vadd.s32 %v1676, %v1682
      %vm1685 = vc.u32 %v1683, %v1679
      %v1686 = vsel %vm1685, 1, 0
      %v1687 = vadd.s32 %v1683, %v1679
      %v1688 = vadd.s32 %v1684, %v1686
      %v1689 = vadd.s32 %v1688, %v1678
      %v1690 = vadd.s32 %v1689, %v1680
      %v1691 = vshrl.u32 %v1690, 4
      %v1692 = vmul.u32 %v1691, 18
      %v1693 = vsub.s32 %v1669, %v1692
      %v1694 = vsub.s32 0, %v1693
      %v1695 = vsel %vm1667, %v1694, %v1693
      %vm1696 = vcmp.lt.s32.totalorder %v1370, 0
      %v1697 = vsub.s32 0, %v1370
      %v1698 = vsel %vm1696, %v1697, %v1370
      %v1699 = vand.u32 %v1698, 65535
      %v1700 = vshrl.u32 %v1698, 16
      %v1702 = vmul.u32 %v1699, 14564
      %v1703 = vmul.u32 %v1699, 58254
      %v1704 = vmul.u32 %v1700, 14564
      %v1705 = vmul.u32 %v1700, 58254
      %v1706 = vshll.u32 %v1703, 16
      %v1707 = vshrl.u32 %v1703, 16
      %v1708 = vshll.u32 %v1704, 16
      %v1709 = vshrl.u32 %v1704, 16
      %vm1710 = vc.u32 %v1702, %v1706
      %v1711 = vsel %vm1710, 1, 0
      %v1712 = vadd.s32 %v1702, %v1706
      %v1713 = vadd.s32 %v1705, %v1711
      %vm1714 = vc.u32 %v1712, %v1708
      %v1715 = vsel %vm1714, 1, 0
      %v1716 = vadd.s32 %v1712, %v1708
      %v1717 = vadd.s32 %v1713, %v1715
      %v1718 = vadd.s32 %v1717, %v1707
      %v1719 = vadd.s32 %v1718, %v1709
      %v1720 = vshrl.u32 %v1719, 4
      %v1721 = vmul.u32 %v1720, 18
      %v1722 = vsub.s32 %v1698, %v1721
      %v1723 = vsub.s32 0, %v1722
      %v1724 = vsel %vm1696, %v1723, %v1722
      %vm1725 = vcmp.lt.s32.totalorder %v1371, 0
      %v1726 = vsub.s32 0, %v1371
      %v1727 = vsel %vm1725, %v1726, %v1371
      %v1728 = vand.u32 %v1727, 65535
      %v1729 = vshrl.u32 %v1727, 16
      %v1731 = vmul.u32 %v1728, 14564
      %v1732 = vmul.u32 %v1728, 58254
      %v1733 = vmul.u32 %v1729, 14564
      %v1734 = vmul.u32 %v1729, 58254
      %v1735 = vshll.u32 %v1732, 16
      %v1736 = vshrl.u32 %v1732, 16
      %v1737 = vshll.u32 %v1733, 16
      %v1738 = vshrl.u32 %v1733, 16
      %vm1739 = vc.u32 %v1731, %v1735
      %v1740 = vsel %vm1739, 1, 0
      %v1741 = vadd.s32 %v1731, %v1735
      %v1742 = vadd.s32 %v1734, %v1740
      %vm1743 = vc.u32 %v1741, %v1737
      %v1744 = vsel %vm1743, 1, 0
      %v1745 = vadd.s32 %v1741, %v1737
      %v1746 = vadd.s32 %v1742, %v1744
      %v1747 = vadd.s32 %v1746, %v1736
      %v1748 = vadd.s32 %v1747, %v1738
      %v1749 = vshrl.u32 %v1748, 4
      %v1750 = vmul.u32 %v1749, 18
      %v1751 = vsub.s32 %v1727, %v1750
      %v1752 = vsub.s32 0, %v1751
      %v1753 = vsel %vm1725, %v1752, %v1751
      %vm1754 = vcmp.lt.s32.totalorder %v1372, 0
      %v1755 = vsub.s32 0, %v1372
      %v1756 = vsel %vm1754, %v1755, %v1372
      %v1757 = vand.u32 %v1756, 65535
      %v1758 = vshrl.u32 %v1756, 16
      %v1760 = vmul.u32 %v1757, 14564
      %v1761 = vmul.u32 %v1757, 58254
      %v1762 = vmul.u32 %v1758, 14564
      %v1763 = vmul.u32 %v1758, 58254
      %v1764 = vshll.u32 %v1761, 16
      %v1765 = vshrl.u32 %v1761, 16
      %v1766 = vshll.u32 %v1762, 16
      %v1767 = vshrl.u32 %v1762, 16
      %vm1768 = vc.u32 %v1760, %v1764
      %v1769 = vsel %vm1768, 1, 0
      %v1770 = vadd.s32 %v1760, %v1764
      %v1771 = vadd.s32 %v1763, %v1769
      %vm1772 = vc.u32 %v1770, %v1766
      %v1773 = vsel %vm1772, 1, 0
      %v1774 = vadd.s32 %v1770, %v1766
      %v1775 = vadd.s32 %v1771, %v1773
      %v1776 = vadd.s32 %v1775, %v1765
      %v1777 = vadd.s32 %v1776, %v1767
      %v1778 = vshrl.u32 %v1777, 4
      %v1779 = vmul.u32 %v1778, 18
      %v1780 = vsub.s32 %v1756, %v1779
      %v1781 = vsub.s32 0, %v1780
      %v1782 = vsel %vm1754, %v1781, %v1780
      %vm1783 = vcmp.lt.s32.totalorder %v1373, 0
      %v1784 = vsub.s32 0, %v1373
      %v1785 = vsel %vm1783, %v1784, %v1373
      %v1786 = vand.u32 %v1785, 65535
      %v1787 = vshrl.u32 %v1785, 16
      %v1789 = vmul.u32 %v1786, 14564
      %v1790 = vmul.u32 %v1786, 58254
      %v1791 = vmul.u32 %v1787, 14564
      %v1792 = vmul.u32 %v1787, 58254
      %v1793 = vshll.u32 %v1790, 16
      %v1794 = vshrl.u32 %v1790, 16
      %v1795 = vshll.u32 %v1791, 16
      %v1796 = vshrl.u32 %v1791, 16
      %vm1797 = vc.u32 %v1789, %v1793
      %v1798 = vsel %vm1797, 1, 0
      %v1799 = vadd.s32 %v1789, %v1793
      %v1800 = vadd.s32 %v1792, %v1798
      %vm1801 = vc.u32 %v1799, %v1795
      %v1802 = vsel %vm1801, 1, 0
      %v1803 = vadd.s32 %v1799, %v1795
      %v1804 = vadd.s32 %v1800, %v1802
      %v1805 = vadd.s32 %v1804, %v1794
      %v1806 = vadd.s32 %v1805, %v1796
      %v1807 = vshrl.u32 %v1806, 4
      %v1808 = vmul.u32 %v1807, 18
      %v1809 = vsub.s32 %v1785, %v1808
      %v1810 = vsub.s32 0, %v1809
      %v1811 = vsel %vm1783, %v1810, %v1809
      %vm1812 = vcmp.lt.s32.totalorder %v1374, 0
      %v1813 = vsub.s32 0, %v1374
      %v1814 = vsel %vm1812, %v1813, %v1374
      %v1815 = vand.u32 %v1814, 65535
      %v1816 = vshrl.u32 %v1814, 16
      %v1818 = vmul.u32 %v1815, 14564
      %v1819 = vmul.u32 %v1815, 58254
      %v1820 = vmul.u32 %v1816, 14564
      %v1821 = vmul.u32 %v1816, 58254
      %v1822 = vshll.u32 %v1819, 16
      %v1823 = vshrl.u32 %v1819, 16
      %v1824 = vshll.u32 %v1820, 16
      %v1825 = vshrl.u32 %v1820, 16
      %vm1826 = vc.u32 %v1818, %v1822
      %v1827 = vsel %vm1826, 1, 0
      %v1828 = vadd.s32 %v1818, %v1822
      %v1829 = vadd.s32 %v1821, %v1827
      %vm1830 = vc.u32 %v1828, %v1824
      %v1831 = vsel %vm1830, 1, 0
      %v1832 = vadd.s32 %v1828, %v1824
      %v1833 = vadd.s32 %v1829, %v1831
      %v1834 = vadd.s32 %v1833, %v1823
      %v1835 = vadd.s32 %v1834, %v1825
      %v1836 = vshrl.u32 %v1835, 4
      %v1837 = vmul.u32 %v1836, 18
      %v1838 = vsub.s32 %v1814, %v1837
      %v1839 = vsub.s32 0, %v1838
      %v1840 = vsel %vm1812, %v1839, %v1838
      %vm1841 = vcmp.lt.s32.totalorder %v1375, 0
      %v1842 = vsub.s32 0, %v1375
      %v1843 = vsel %vm1841, %v1842, %v1375
      %v1844 = vand.u32 %v1843, 65535
      %v1845 = vshrl.u32 %v1843, 16
      %v1847 = vmul.u32 %v1844, 14564
      %v1848 = vmul.u32 %v1844, 58254
      %v1849 = vmul.u32 %v1845, 14564
      %v1850 = vmul.u32 %v1845, 58254
      %v1851 = vshll.u32 %v1848, 16
      %v1852 = vshrl.u32 %v1848, 16
      %v1853 = vshll.u32 %v1849, 16
      %v1854 = vshrl.u32 %v1849, 16
      %vm1855 = vc.u32 %v1847, %v1851
      %v1856 = vsel %vm1855, 1, 0
      %v1857 = vadd.s32 %v1847, %v1851
      %v1858 = vadd.s32 %v1850, %v1856
      %vm1859 = vc.u32 %v1857, %v1853
      %v1860 = vsel %vm1859, 1, 0
      %v1861 = vadd.s32 %v1857, %v1853
      %v1862 = vadd.s32 %v1858, %v1860
      %v1863 = vadd.s32 %v1862, %v1852
      %v1864 = vadd.s32 %v1863, %v1854
      %v1865 = vshrl.u32 %v1864, 4
      %v1866 = vmul.u32 %v1865, 18
      %v1867 = vsub.s32 %v1843, %v1866
      %v1868 = vsub.s32 0, %v1867
      %v1869 = vsel %vm1841, %v1868, %v1867
      %vm1870 = vcmp.lt.s32.totalorder %v1376, 0
      %v1871 = vsub.s32 0, %v1376
      %v1872 = vsel %vm1870, %v1871, %v1376
      %v1873 = vand.u32 %v1872, 65535
      %v1874 = vshrl.u32 %v1872, 16
      %v1876 = vmul.u32 %v1873, 14564
      %v1877 = vmul.u32 %v1873, 58254
      %v1878 = vmul.u32 %v1874, 14564
      %v1879 = vmul.u32 %v1874, 58254
      %v1880 = vshll.u32 %v1877, 16
      %v1881 = vshrl.u32 %v1877, 16
      %v1882 = vshll.u32 %v1878, 16
      %v1883 = vshrl.u32 %v1878, 16
      %vm1884 = vc.u32 %v1876, %v1880
      %v1885 = vsel %vm1884, 1, 0
      %v1886 = vadd.s32 %v1876, %v1880
      %v1887 = vadd.s32 %v1879, %v1885
      %vm1888 = vc.u32 %v1886, %v1882
      %v1889 = vsel %vm1888, 1, 0
      %v1890 = vadd.s32 %v1886, %v1882
      %v1891 = vadd.s32 %v1887, %v1889
      %v1892 = vadd.s32 %v1891, %v1881
      %v1893 = vadd.s32 %v1892, %v1883
      %v1894 = vshrl.u32 %v1893, 4
      %v1895 = vmul.u32 %v1894, 18
      %v1896 = vsub.s32 %v1872, %v1895
      %v1897 = vsub.s32 0, %v1896
      %v1898 = vsel %vm1870, %v1897, %v1896
      %vm1899 = vcmp.ne.s32.totalorder %v1405, 0
      %vm1900 = vcmp.ne.s32.totalorder %v1434, 0
      %vm1901 = vcmp.ne.s32.totalorder %v1463, 0
      %vm1902 = vcmp.ne.s32.totalorder %v1492, 0
      %vm1903 = vcmp.ne.s32.totalorder %v1521, 0
      %vm1904 = vcmp.ne.s32.totalorder %v1550, 0
      %vm1905 = vcmp.ne.s32.totalorder %v1579, 0
      %vm1906 = vcmp.ne.s32.totalorder %v1608, 0
      %vm1907 = vcmp.ne.s32.totalorder %v1637, 0
      %vm1908 = vcmp.ne.s32.totalorder %v1666, 0
      %vm1909 = vcmp.ne.s32.totalorder %v1695, 0
      %vm1910 = vcmp.ne.s32.totalorder %v1724, 0
      %vm1911 = vcmp.ne.s32.totalorder %v1753, 0
      %vm1912 = vcmp.ne.s32.totalorder %v1782, 0
      %vm1913 = vcmp.ne.s32.totalorder %v1811, 0
      %vm1914 = vcmp.ne.s32.totalorder %v1840, 0
      %vm1915 = vcmp.ne.s32.totalorder %v1869, 0
      %vm1916 = vcmp.ne.s32.totalorder %v1898, 0
      %vm1917 = vcmp.lt.s32.totalorder %v1405, 0
      %vm1918 = vcmp.lt.s32.totalorder %v1434, 0
      %vm1919 = vcmp.lt.s32.totalorder %v1463, 0
      %vm1920 = vcmp.lt.s32.totalorder %v1492, 0
      %vm1921 = vcmp.lt.s32.totalorder %v1521, 0
      %vm1922 = vcmp.lt.s32.totalorder %v1550, 0
      %vm1923 = vcmp.lt.s32.totalorder %v1579, 0
      %vm1924 = vcmp.lt.s32.totalorder %v1608, 0
      %vm1925 = vcmp.lt.s32.totalorder %v1637, 0
      %vm1926 = vcmp.lt.s32.totalorder %v1666, 0
      %vm1927 = vcmp.lt.s32.totalorder %v1695, 0
      %vm1928 = vcmp.lt.s32.totalorder %v1724, 0
      %vm1929 = vcmp.lt.s32.totalorder %v1753, 0
      %vm1930 = vcmp.lt.s32.totalorder %v1782, 0
      %vm1931 = vcmp.lt.s32.totalorder %v1811, 0
      %vm1932 = vcmp.lt.s32.totalorder %v1840, 0
      %vm1933 = vcmp.lt.s32.totalorder %v1869, 0
      %vm1934 = vcmp.lt.s32.totalorder %v1898, 0
      %vm1935 = vmand %vm1917, %vm1899
      %vm1936 = vmand %vm1918, %vm1900
      %vm1937 = vmand %vm1919, %vm1901
      %vm1938 = vmand %vm1920, %vm1902
      %vm1939 = vmand %vm1921, %vm1903
      %vm1940 = vmand %vm1922, %vm1904
      %vm1941 = vmand %vm1923, %vm1905
      %vm1942 = vmand %vm1924, %vm1906
      %vm1943 = vmand %vm1925, %vm1907
      %vm1944 = vmand %vm1926, %vm1908
      %vm1945 = vmand %vm1927, %vm1909
      %vm1946 = vmand %vm1928, %vm1910
      %vm1947 = vmand %vm1929, %vm1911
      %vm1948 = vmand %vm1930, %vm1912
      %vm1949 = vmand %vm1931, %vm1913
      %vm1950 = vmand %vm1932, %vm1914
      %vm1951 = vmand %vm1933, %vm1915
      %vm1952 = vmand %vm1934, %vm1916
      %v1953 = vadd.s32 %v1405, 18
      %v1954 = vadd.s32 %v1434, 18
      %v1955 = vadd.s32 %v1463, 18
      %v1956 = vadd.s32 %v1492, 18
      %v1957 = vadd.s32 %v1521, 18
      %v1958 = vadd.s32 %v1550, 18
      %v1959 = vadd.s32 %v1579, 18
      %v1960 = vadd.s32 %v1608, 18
      %v1961 = vadd.s32 %v1637, 18
      %v1962 = vadd.s32 %v1666, 18
      %v1963 = vadd.s32 %v1695, 18
      %v1964 = vadd.s32 %v1724, 18
      %v1965 = vadd.s32 %v1753, 18
      %v1966 = vadd.s32 %v1782, 18
      %v1967 = vadd.s32 %v1811, 18
      %v1968 = vadd.s32 %v1840, 18
      %v1969 = vadd.s32 %v1869, 18
      %v1970 = vadd.s32 %v1898, 18
      %v1971 = vsel %vm1935, %v1953, %v1405
      %v1972 = vsel %vm1936, %v1954, %v1434
      %v1973 = vsel %vm1937, %v1955, %v1463
      %v1974 = vsel %vm1938, %v1956, %v1492
      %v1975 = vsel %vm1939, %v1957, %v1521
      %v1976 = vsel %vm1940, %v1958, %v1550
      %v1977 = vsel %vm1941, %v1959, %v1579
      %v1978 = vsel %vm1942, %v1960, %v1608
      %v1979 = vsel %vm1943, %v1961, %v1637
      %v1980 = vsel %vm1944, %v1962, %v1666
      %v1981 = vsel %vm1945, %v1963, %v1695
      %v1982 = vsel %vm1946, %v1964, %v1724
      %v1983 = vsel %vm1947, %v1965, %v1753
      %v1984 = vsel %vm1948, %v1966, %v1782
      %v1985 = vsel %vm1949, %v1967, %v1811
      %v1986 = vsel %vm1950, %v1968, %v1840
      %v1987 = vsel %vm1951, %v1969, %v1869
      %v1988 = vsel %vm1952, %v1970, %v1898
      %vm1989 = vcmp.lt.s32.totalorder %v1971, 16
      %vm1990 = vcmp.lt.s32.totalorder %v1972, 16
      %vm1991 = vcmp.lt.s32.totalorder %v1973, 16
      %vm1992 = vcmp.lt.s32.totalorder %v1974, 16
      %vm1993 = vcmp.lt.s32.totalorder %v1975, 16
      %vm1994 = vcmp.lt.s32.totalorder %v1976, 16
      %vm1995 = vcmp.lt.s32.totalorder %v1977, 16
      %vm1996 = vcmp.lt.s32.totalorder %v1978, 16
      %vm1997 = vcmp.lt.s32.totalorder %v1979, 16
      %vm1998 = vcmp.lt.s32.totalorder %v1980, 16
      %vm1999 = vcmp.lt.s32.totalorder %v1981, 16
      %vm2000 = vcmp.lt.s32.totalorder %v1982, 16
      %vm2001 = vcmp.lt.s32.totalorder %v1983, 16
      %vm2002 = vcmp.lt.s32.totalorder %v1984, 16
      %vm2003 = vcmp.lt.s32.totalorder %v1985, 16
      %vm2004 = vcmp.lt.s32.totalorder %v1986, 16
      %vm2005 = vcmp.lt.s32.totalorder %v1987, 16
      %vm2006 = vcmp.lt.s32.totalorder %v1988, 16
      %v2007 = vld [vmem:[%s2] sm:$0x1]
      %v2008 = vsel %vm1989, 1, 0
      %v2009 = vsel %vm1990, 1, 0
      %v2010 = vsel %vm1991, 1, 0
      %v2011 = vsel %vm1992, 1, 0
      %v2012 = vsel %vm1993, 1, 0
      %v2013 = vsel %vm1994, 1, 0
      %v2014 = vsel %vm1995, 1, 0
      %v2015 = vsel %vm1996, 1, 0
      %v2016 = vsel %vm1997, 1, 0
      %v2017 = vsel %vm1998, 1, 0
      %v2018 = vsel %vm1999, 1, 0
      %v2019 = vsel %vm2000, 1, 0
      %v2020 = vsel %vm2001, 1, 0
      %v2021 = vsel %vm2002, 1, 0
      %v2022 = vsel %vm2003, 1, 0
      %v2023 = vsel %vm2004, 1, 0
      %v2024 = vsel %vm2005, 1, 0
      %v2025 = vsel %vm2006, 1, 0
      %vm2026 = vcmp.eq.s32.totalorder %v2008, 1
      %vm2027 = vcmp.eq.s32.totalorder %v2009, 1
      %vm2028 = vcmp.eq.s32.totalorder %v2010, 1
      %vm2029 = vcmp.eq.s32.totalorder %v2011, 1
      %vm2030 = vcmp.eq.s32.totalorder %v2012, 1
      %vm2031 = vcmp.eq.s32.totalorder %v2013, 1
      %vm2032 = vcmp.eq.s32.totalorder %v2014, 1
      %vm2033 = vcmp.eq.s32.totalorder %v2015, 1
      %vm2034 = vcmp.eq.s32.totalorder %v2016, 1
      %vm2035 = vcmp.eq.s32.totalorder %v2017, 1
      %vm2036 = vcmp.eq.s32.totalorder %v2018, 1
      %vm2037 = vcmp.eq.s32.totalorder %v2019, 1
      %vm2038 = vcmp.eq.s32.totalorder %v2020, 1
      %vm2039 = vcmp.eq.s32.totalorder %v2021, 1
      %vm2040 = vcmp.eq.s32.totalorder %v2022, 1
      %vm2041 = vcmp.eq.s32.totalorder %v2023, 1
      %vm2042 = vcmp.eq.s32.totalorder %v2024, 1
      %vm2043 = vcmp.eq.s32.totalorder %v2025, 1
      %v2044 = vsel %vm2026, %v1340, 0.0
      %v2045 = vsel %vm2027, %v1341, 0.0
      %v2046 = vsel %vm2028, %v1342, 0.0
      %v2047 = vsel %vm2029, %v1343, 0.0
      %v2048 = vsel %vm2030, %v1344, 0.0
      %v2049 = vsel %vm2031, %v1345, 0.0
      %v2050 = vsel %vm2032, %v1346, 0.0
      %v2051 = vsel %vm2033, %v1347, 0.0
      %v2052 = vsel %vm2034, %v1348, 0.0
      %v2053 = vsel %vm2035, %v1349, 0.0
      %v2054 = vsel %vm2036, %v1350, 0.0
      %v2055 = vsel %vm2037, %v1351, 0.0
      %v2056 = vsel %vm2038, %v1352, 0.0
      %v2057 = vsel %vm2039, %v1353, 0.0
      %v2058 = vsel %vm2040, %v1354, 0.0
      %v2059 = vsel %vm2041, %v1355, 0.0
      %v2060 = vsel %vm2042, %v1356, 0.0
      %v2061 = vsel %vm2043, %v1357, 0.0
      %v2062 = vadd.f32 %v2044, %v2045
      %v2063 = vadd.f32 %v2062, %v2046
      %v2064 = vadd.f32 %v2063, %v2047
      %v2065 = vadd.f32 %v2064, %v2048
      %v2066 = vadd.f32 %v2065, %v2049
      %v2067 = vadd.f32 %v2066, %v2050
      %v2068 = vadd.f32 %v2067, %v2051
      %v2069 = vadd.f32 %v2068, %v2052
      %v2070 = vadd.f32 %v2069, %v2053
      %v2071 = vadd.f32 %v2070, %v2054
      %v2072 = vadd.f32 %v2071, %v2055
      %v2073 = vadd.f32 %v2072, %v2056
      %v2074 = vadd.f32 %v2073, %v2057
      %v2075 = vadd.f32 %v2074, %v2058
      %v2076 = vadd.f32 %v2075, %v2059
      %v2077 = vadd.f32 %v2076, %v2060
      %v2078 = vadd.f32 %v2077, %v2061
      %v2079 = vrot.slane %v2078, 4
      %v2080 = vadd.f32 %v2078, %v2079
      %v2081 = vrot.slane %v2080, 2
      %v2082 = vadd.f32 %v2080, %v2081
      %v2083 = vrot.slane %v2082, 1
      %v2084 = vadd.f32 %v2082, %v2083
      %v2085 = vadd.f32 %v2007, %v2084
      %2086 = vst [vmem:[%s2] sm:$0x1] %v2085
      %v2087 = vld [vmem:[%s3] sm:$0x1]
      %v2088 = vmul.f32 %v1340, %v1340
      %v2089 = vmul.f32 %v1341, %v1341
      %v2090 = vmul.f32 %v1342, %v1342
      %v2091 = vmul.f32 %v1343, %v1343
      %v2092 = vmul.f32 %v1344, %v1344
      %v2093 = vmul.f32 %v1345, %v1345
      %v2094 = vmul.f32 %v1346, %v1346
      %v2095 = vmul.f32 %v1347, %v1347
      %v2096 = vmul.f32 %v1348, %v1348
      %v2097 = vmul.f32 %v1349, %v1349
      %v2098 = vmul.f32 %v1350, %v1350
      %v2099 = vmul.f32 %v1351, %v1351
      %v2100 = vmul.f32 %v1352, %v1352
      %v2101 = vmul.f32 %v1353, %v1353
      %v2102 = vmul.f32 %v1354, %v1354
      %v2103 = vmul.f32 %v1355, %v1355
      %v2104 = vmul.f32 %v1356, %v1356
      %v2105 = vmul.f32 %v1357, %v1357
      %v2106 = vsel %vm2026, %v2088, 0.0
      %v2107 = vsel %vm2027, %v2089, 0.0
      %v2108 = vsel %vm2028, %v2090, 0.0
      %v2109 = vsel %vm2029, %v2091, 0.0
      %v2110 = vsel %vm2030, %v2092, 0.0
      %v2111 = vsel %vm2031, %v2093, 0.0
      %v2112 = vsel %vm2032, %v2094, 0.0
      %v2113 = vsel %vm2033, %v2095, 0.0
      %v2114 = vsel %vm2034, %v2096, 0.0
      %v2115 = vsel %vm2035, %v2097, 0.0
      %v2116 = vsel %vm2036, %v2098, 0.0
      %v2117 = vsel %vm2037, %v2099, 0.0
      %v2118 = vsel %vm2038, %v2100, 0.0
      %v2119 = vsel %vm2039, %v2101, 0.0
      %v2120 = vsel %vm2040, %v2102, 0.0
      %v2121 = vsel %vm2041, %v2103, 0.0
      %v2122 = vsel %vm2042, %v2104, 0.0
      %v2123 = vsel %vm2043, %v2105, 0.0
      %v2124 = vadd.f32 %v2106, %v2107
      %v2125 = vadd.f32 %v2124, %v2108
      %v2126 = vadd.f32 %v2125, %v2109
      %v2127 = vadd.f32 %v2126, %v2110
      %v2128 = vadd.f32 %v2127, %v2111
      %v2129 = vadd.f32 %v2128, %v2112
      %v2130 = vadd.f32 %v2129, %v2113
      %v2131 = vadd.f32 %v2130, %v2114
      %v2132 = vadd.f32 %v2131, %v2115
      %v2133 = vadd.f32 %v2132, %v2116
      %v2134 = vadd.f32 %v2133, %v2117
      %v2135 = vadd.f32 %v2134, %v2118
      %v2136 = vadd.f32 %v2135, %v2119
      %v2137 = vadd.f32 %v2136, %v2120
      %v2138 = vadd.f32 %v2137, %v2121
      %v2139 = vadd.f32 %v2138, %v2122
      %v2140 = vadd.f32 %v2139, %v2123
      %v2141 = vrot.slane %v2140, 4
      %v2142 = vadd.f32 %v2140, %v2141
      %v2143 = vrot.slane %v2142, 2
      %v2144 = vadd.f32 %v2142, %v2143
      %v2145 = vrot.slane %v2144, 1
      %v2146 = vadd.f32 %v2144, %v2145
      %v2147 = vadd.f32 %v2087, %v2146
      %2148 = vst [vmem:[%s3] sm:$0x1] %v2147
      // Predicated region
      $region33: #{conv_bn_relu.2} parent=27 // pred_check
        %p2149 = pneg %p87
      $region34: #{conv_bn_relu.2} parent=27 // pred_check_branch
        %2151 = sbr.rel (%p2149) target = $region36
      $region35: #{conv_bn_relu.2} parent=27 // pred_region
        _
      $region36: #{conv_bn_relu.2} parent=27 // pred_fallthru
        _
      // Predicated region
      $region37: #{conv_bn_relu.2} parent=27 // pred_check
        %p2152 = pneg %p108
      $region38: #{conv_bn_relu.2} parent=27 // pred_check_branch
        %2154 = sbr.rel (%p2152) target = $region40
      $region39: #{conv_bn_relu.2} parent=27 // pred_region
        _
      $region40: #{conv_bn_relu.2} parent=27 // pred_fallthru
        _
      // Predicated region
      $region41: #{conv_bn_relu.2} parent=27 // pred_check
        %p2155 = pneg %p87
      $region42: #{conv_bn_relu.2} parent=27 // pred_check_branch
        %2157 = sbr.rel (%p2155) target = $region44
      $region43: #{conv_bn_relu.2} parent=27 // pred_region
        _
      $region44: #{conv_bn_relu.2} parent=27 // pred_fallthru
        _
      // Predicated region
      $region45: #{conv_bn_relu.2} parent=27 // pred_check
        %p2158 = pneg %p108
      $region46: #{conv_bn_relu.2} parent=27 // pred_check_branch
        %2160 = sbr.rel (%p2158) target = $region48
      $region47: #{conv_bn_relu.2} parent=27 // pred_region
        _
      $region48: #{conv_bn_relu.2} parent=27 // pred_fallthru
        _
    $region28: #{conv_bn_relu.2} parent=5 // pred_fallthru
      _
    %p2161 = scmp.le.s32.totalorder 2, %s10
    // Predicated region
    $region49: #{conv_bn_relu.2} parent=5 // pred_check
      %p2162 = pneg %p2161
    $region50: #{conv_bn_relu.2} parent=5 // pred_check_branch
      %2164 = sbr.rel (%p2162) target = $region52
    $region51: #{conv_bn_relu.2} parent=5 // pred_region
      %s2165 = ssub.s32 %s10, 2
    $region52: #{conv_bn_relu.2} parent=5 // pred_fallthru
      _
  $region6: #{conv_bn_relu.2} parent=0 // loop_footer
    %s14 = sadd.s32 1, %s10
  $region7: #{conv_bn_relu.2} parent=0 // loop_footer_branch
    %9 = sbr.rel target = $region3
  $region8: #{conv_bn_relu.2} parent=0 // loop_exit
    _

</llo_original>
